<compile_context>
chip_gen: v6e
topology: v6e:2x2x1
jax: 0.10.0
libtpu: 0.0.40
codegen_flags: <defaults>
</compile_context>

<pallas_src>
import functools

import jax
import jax.numpy as jnp
from jax.experimental import pallas as pl
from jax.experimental.pallas import tpu as pltpu


_LRELU_SLOPE = 0.2
_BN_EPS = 1e-5
_TM_TARGET = 1024                     # lane-tile over M (multiple of 128)


def _round_up(x, m):
    return ((x + m - 1) // m) * m


# ---------------------------------------------------------------------------
# Kernel: lane-dense conv as 16 tap-matmuls on VMEM-resident phase slabs.
#   out[OCp, TM] = sum_t  W_t[OCp, Cp] @ phase[p(t)][:, base + shift(t) : +TM]
# BN layers additionally emit per-grid-block partial sum / sum-of-squares
# (masked to valid output positions) so the grid axis stays "parallel".
# ---------------------------------------------------------------------------
def _conv_taps_kernel(*refs, taps, tm, n_phases, single_block,
                      use_bias, use_act, bn_stats):
    idx = 0
    phase_refs = refs[idx:idx + n_phases]
    idx += n_phases
    w_ref = refs[idx]
    idx += 1
    if use_bias:
        b_ref = refs[idx]
        idx += 1
    if bn_stats:
        mask_ref = refs[idx]
        idx += 1
    o_ref = refs[idx]
    idx += 1
    if bn_stats:
        sum_ref = refs[idx]
        sq_ref = refs[idx + 1]

    if single_block:
        base = 0                                   # demo path: fully static slices
    else:
        base = pl.multiple_of(pl.program_id(0) * tm, 128)

    acc = None
    for t, (p_idx, shift) in enumerate(taps):
        tap = phase_refs[p_idx][:, pl.ds(base + shift, tm)]       # (Cp, TM) bf16
        part = jnp.dot(w_ref[t], tap, preferred_element_type=jnp.float32)
        acc = part if acc is None else acc + part

    if use_bias:
        acc = acc + b_ref[...]                     # (OCp, 1) broadcast over lanes
    if use_act:
        acc = jnp.where(acc > 0, acc, _LRELU_SLOPE * acc)
    o_ref[...] = acc.astype(o_ref.dtype)

    if bn_stats:
        # Mask excludes extended-grid / tail-pad junk columns; no bias was
        # added, so masked columns contribute exactly zero (review invariant).
        m = mask_ref[...]                          # (1, TM) f32
        am = acc * m
        sum_ref[0] = jnp.sum(am, axis=1, keepdims=True)
        sq_ref[0] = jnp.sum(am * acc, axis=1, keepdims=True)


# ---------------------------------------------------------------------------
# One Conv2d(k=4, pad=1, stride in {1,2}) (+BN) (+LeakyReLU) layer.
# act is channel-major (C, N, H, W) float32.
# ---------------------------------------------------------------------------
def _conv_layer(act, w, *, b=None, gamma=None, beta=None, stride,
                use_bn, act_in_kernel=False, out_dtype=jnp.bfloat16):
    C, N, H, W = act.shape
    OC, IC, KH, KW = w.shape
    assert IC == C and KH == 4 and KW == 4 and stride in (1, 2)

    if stride == 2:
        assert H % 2 == 0 and W % 2 == 0
        OH, OW = H // 2, W // 2
        OHe, OWe = OH + 1, OW + 1
    else:
        OH, OW = H - 1, W - 1
        OHe, OWe = H + 2, W + 2

    # Host-side layout only (cheap XLA pad/slice, ~1.3x data, no 16x im2col):
    # pad by 1, then space-to-depth into (row-parity, col-parity) phase slabs.
    xpad = jnp.pad(act, ((0, 0), (0, 0), (1, 1), (1, 1)))
    if stride == 2:
        phases = [xpad[:, :, pr::2, pc::2] for pr in (0, 1) for pc in (0, 1)]
        taps = tuple(((kh % 2) * 2 + (kw % 2), (kh // 2) * OWe + (kw // 2))
                     for kh in range(4) for kw in range(4))
    else:
        phases = [xpad]
        taps = tuple((0, kh * OWe + kw) for kh in range(4) for kw in range(4))

    n_phases = len(phases)
    Mext = N * OHe * OWe              # conv computed on the extended grid
    Mvalid = N * OH * OW              # valid output positions
    max_shift = max(s for _, s in taps)

    TM = min(_TM_TARGET, _round_up(Mext, 128))
    # Keep the f32 accumulator footprint modest for wide layers (features=64).
    while TM > 256 and OC * TM * 4 > (2 << 20):
        TM //= 2
    Mp = _round_up(Mext, TM)
    grid_m = Mp // TM
    Wph = _round_up(Mp + max_shift, 128)          # phase width incl. shift halo

    Cp = _round_up(C, 8)
    OCp = _round_up(OC, 16)                       # bf16 sublane packing

    ph2d = [jnp.pad(p.reshape(C, Mext),
                    ((0, Cp - C), (0, Wph - Mext))).astype(jnp.bfloat16)
            for p in phases]
    wt = jnp.transpose(w, (2, 3, 0, 1)).reshape(KH * KW, OC, C)
    wt = jnp.pad(wt, ((0, 0), (0, OCp - OC), (0, Cp - C))).astype(jnp.bfloat16)

    in_specs = [pl.BlockSpec(p.shape, lambda i: (0, 0)) for p in ph2d]
    in_specs.append(pl.BlockSpec(wt.shape, lambda i: (0, 0, 0)))
    args = list(ph2d) + [wt]

    use_bias = not use_bn             # conv bias is exactly cancelled by BN mean
    if use_bias:
        bias = jnp.pad(b, (0, OCp - OC)).astype(jnp.float32).reshape(OCp, 1)
        in_specs.append(pl.BlockSpec((OCp, 1), lambda i: (0, 0)))
        args.append(bias)
    if use_bn:
        m2d = jnp.zeros((OHe, OWe), jnp.float32).at[:OH, :OW].set(1.0).reshape(-1)
        mask = jnp.pad(jnp.tile(m2d, (N,)), (0, Mp - Mext)).reshape(1, Mp)
        in_specs.append(pl.BlockSpec((1, TM), lambda i: (0, i)))
        args.append(mask)

    if use_bn:
        out_shape = (jax.ShapeDtypeStruct((OCp, Mp), out_dtype),
                     jax.ShapeDtypeStruct((grid_m, OCp, 1), jnp.float32),
                     jax.ShapeDtypeStruct((grid_m, OCp, 1), jnp.float32))
        out_specs = (pl.BlockSpec((OCp, TM), lambda i: (0, i)),
                     pl.BlockSpec((1, OCp, 1), lambda i: (i, 0, 0)),
                     pl.BlockSpec((1, OCp, 1), lambda i: (i, 0, 0)))
    else:
        out_shape = jax.ShapeDtypeStruct((OCp, Mp), out_dtype)
        out_specs = pl.BlockSpec((OCp, TM), lambda i: (0, i))

    out_bytes = 2 if out_dtype == jnp.bfloat16 else 4
    resident_bytes = (sum(int(p.size) * 2 for p in ph2d) + int(wt.size) * 2
                      + (OCp * 4 if use_bias else 0))
    blocked_bytes = OCp * TM * out_bytes + (TM * 4 + 2 * OCp * 4 if use_bn else 0)
    vmem_limit = int(min(64 * 2**20,
                         max(8 * 2**20,
                             2 * resident_bytes + 4 * blocked_bytes + (2 << 20))))

    cost = pl.CostEstimate(
        flops=2 * OCp * Cp * len(taps) * Mp,
        transcendentals=0,
        bytes_accessed=resident_bytes + grid_m * blocked_bytes)

    kern = functools.partial(
        _conv_taps_kernel, taps=taps, tm=TM, n_phases=n_phases,
        single_block=(grid_m == 1), use_bias=use_bias,
        use_act=act_in_kernel, bn_stats=use_bn)

    res = pl.pallas_call(
        kern,
        grid=(grid_m,),
        in_specs=in_specs,
        out_specs=out_specs,
        out_shape=out_shape,
        compiler_params=pltpu.CompilerParams(
            dimension_semantics=("parallel",),
            vmem_limit_bytes=vmem_limit),
        cost_estimate=cost,
    )(*args)

    if use_bn:
        out2d, s1p, s2p = res
    else:
        out2d = res

    # Extract valid output positions (pure layout; fuses with next-layer prep).
    out = out2d[:OC, :Mext].astype(jnp.float32)
    out = out.reshape(OC, N, OHe, OWe)[:, :, :OH, :OW]

    if use_bn:
        # Training-mode BatchNorm2d: batch statistics over (N, OH, OW).
        s1 = jnp.sum(s1p, axis=0)[:OC, 0]
        s2 = jnp.sum(s2p, axis=0)[:OC, 0]
        mean = s1 / Mvalid
        # Single-pass variance E[x^2]-E[x]^2 in f32, clamped at 0.
        var = jnp.maximum(s2 / Mvalid - mean * mean, 0.0)
        scale = gamma * jax.lax.rsqrt(var + _BN_EPS)
        shift = beta - mean * scale
        out = out * scale[:, None, None, None] + shift[:, None, None, None]
        out = jnp.where(out > 0, out, _LRELU_SLOPE * out)   # LeakyReLU after BN

    return out


# ---------------------------------------------------------------------------
# Parameters + forward.
# ---------------------------------------------------------------------------
def init_params(key, in_channels=6, features=8):
    f = features
    ks = jax.random.split(key, 4)
    p = {}
    p["w1"] = 0.02 * jax.random.normal(ks[0], (f, in_channels, 4, 4), jnp.float32)
    p["b1"] = jnp.zeros((f,), jnp.float32)
    p["w2"] = 0.02 * jax.random.normal(ks[1], (2 * f, f, 4, 4), jnp.float32)
    p["b2"] = jnp.zeros((2 * f,), jnp.float32)   # present but cancelled by BN
    p["g2"] = jnp.ones((2 * f,), jnp.float32)
    p["be2"] = jnp.zeros((2 * f,), jnp.float32)
    p["w3"] = 0.02 * jax.random.normal(ks[2], (4 * f, 2 * f, 4, 4), jnp.float32)
    p["b3"] = jnp.zeros((4 * f,), jnp.float32)   # present but cancelled by BN
    p["g3"] = jnp.ones((4 * f,), jnp.float32)
    p["be3"] = jnp.zeros((4 * f,), jnp.float32)
    p["w4"] = 0.02 * jax.random.normal(ks[3], (1, 4 * f, 4, 4), jnp.float32)
    p["b4"] = jnp.zeros((1,), jnp.float32)
    return p


def patchgan_forward(params, x, y):
    p = params
    xy = jnp.concatenate([x, y], axis=1)             # (N, 6, H, W)  NCHW
    act = jnp.transpose(xy, (1, 0, 2, 3)).astype(jnp.float32)   # (C, N, H, W)

    act = _conv_layer(act, p["w1"], b=p["b1"], stride=2,
                      use_bn=False, act_in_kernel=True)
    act = _conv_layer(act, p["w2"], gamma=p["g2"], beta=p["be2"], stride=2,
                      use_bn=True)
    act = _conv_layer(act, p["w3"], gamma=p["g3"], beta=p["be3"], stride=2,
                      use_bn=True)
    act = _conv_layer(act, p["w4"], b=p["b4"], stride=1,
                      use_bn=False, act_in_kernel=False, out_dtype=jnp.float32)
    return jnp.transpose(act, (1, 0, 2, 3))          # (N, 1, H', W')


if __name__ == "__main__":
    key = jax.random.PRNGKey(0)
    kx, ky, kp = jax.random.split(key, 3)
    # x, y each have 3 channels -> concatenated input has 6 channels.
    x = jax.random.normal(kx, (2, 3, 16, 16), jnp.float32)
    y = jax.random.normal(ky, (2, 3, 16, 16), jnp.float32)
    params = init_params(kp, in_channels=6, features=8)

    out = jax.jit(patchgan_forward)(params, x, y)
    out = jax.block_until_ready(out)
    assert out.shape == (2, 1, 1, 1), out.shape
    assert bool(jnp.all(jnp.isfinite(out))), "non-finite output"
    print("KERNEL_OK")
</pallas_src>

<mosaic_0001>
module attributes {stable_mosaic.version = 11 : i64} {
  func.func @_conv_taps_kernel(%arg0: i32, %arg1: memref<8x384xbf16, #tpu.memory_space<vmem>>, %arg2: memref<8x384xbf16, #tpu.memory_space<vmem>>, %arg3: memref<8x384xbf16, #tpu.memory_space<vmem>>, %arg4: memref<8x384xbf16, #tpu.memory_space<vmem>>, %arg5: memref<16x16x8xbf16, #tpu.memory_space<vmem>>, %arg6: memref<16x1xf32, #tpu.memory_space<vmem>>, %arg7: memref<16x256xbf16, #tpu.memory_space<vmem>>) attributes {dimension_semantics = [#tpu.dimension_semantics<parallel>], iteration_bounds = array<i64: 1>, scalar_prefetch = 0 : i64, scratch_operands = 0 : i64, tpu.core_type = #tpu.core_type<tc>, window_params = [{pipeline_mode = #tpu.pipeline_mode<synchronous>, transform_indices = @transform_0, window_bounds = array<i64: 8, 384>}, {pipeline_mode = #tpu.pipeline_mode<synchronous>, transform_indices = @transform_1, window_bounds = array<i64: 8, 384>}, {pipeline_mode = #tpu.pipeline_mode<synchronous>, transform_indices = @transform_2, window_bounds = array<i64: 8, 384>}, {pipeline_mode = #tpu.pipeline_mode<synchronous>, transform_indices = @transform_3, window_bounds = array<i64: 8, 384>}, {pipeline_mode = #tpu.pipeline_mode<synchronous>, transform_indices = @transform_4, window_bounds = array<i64: 16, 16, 8>}, {pipeline_mode = #tpu.pipeline_mode<synchronous>, transform_indices = @transform_5, window_bounds = array<i64: 16, 1>}, {transform_indices = @transform_6, window_bounds = array<i64: 16, 256>}]} {
    %c0 = arith.constant 0 : index
    %c0_0 = arith.constant 0 : index
    %0 = vector.load %arg1[%c0, %c0_0] : memref<8x384xbf16, #tpu.memory_space<vmem>>, vector<8x256xbf16>
    %c0_1 = arith.constant 0 : index
    %c0_2 = arith.constant 0 : index
    %c0_3 = arith.constant 0 : index
    %1 = vector.load %arg5[%c0_1, %c0_2, %c0_3] : memref<16x16x8xbf16, #tpu.memory_space<vmem>>, vector<1x16x8xbf16>
    %2 = vector.shape_cast %1 : vector<1x16x8xbf16> to vector<16x8xbf16>
    %cst = arith.constant dense<0.000000e+00> : vector<16x256xf32>
    %3 = tpu.matmul %2, %0, %cst {dimension_numbers = #tpu.dot_dimension_numbers<[1], [0], [0], [1], [0, 0, 1, 1], [], []>} : vector<16x8xbf16>, vector<8x256xbf16>, vector<16x256xf32> -> vector<16x256xf32>
    %c0_4 = arith.constant 0 : index
    %c0_5 = arith.constant 0 : index
    %4 = vector.load %arg2[%c0_4, %c0_5] : memref<8x384xbf16, #tpu.memory_space<vmem>>, vector<8x256xbf16>
    %c1 = arith.constant 1 : index
    %c0_6 = arith.constant 0 : index
    %c0_7 = arith.constant 0 : index
    %5 = vector.load %arg5[%c1, %c0_6, %c0_7] : memref<16x16x8xbf16, #tpu.memory_space<vmem>>, vector<1x16x8xbf16>
    %6 = vector.shape_cast %5 : vector<1x16x8xbf16> to vector<16x8xbf16>
    %cst_8 = arith.constant dense<0.000000e+00> : vector<16x256xf32>
    %7 = tpu.matmul %6, %4, %cst_8 {dimension_numbers = #tpu.dot_dimension_numbers<[1], [0], [0], [1], [0, 0, 1, 1], [], []>} : vector<16x8xbf16>, vector<8x256xbf16>, vector<16x256xf32> -> vector<16x256xf32>
    %8 = arith.addf %3, %7 : vector<16x256xf32>
    %c0_9 = arith.constant 0 : index
    %c1_10 = arith.constant 1 : index
    %9 = vector.load %arg1[%c0_9, %c1_10] : memref<8x384xbf16, #tpu.memory_space<vmem>>, vector<8x256xbf16>
    %c2 = arith.constant 2 : index
    %c0_11 = arith.constant 0 : index
    %c0_12 = arith.constant 0 : index
    %10 = vector.load %arg5[%c2, %c0_11, %c0_12] : memref<16x16x8xbf16, #tpu.memory_space<vmem>>, vector<1x16x8xbf16>
    %11 = vector.shape_cast %10 : vector<1x16x8xbf16> to vector<16x8xbf16>
    %cst_13 = arith.constant dense<0.000000e+00> : vector<16x256xf32>
    %12 = tpu.matmul %11, %9, %cst_13 {dimension_numbers = #tpu.dot_dimension_numbers<[1], [0], [0], [1], [0, 0, 1, 1], [], []>} : vector<16x8xbf16>, vector<8x256xbf16>, vector<16x256xf32> -> vector<16x256xf32>
    %13 = arith.addf %8, %12 : vector<16x256xf32>
    %c0_14 = arith.constant 0 : index
    %c1_15 = arith.constant 1 : index
    %14 = vector.load %arg2[%c0_14, %c1_15] : memref<8x384xbf16, #tpu.memory_space<vmem>>, vector<8x256xbf16>
    %c3 = arith.constant 3 : index
    %c0_16 = arith.constant 0 : index
    %c0_17 = arith.constant 0 : index
    %15 = vector.load %arg5[%c3, %c0_16, %c0_17] : memref<16x16x8xbf16, #tpu.memory_space<vmem>>, vector<1x16x8xbf16>
    %16 = vector.shape_cast %15 : vector<1x16x8xbf16> to vector<16x8xbf16>
    %cst_18 = arith.constant dense<0.000000e+00> : vector<16x256xf32>
    %17 = tpu.matmul %16, %14, %cst_18 {dimension_numbers = #tpu.dot_dimension_numbers<[1], [0], [0], [1], [0, 0, 1, 1], [], []>} : vector<16x8xbf16>, vector<8x256xbf16>, vector<16x256xf32> -> vector<16x256xf32>
    %18 = arith.addf %13, %17 : vector<16x256xf32>
    %c0_19 = arith.constant 0 : index
    %c0_20 = arith.constant 0 : index
    %19 = vector.load %arg3[%c0_19, %c0_20] : memref<8x384xbf16, #tpu.memory_space<vmem>>, vector<8x256xbf16>
    %c4 = arith.constant 4 : index
    %c0_21 = arith.constant 0 : index
    %c0_22 = arith.constant 0 : index
    %20 = vector.load %arg5[%c4, %c0_21, %c0_22] : memref<16x16x8xbf16, #tpu.memory_space<vmem>>, vector<1x16x8xbf16>
    %21 = vector.shape_cast %20 : vector<1x16x8xbf16> to vector<16x8xbf16>
    %cst_23 = arith.constant dense<0.000000e+00> : vector<16x256xf32>
    %22 = tpu.matmul %21, %19, %cst_23 {dimension_numbers = #tpu.dot_dimension_numbers<[1], [0], [0], [1], [0, 0, 1, 1], [], []>} : vector<16x8xbf16>, vector<8x256xbf16>, vector<16x256xf32> -> vector<16x256xf32>
    %23 = arith.addf %18, %22 : vector<16x256xf32>
    %c0_24 = arith.constant 0 : index
    %c0_25 = arith.constant 0 : index
    %24 = vector.load %arg4[%c0_24, %c0_25] : memref<8x384xbf16, #tpu.memory_space<vmem>>, vector<8x256xbf16>
    %c5 = arith.constant 5 : index
    %c0_26 = arith.constant 0 : index
    %c0_27 = arith.constant 0 : index
    %25 = vector.load %arg5[%c5, %c0_26, %c0_27] : memref<16x16x8xbf16, #tpu.memory_space<vmem>>, vector<1x16x8xbf16>
    %26 = vector.shape_cast %25 : vector<1x16x8xbf16> to vector<16x8xbf16>
    %cst_28 = arith.constant dense<0.000000e+00> : vector<16x256xf32>
    %27 = tpu.matmul %26, %24, %cst_28 {dimension_numbers = #tpu.dot_dimension_numbers<[1], [0], [0], [1], [0, 0, 1, 1], [], []>} : vector<16x8xbf16>, vector<8x256xbf16>, vector<16x256xf32> -> vector<16x256xf32>
    %28 = arith.addf %23, %27 : vector<16x256xf32>
    %c0_29 = arith.constant 0 : index
    %c1_30 = arith.constant 1 : index
    %29 = vector.load %arg3[%c0_29, %c1_30] : memref<8x384xbf16, #tpu.memory_space<vmem>>, vector<8x256xbf16>
    %c6 = arith.constant 6 : index
    %c0_31 = arith.constant 0 : index
    %c0_32 = arith.constant 0 : index
    %30 = vector.load %arg5[%c6, %c0_31, %c0_32] : memref<16x16x8xbf16, #tpu.memory_space<vmem>>, vector<1x16x8xbf16>
    %31 = vector.shape_cast %30 : vector<1x16x8xbf16> to vector<16x8xbf16>
    %cst_33 = arith.constant dense<0.000000e+00> : vector<16x256xf32>
    %32 = tpu.matmul %31, %29, %cst_33 {dimension_numbers = #tpu.dot_dimension_numbers<[1], [0], [0], [1], [0, 0, 1, 1], [], []>} : vector<16x8xbf16>, vector<8x256xbf16>, vector<16x256xf32> -> vector<16x256xf32>
    %33 = arith.addf %28, %32 : vector<16x256xf32>
    %c0_34 = arith.constant 0 : index
    %c1_35 = arith.constant 1 : index
    %34 = vector.load %arg4[%c0_34, %c1_35] : memref<8x384xbf16, #tpu.memory_space<vmem>>, vector<8x256xbf16>
    %c7 = arith.constant 7 : index
    %c0_36 = arith.constant 0 : index
    %c0_37 = arith.constant 0 : index
    %35 = vector.load %arg5[%c7, %c0_36, %c0_37] : memref<16x16x8xbf16, #tpu.memory_space<vmem>>, vector<1x16x8xbf16>
    %36 = vector.shape_cast %35 : vector<1x16x8xbf16> to vector<16x8xbf16>
    %cst_38 = arith.constant dense<0.000000e+00> : vector<16x256xf32>
    %37 = tpu.matmul %36, %34, %cst_38 {dimension_numbers = #tpu.dot_dimension_numbers<[1], [0], [0], [1], [0, 0, 1, 1], [], []>} : vector<16x8xbf16>, vector<8x256xbf16>, vector<16x256xf32> -> vector<16x256xf32>
    %38 = arith.addf %33, %37 : vector<16x256xf32>
    %c0_39 = arith.constant 0 : index
    %c9 = arith.constant 9 : index
    %39 = vector.load %arg1[%c0_39, %c9] : memref<8x384xbf16, #tpu.memory_space<vmem>>, vector<8x256xbf16>
    %c8 = arith.constant 8 : index
    %c0_40 = arith.constant 0 : index
    %c0_41 = arith.constant 0 : index
    %40 = vector.load %arg5[%c8, %c0_40, %c0_41] : memref<16x16x8xbf16, #tpu.memory_space<vmem>>, vector<1x16x8xbf16>
    %41 = vector.shape_cast %40 : vector<1x16x8xbf16> to vector<16x8xbf16>
    %cst_42 = arith.constant dense<0.000000e+00> : vector<16x256xf32>
    %42 = tpu.matmul %41, %39, %cst_42 {dimension_numbers = #tpu.dot_dimension_numbers<[1], [0], [0], [1], [0, 0, 1, 1], [], []>} : vector<16x8xbf16>, vector<8x256xbf16>, vector<16x256xf32> -> vector<16x256xf32>
    %43 = arith.addf %38, %42 : vector<16x256xf32>
    %c0_43 = arith.constant 0 : index
    %c9_44 = arith.constant 9 : index
    %44 = vector.load %arg2[%c0_43, %c9_44] : memref<8x384xbf16, #tpu.memory_space<vmem>>, vector<8x256xbf16>
    %c9_45 = arith.constant 9 : index
    %c0_46 = arith.constant 0 : index
    %c0_47 = arith.constant 0 : index
    %45 = vector.load %arg5[%c9_45, %c0_46, %c0_47] : memref<16x16x8xbf16, #tpu.memory_space<vmem>>, vector<1x16x8xbf16>
    %46 = vector.shape_cast %45 : vector<1x16x8xbf16> to vector<16x8xbf16>
    %cst_48 = arith.constant dense<0.000000e+00> : vector<16x256xf32>
    %47 = tpu.matmul %46, %44, %cst_48 {dimension_numbers = #tpu.dot_dimension_numbers<[1], [0], [0], [1], [0, 0, 1, 1], [], []>} : vector<16x8xbf16>, vector<8x256xbf16>, vector<16x256xf32> -> vector<16x256xf32>
    %48 = arith.addf %43, %47 : vector<16x256xf32>
    %c0_49 = arith.constant 0 : index
    %c10 = arith.constant 10 : index
    %49 = vector.load %arg1[%c0_49, %c10] : memref<8x384xbf16, #tpu.memory_space<vmem>>, vector<8x256xbf16>
    %c10_50 = arith.constant 10 : index
    %c0_51 = arith.constant 0 : index
    %c0_52 = arith.constant 0 : index
    %50 = vector.load %arg5[%c10_50, %c0_51, %c0_52] : memref<16x16x8xbf16, #tpu.memory_space<vmem>>, vector<1x16x8xbf16>
    %51 = vector.shape_cast %50 : vector<1x16x8xbf16> to vector<16x8xbf16>
    %cst_53 = arith.constant dense<0.000000e+00> : vector<16x256xf32>
    %52 = tpu.matmul %51, %49, %cst_53 {dimension_numbers = #tpu.dot_dimension_numbers<[1], [0], [0], [1], [0, 0, 1, 1], [], []>} : vector<16x8xbf16>, vector<8x256xbf16>, vector<16x256xf32> -> vector<16x256xf32>
    %53 = arith.addf %48, %52 : vector<16x256xf32>
    %c0_54 = arith.constant 0 : index
    %c10_55 = arith.constant 10 : index
    %54 = vector.load %arg2[%c0_54, %c10_55] : memref<8x384xbf16, #tpu.memory_space<vmem>>, vector<8x256xbf16>
    %c11 = arith.constant 11 : index
    %c0_56 = arith.constant 0 : index
    %c0_57 = arith.constant 0 : index
    %55 = vector.load %arg5[%c11, %c0_56, %c0_57] : memref<16x16x8xbf16, #tpu.memory_space<vmem>>, vector<1x16x8xbf16>
    %56 = vector.shape_cast %55 : vector<1x16x8xbf16> to vector<16x8xbf16>
    %cst_58 = arith.constant dense<0.000000e+00> : vector<16x256xf32>
    %57 = tpu.matmul %56, %54, %cst_58 {dimension_numbers = #tpu.dot_dimension_numbers<[1], [0], [0], [1], [0, 0, 1, 1], [], []>} : vector<16x8xbf16>, vector<8x256xbf16>, vector<16x256xf32> -> vector<16x256xf32>
    %58 = arith.addf %53, %57 : vector<16x256xf32>
    %c0_59 = arith.constant 0 : index
    %c9_60 = arith.constant 9 : index
    %59 = vector.load %arg3[%c0_59, %c9_60] : memref<8x384xbf16, #tpu.memory_space<vmem>>, vector<8x256xbf16>
    %c12 = arith.constant 12 : index
    %c0_61 = arith.constant 0 : index
    %c0_62 = arith.constant 0 : index
    %60 = vector.load %arg5[%c12, %c0_61, %c0_62] : memref<16x16x8xbf16, #tpu.memory_space<vmem>>, vector<1x16x8xbf16>
    %61 = vector.shape_cast %60 : vector<1x16x8xbf16> to vector<16x8xbf16>
    %cst_63 = arith.constant dense<0.000000e+00> : vector<16x256xf32>
    %62 = tpu.matmul %61, %59, %cst_63 {dimension_numbers = #tpu.dot_dimension_numbers<[1], [0], [0], [1], [0, 0, 1, 1], [], []>} : vector<16x8xbf16>, vector<8x256xbf16>, vector<16x256xf32> -> vector<16x256xf32>
    %63 = arith.addf %58, %62 : vector<16x256xf32>
    %c0_64 = arith.constant 0 : index
    %c9_65 = arith.constant 9 : index
    %64 = vector.load %arg4[%c0_64, %c9_65] : memref<8x384xbf16, #tpu.memory_space<vmem>>, vector<8x256xbf16>
    %c13 = arith.constant 13 : index
    %c0_66 = arith.constant 0 : index
    %c0_67 = arith.constant 0 : index
    %65 = vector.load %arg5[%c13, %c0_66, %c0_67] : memref<16x16x8xbf16, #tpu.memory_space<vmem>>, vector<1x16x8xbf16>
    %66 = vector.shape_cast %65 : vector<1x16x8xbf16> to vector<16x8xbf16>
    %cst_68 = arith.constant dense<0.000000e+00> : vector<16x256xf32>
    %67 = tpu.matmul %66, %64, %cst_68 {dimension_numbers = #tpu.dot_dimension_numbers<[1], [0], [0], [1], [0, 0, 1, 1], [], []>} : vector<16x8xbf16>, vector<8x256xbf16>, vector<16x256xf32> -> vector<16x256xf32>
    %68 = arith.addf %63, %67 : vector<16x256xf32>
    %c0_69 = arith.constant 0 : index
    %c10_70 = arith.constant 10 : index
    %69 = vector.load %arg3[%c0_69, %c10_70] : memref<8x384xbf16, #tpu.memory_space<vmem>>, vector<8x256xbf16>
    %c14 = arith.constant 14 : index
    %c0_71 = arith.constant 0 : index
    %c0_72 = arith.constant 0 : index
    %70 = vector.load %arg5[%c14, %c0_71, %c0_72] : memref<16x16x8xbf16, #tpu.memory_space<vmem>>, vector<1x16x8xbf16>
    %71 = vector.shape_cast %70 : vector<1x16x8xbf16> to vector<16x8xbf16>
    %cst_73 = arith.constant dense<0.000000e+00> : vector<16x256xf32>
    %72 = tpu.matmul %71, %69, %cst_73 {dimension_numbers = #tpu.dot_dimension_numbers<[1], [0], [0], [1], [0, 0, 1, 1], [], []>} : vector<16x8xbf16>, vector<8x256xbf16>, vector<16x256xf32> -> vector<16x256xf32>
    %73 = arith.addf %68, %72 : vector<16x256xf32>
    %c0_74 = arith.constant 0 : index
    %c10_75 = arith.constant 10 : index
    %74 = vector.load %arg4[%c0_74, %c10_75] : memref<8x384xbf16, #tpu.memory_space<vmem>>, vector<8x256xbf16>
    %c15 = arith.constant 15 : index
    %c0_76 = arith.constant 0 : index
    %c0_77 = arith.constant 0 : index
    %75 = vector.load %arg5[%c15, %c0_76, %c0_77] : memref<16x16x8xbf16, #tpu.memory_space<vmem>>, vector<1x16x8xbf16>
    %76 = vector.shape_cast %75 : vector<1x16x8xbf16> to vector<16x8xbf16>
    %cst_78 = arith.constant dense<0.000000e+00> : vector<16x256xf32>
    %77 = tpu.matmul %76, %74, %cst_78 {dimension_numbers = #tpu.dot_dimension_numbers<[1], [0], [0], [1], [0, 0, 1, 1], [], []>} : vector<16x8xbf16>, vector<8x256xbf16>, vector<16x256xf32> -> vector<16x256xf32>
    %78 = arith.addf %73, %77 : vector<16x256xf32>
    %c0_79 = arith.constant 0 : index
    %c0_80 = arith.constant 0 : index
    %79 = vector.load %arg6[%c0_79, %c0_80] : memref<16x1xf32, #tpu.memory_space<vmem>>, vector<16x1xf32>
    %80 = vector.broadcast %79 : vector<16x1xf32> to vector<16x256xf32>
    %81 = arith.addf %78, %80 : vector<16x256xf32>
    %cst_81 = arith.constant 0.000000e+00 : f32
    %82 = vector.broadcast %cst_81 : f32 to vector<16x256xf32>
    %83 = arith.cmpf ogt, %81, %82 : vector<16x256xf32>
    %cst_82 = arith.constant 2.000000e-01 : f32
    %84 = vector.broadcast %cst_82 : f32 to vector<16x256xf32>
    %85 = arith.mulf %84, %81 : vector<16x256xf32>
    %86 = arith.select %83, %81, %85 : vector<16x256xi1>, vector<16x256xf32>
    %87 = arith.truncf %86 : vector<16x256xf32> to vector<16x256xbf16>
    %c0_83 = arith.constant 0 : index
    %c0_84 = arith.constant 0 : index
    %88 = vector.load %arg7[%c0_83, %c0_84] : memref<16x256xbf16, #tpu.memory_space<vmem>>, vector<16x256xbf16>
    tpu.vector_store %arg7[%c0_83, %c0_84], %87 {strides = array<i32>} : memref<16x256xbf16, #tpu.memory_space<vmem>>, vector<16x256xbf16>,
    return
  }
  func.func @transform_0(%arg0: i32) -> (i32, i32) {
    %c0_i32 = arith.constant 0 : i32
    %c0_i32_0 = arith.constant 0 : i32
    %c0_i32_1 = arith.constant 0 : i32
    return %c0_i32, %c0_i32_0 : i32, i32
  }
  func.func @transform_1(%arg0: i32) -> (i32, i32) {
    %c0_i32 = arith.constant 0 : i32
    %c0_i32_0 = arith.constant 0 : i32
    %c0_i32_1 = arith.constant 0 : i32
    return %c0_i32, %c0_i32_0 : i32, i32
  }
  func.func @transform_2(%arg0: i32) -> (i32, i32) {
    %c0_i32 = arith.constant 0 : i32
    %c0_i32_0 = arith.constant 0 : i32
    %c0_i32_1 = arith.constant 0 : i32
    return %c0_i32, %c0_i32_0 : i32, i32
  }
  func.func @transform_3(%arg0: i32) -> (i32, i32) {
    %c0_i32 = arith.constant 0 : i32
    %c0_i32_0 = arith.constant 0 : i32
    %c0_i32_1 = arith.constant 0 : i32
    return %c0_i32, %c0_i32_0 : i32, i32
  }
  func.func @transform_4(%arg0: i32) -> (i32, i32, i32) {
    %c0_i32 = arith.constant 0 : i32
    %c0_i32_0 = arith.constant 0 : i32
    %c0_i32_1 = arith.constant 0 : i32
    %c0_i32_2 = arith.constant 0 : i32
    return %c0_i32, %c0_i32_0, %c0_i32_1 : i32, i32, i32
  }
  func.func @transform_5(%arg0: i32) -> (i32, i32) {
    %c0_i32 = arith.constant 0 : i32
    %c0_i32_0 = arith.constant 0 : i32
    %c0_i32_1 = arith.constant 0 : i32
    return %c0_i32, %c0_i32_0 : i32, i32
  }
  func.func @transform_6(%arg0: i32) -> (i32, i32) {
    %c0_i32 = arith.constant 0 : i32
    %c0_i32_0 = arith.constant 0 : i32
    return %c0_i32, %arg0 : i32, i32
  }
}

module attributes {stable_mosaic.version = 11 : i64} {
  func.func @_conv_taps_kernel(%arg0: i32, %arg1: memref<8x256xbf16, #tpu.memory_space<vmem>>, %arg2: memref<8x256xbf16, #tpu.memory_space<vmem>>, %arg3: memref<8x256xbf16, #tpu.memory_space<vmem>>, %arg4: memref<8x256xbf16, #tpu.memory_space<vmem>>, %arg5: memref<16x16x8xbf16, #tpu.memory_space<vmem>>, %arg6: memref<1x128xf32, #tpu.memory_space<vmem>>, %arg7: memref<16x128xbf16, #tpu.memory_space<vmem>>, %arg8: memref<1x16x1xf32, #tpu.memory_space<vmem>>, %arg9: memref<1x16x1xf32, #tpu.memory_space<vmem>>) attributes {dimension_semantics = [#tpu.dimension_semantics<parallel>], iteration_bounds = array<i64: 1>, scalar_prefetch = 0 : i64, scratch_operands = 0 : i64, tpu.core_type = #tpu.core_type<tc>, window_params = [{pipeline_mode = #tpu.pipeline_mode<synchronous>, transform_indices = @transform_0, window_bounds = array<i64: 8, 256>}, {pipeline_mode = #tpu.pipeline_mode<synchronous>, transform_indices = @transform_1, window_bounds = array<i64: 8, 256>}, {pipeline_mode = #tpu.pipeline_mode<synchronous>, transform_indices = @transform_2, window_bounds = array<i64: 8, 256>}, {pipeline_mode = #tpu.pipeline_mode<synchronous>, transform_indices = @transform_3, window_bounds = array<i64: 8, 256>}, {pipeline_mode = #tpu.pipeline_mode<synchronous>, transform_indices = @transform_4, window_bounds = array<i64: 16, 16, 8>}, {transform_indices = @transform_5, window_bounds = array<i64: 1, 128>}, {transform_indices = @transform_6, window_bounds = array<i64: 16, 128>}, {transform_indices = @transform_7, window_bounds = array<i64: 1, 16, 1>}, {transform_indices = @transform_8, window_bounds = array<i64: 1, 16, 1>}]} {
    %c0 = arith.constant 0 : index
    %c0_0 = arith.constant 0 : index
    %0 = vector.load %arg1[%c0, %c0_0] : memref<8x256xbf16, #tpu.memory_space<vmem>>, vector<8x128xbf16>
    %c0_1 = arith.constant 0 : index
    %c0_2 = arith.constant 0 : index
    %c0_3 = arith.constant 0 : index
    %1 = vector.load %arg5[%c0_1, %c0_2, %c0_3] : memref<16x16x8xbf16, #tpu.memory_space<vmem>>, vector<1x16x8xbf16>
    %2 = vector.shape_cast %1 : vector<1x16x8xbf16> to vector<16x8xbf16>
    %cst = arith.constant dense<0.000000e+00> : vector<16x128xf32>
    %3 = tpu.matmul %2, %0, %cst {dimension_numbers = #tpu.dot_dimension_numbers<[1], [0], [0], [1], [0, 0, 1, 1], [], []>} : vector<16x8xbf16>, vector<8x128xbf16>, vector<16x128xf32> -> vector<16x128xf32>
    %c0_4 = arith.constant 0 : index
    %c0_5 = arith.constant 0 : index
    %4 = vector.load %arg2[%c0_4, %c0_5] : memref<8x256xbf16, #tpu.memory_space<vmem>>, vector<8x128xbf16>
    %c1 = arith.constant 1 : index
    %c0_6 = arith.constant 0 : index
    %c0_7 = arith.constant 0 : index
    %5 = vector.load %arg5[%c1, %c0_6, %c0_7] : memref<16x16x8xbf16, #tpu.memory_space<vmem>>, vector<1x16x8xbf16>
    %6 = vector.shape_cast %5 : vector<1x16x8xbf16> to vector<16x8xbf16>
    %cst_8 = arith.constant dense<0.000000e+00> : vector<16x128xf32>
    %7 = tpu.matmul %6, %4, %cst_8 {dimension_numbers = #tpu.dot_dimension_numbers<[1], [0], [0], [1], [0, 0, 1, 1], [], []>} : vector<16x8xbf16>, vector<8x128xbf16>, vector<16x128xf32> -> vector<16x128xf32>
    %8 = arith.addf %3, %7 : vector<16x128xf32>
    %c0_9 = arith.constant 0 : index
    %c1_10 = arith.constant 1 : index
    %9 = vector.load %arg1[%c0_9, %c1_10] : memref<8x256xbf16, #tpu.memory_space<vmem>>, vector<8x128xbf16>
    %c2 = arith.constant 2 : index
    %c0_11 = arith.constant 0 : index
    %c0_12 = arith.constant 0 : index
    %10 = vector.load %arg5[%c2, %c0_11, %c0_12] : memref<16x16x8xbf16, #tpu.memory_space<vmem>>, vector<1x16x8xbf16>
    %11 = vector.shape_cast %10 : vector<1x16x8xbf16> to vector<16x8xbf16>
    %cst_13 = arith.constant dense<0.000000e+00> : vector<16x128xf32>
    %12 = tpu.matmul %11, %9, %cst_13 {dimension_numbers = #tpu.dot_dimension_numbers<[1], [0], [0], [1], [0, 0, 1, 1], [], []>} : vector<16x8xbf16>, vector<8x128xbf16>, vector<16x128xf32> -> vector<16x128xf32>
    %13 = arith.addf %8, %12 : vector<16x128xf32>
    %c0_14 = arith.constant 0 : index
    %c1_15 = arith.constant 1 : index
    %14 = vector.load %arg2[%c0_14, %c1_15] : memref<8x256xbf16, #tpu.memory_space<vmem>>, vector<8x128xbf16>
    %c3 = arith.constant 3 : index
    %c0_16 = arith.constant 0 : index
    %c0_17 = arith.constant 0 : index
    %15 = vector.load %arg5[%c3, %c0_16, %c0_17] : memref<16x16x8xbf16, #tpu.memory_space<vmem>>, vector<1x16x8xbf16>
    %16 = vector.shape_cast %15 : vector<1x16x8xbf16> to vector<16x8xbf16>
    %cst_18 = arith.constant dense<0.000000e+00> : vector<16x128xf32>
    %17 = tpu.matmul %16, %14, %cst_18 {dimension_numbers = #tpu.dot_dimension_numbers<[1], [0], [0], [1], [0, 0, 1, 1], [], []>} : vector<16x8xbf16>, vector<8x128xbf16>, vector<16x128xf32> -> vector<16x128xf32>
    %18 = arith.addf %13, %17 : vector<16x128xf32>
    %c0_19 = arith.constant 0 : index
    %c0_20 = arith.constant 0 : index
    %19 = vector.load %arg3[%c0_19, %c0_20] : memref<8x256xbf16, #tpu.memory_space<vmem>>, vector<8x128xbf16>
    %c4 = arith.constant 4 : index
    %c0_21 = arith.constant 0 : index
    %c0_22 = arith.constant 0 : index
    %20 = vector.load %arg5[%c4, %c0_21, %c0_22] : memref<16x16x8xbf16, #tpu.memory_space<vmem>>, vector<1x16x8xbf16>
    %21 = vector.shape_cast %20 : vector<1x16x8xbf16> to vector<16x8xbf16>
    %cst_23 = arith.constant dense<0.000000e+00> : vector<16x128xf32>
    %22 = tpu.matmul %21, %19, %cst_23 {dimension_numbers = #tpu.dot_dimension_numbers<[1], [0], [0], [1], [0, 0, 1, 1], [], []>} : vector<16x8xbf16>, vector<8x128xbf16>, vector<16x128xf32> -> vector<16x128xf32>
    %23 = arith.addf %18, %22 : vector<16x128xf32>
    %c0_24 = arith.constant 0 : index
    %c0_25 = arith.constant 0 : index
    %24 = vector.load %arg4[%c0_24, %c0_25] : memref<8x256xbf16, #tpu.memory_space<vmem>>, vector<8x128xbf16>
    %c5 = arith.constant 5 : index
    %c0_26 = arith.constant 0 : index
    %c0_27 = arith.constant 0 : index
    %25 = vector.load %arg5[%c5, %c0_26, %c0_27] : memref<16x16x8xbf16, #tpu.memory_space<vmem>>, vector<1x16x8xbf16>
    %26 = vector.shape_cast %25 : vector<1x16x8xbf16> to vector<16x8xbf16>
    %cst_28 = arith.constant dense<0.000000e+00> : vector<16x128xf32>
    %27 = tpu.matmul %26, %24, %cst_28 {dimension_numbers = #tpu.dot_dimension_numbers<[1], [0], [0], [1], [0, 0, 1, 1], [], []>} : vector<16x8xbf16>, vector<8x128xbf16>, vector<16x128xf32> -> vector<16x128xf32>
    %28 = arith.addf %23, %27 : vector<16x128xf32>
    %c0_29 = arith.constant 0 : index
    %c1_30 = arith.constant 1 : index
    %29 = vector.load %arg3[%c0_29, %c1_30] : memref<8x256xbf16, #tpu.memory_space<vmem>>, vector<8x128xbf16>
    %c6 = arith.constant 6 : index
    %c0_31 = arith.constant 0 : index
    %c0_32 = arith.constant 0 : index
    %30 = vector.load %arg5[%c6, %c0_31, %c0_32] : memref<16x16x8xbf16, #tpu.memory_space<vmem>>, vector<1x16x8xbf16>
    %31 = vector.shape_cast %30 : vector<1x16x8xbf16> to vector<16x8xbf16>
    %cst_33 = arith.constant dense<0.000000e+00> : vector<16x128xf32>
    %32 = tpu.matmul %31, %29, %cst_33 {dimension_numbers = #tpu.dot_dimension_numbers<[1], [0], [0], [1], [0, 0, 1, 1], [], []>} : vector<16x8xbf16>, vector<8x128xbf16>, vector<16x128xf32> -> vector<16x128xf32>
    %33 = arith.addf %28, %32 : vector<16x128xf32>
    %c0_34 = arith.constant 0 : index
    %c1_35 = arith.constant 1 : index
    %34 = vector.load %arg4[%c0_34, %c1_35] : memref<8x256xbf16, #tpu.memory_space<vmem>>, vector<8x128xbf16>
    %c7 = arith.constant 7 : index
    %c0_36 = arith.constant 0 : index
    %c0_37 = arith.constant 0 : index
    %35 = vector.load %arg5[%c7, %c0_36, %c0_37] : memref<16x16x8xbf16, #tpu.memory_space<vmem>>, vector<1x16x8xbf16>
    %36 = vector.shape_cast %35 : vector<1x16x8xbf16> to vector<16x8xbf16>
    %cst_38 = arith.constant dense<0.000000e+00> : vector<16x128xf32>
    %37 = tpu.matmul %36, %34, %cst_38 {dimension_numbers = #tpu.dot_dimension_numbers<[1], [0], [0], [1], [0, 0, 1, 1], [], []>} : vector<16x8xbf16>, vector<8x128xbf16>, vector<16x128xf32> -> vector<16x128xf32>
    %38 = arith.addf %33, %37 : vector<16x128xf32>
    %c0_39 = arith.constant 0 : index
    %c5_40 = arith.constant 5 : index
    %39 = vector.load %arg1[%c0_39, %c5_40] : memref<8x256xbf16, #tpu.memory_space<vmem>>, vector<8x128xbf16>
    %c8 = arith.constant 8 : index
    %c0_41 = arith.constant 0 : index
    %c0_42 = arith.constant 0 : index
    %40 = vector.load %arg5[%c8, %c0_41, %c0_42] : memref<16x16x8xbf16, #tpu.memory_space<vmem>>, vector<1x16x8xbf16>
    %41 = vector.shape_cast %40 : vector<1x16x8xbf16> to vector<16x8xbf16>
    %cst_43 = arith.constant dense<0.000000e+00> : vector<16x128xf32>
    %42 = tpu.matmul %41, %39, %cst_43 {dimension_numbers = #tpu.dot_dimension_numbers<[1], [0], [0], [1], [0, 0, 1, 1], [], []>} : vector<16x8xbf16>, vector<8x128xbf16>, vector<16x128xf32> -> vector<16x128xf32>
    %43 = arith.addf %38, %42 : vector<16x128xf32>
    %c0_44 = arith.constant 0 : index
    %c5_45 = arith.constant 5 : index
    %44 = vector.load %arg2[%c0_44, %c5_45] : memref<8x256xbf16, #tpu.memory_space<vmem>>, vector<8x128xbf16>
    %c9 = arith.constant 9 : index
    %c0_46 = arith.constant 0 : index
    %c0_47 = arith.constant 0 : index
    %45 = vector.load %arg5[%c9, %c0_46, %c0_47] : memref<16x16x8xbf16, #tpu.memory_space<vmem>>, vector<1x16x8xbf16>
    %46 = vector.shape_cast %45 : vector<1x16x8xbf16> to vector<16x8xbf16>
    %cst_48 = arith.constant dense<0.000000e+00> : vector<16x128xf32>
    %47 = tpu.matmul %46, %44, %cst_48 {dimension_numbers = #tpu.dot_dimension_numbers<[1], [0], [0], [1], [0, 0, 1, 1], [], []>} : vector<16x8xbf16>, vector<8x128xbf16>, vector<16x128xf32> -> vector<16x128xf32>
    %48 = arith.addf %43, %47 : vector<16x128xf32>
    %c0_49 = arith.constant 0 : index
    %c6_50 = arith.constant 6 : index
    %49 = vector.load %arg1[%c0_49, %c6_50] : memref<8x256xbf16, #tpu.memory_space<vmem>>, vector<8x128xbf16>
    %c10 = arith.constant 10 : index
    %c0_51 = arith.constant 0 : index
    %c0_52 = arith.constant 0 : index
    %50 = vector.load %arg5[%c10, %c0_51, %c0_52] : memref<16x16x8xbf16, #tpu.memory_space<vmem>>, vector<1x16x8xbf16>
    %51 = vector.shape_cast %50 : vector<1x16x8xbf16> to vector<16x8xbf16>
    %cst_53 = arith.constant dense<0.000000e+00> : vector<16x128xf32>
    %52 = tpu.matmul %51, %49, %cst_53 {dimension_numbers = #tpu.dot_dimension_numbers<[1], [0], [0], [1], [0, 0, 1, 1], [], []>} : vector<16x8xbf16>, vector<8x128xbf16>, vector<16x128xf32> -> vector<16x128xf32>
    %53 = arith.addf %48, %52 : vector<16x128xf32>
    %c0_54 = arith.constant 0 : index
    %c6_55 = arith.constant 6 : index
    %54 = vector.load %arg2[%c0_54, %c6_55] : memref<8x256xbf16, #tpu.memory_space<vmem>>, vector<8x128xbf16>
    %c11 = arith.constant 11 : index
    %c0_56 = arith.constant 0 : index
    %c0_57 = arith.constant 0 : index
    %55 = vector.load %arg5[%c11, %c0_56, %c0_57] : memref<16x16x8xbf16, #tpu.memory_space<vmem>>, vector<1x16x8xbf16>
    %56 = vector.shape_cast %55 : vector<1x16x8xbf16> to vector<16x8xbf16>
    %cst_58 = arith.constant dense<0.000000e+00> : vector<16x128xf32>
    %57 = tpu.matmul %56, %54, %cst_58 {dimension_numbers = #tpu.dot_dimension_numbers<[1], [0], [0], [1], [0, 0, 1, 1], [], []>} : vector<16x8xbf16>, vector<8x128xbf16>, vector<16x128xf32> -> vector<16x128xf32>
    %58 = arith.addf %53, %57 : vector<16x128xf32>
    %c0_59 = arith.constant 0 : index
    %c5_60 = arith.constant 5 : index
    %59 = vector.load %arg3[%c0_59, %c5_60] : memref<8x256xbf16, #tpu.memory_space<vmem>>, vector<8x128xbf16>
    %c12 = arith.constant 12 : index
    %c0_61 = arith.constant 0 : index
    %c0_62 = arith.constant 0 : index
    %60 = vector.load %arg5[%c12, %c0_61, %c0_62] : memref<16x16x8xbf16, #tpu.memory_space<vmem>>, vector<1x16x8xbf16>
    %61 = vector.shape_cast %60 : vector<1x16x8xbf16> to vector<16x8xbf16>
    %cst_63 = arith.constant dense<0.000000e+00> : vector<16x128xf32>
    %62 = tpu.matmul %61, %59, %cst_63 {dimension_numbers = #tpu.dot_dimension_numbers<[1], [0], [0], [1], [0, 0, 1, 1], [], []>} : vector<16x8xbf16>, vector<8x128xbf16>, vector<16x128xf32> -> vector<16x128xf32>
    %63 = arith.addf %58, %62 : vector<16x128xf32>
    %c0_64 = arith.constant 0 : index
    %c5_65 = arith.constant 5 : index
    %64 = vector.load %arg4[%c0_64, %c5_65] : memref<8x256xbf16, #tpu.memory_space<vmem>>, vector<8x128xbf16>
    %c13 = arith.constant 13 : index
    %c0_66 = arith.constant 0 : index
    %c0_67 = arith.constant 0 : index
    %65 = vector.load %arg5[%c13, %c0_66, %c0_67] : memref<16x16x8xbf16, #tpu.memory_space<vmem>>, vector<1x16x8xbf16>
    %66 = vector.shape_cast %65 : vector<1x16x8xbf16> to vector<16x8xbf16>
    %cst_68 = arith.constant dense<0.000000e+00> : vector<16x128xf32>
    %67 = tpu.matmul %66, %64, %cst_68 {dimension_numbers = #tpu.dot_dimension_numbers<[1], [0], [0], [1], [0, 0, 1, 1], [], []>} : vector<16x8xbf16>, vector<8x128xbf16>, vector<16x128xf32> -> vector<16x128xf32>
    %68 = arith.addf %63, %67 : vector<16x128xf32>
    %c0_69 = arith.constant 0 : index
    %c6_70 = arith.constant 6 : index
    %69 = vector.load %arg3[%c0_69, %c6_70] : memref<8x256xbf16, #tpu.memory_space<vmem>>, vector<8x128xbf16>
    %c14 = arith.constant 14 : index
    %c0_71 = arith.constant 0 : index
    %c0_72 = arith.constant 0 : index
    %70 = vector.load %arg5[%c14, %c0_71, %c0_72] : memref<16x16x8xbf16, #tpu.memory_space<vmem>>, vector<1x16x8xbf16>
    %71 = vector.shape_cast %70 : vector<1x16x8xbf16> to vector<16x8xbf16>
    %cst_73 = arith.constant dense<0.000000e+00> : vector<16x128xf32>
    %72 = tpu.matmul %71, %69, %cst_73 {dimension_numbers = #tpu.dot_dimension_numbers<[1], [0], [0], [1], [0, 0, 1, 1], [], []>} : vector<16x8xbf16>, vector<8x128xbf16>, vector<16x128xf32> -> vector<16x128xf32>
    %73 = arith.addf %68, %72 : vector<16x128xf32>
    %c0_74 = arith.constant 0 : index
    %c6_75 = arith.constant 6 : index
    %74 = vector.load %arg4[%c0_74, %c6_75] : memref<8x256xbf16, #tpu.memory_space<vmem>>, vector<8x128xbf16>
    %c15 = arith.constant 15 : index
    %c0_76 = arith.constant 0 : index
    %c0_77 = arith.constant 0 : index
    %75 = vector.load %arg5[%c15, %c0_76, %c0_77] : memref<16x16x8xbf16, #tpu.memory_space<vmem>>, vector<1x16x8xbf16>
    %76 = vector.shape_cast %75 : vector<1x16x8xbf16> to vector<16x8xbf16>
    %cst_78 = arith.constant dense<0.000000e+00> : vector<16x128xf32>
    %77 = tpu.matmul %76, %74, %cst_78 {dimension_numbers = #tpu.dot_dimension_numbers<[1], [0], [0], [1], [0, 0, 1, 1], [], []>} : vector<16x8xbf16>, vector<8x128xbf16>, vector<16x128xf32> -> vector<16x128xf32>
    %78 = arith.addf %73, %77 : vector<16x128xf32>
    %79 = arith.truncf %78 : vector<16x128xf32> to vector<16x128xbf16>
    %c0_79 = arith.constant 0 : index
    %c0_80 = arith.constant 0 : index
    %80 = vector.load %arg7[%c0_79, %c0_80] : memref<16x128xbf16, #tpu.memory_space<vmem>>, vector<16x128xbf16>
    tpu.vector_store %arg7[%c0_79, %c0_80], %79 {strides = array<i32>} : memref<16x128xbf16, #tpu.memory_space<vmem>>, vector<16x128xbf16>,
    %c0_81 = arith.constant 0 : index
    %c0_82 = arith.constant 0 : index
    %81 = vector.load %arg6[%c0_81, %c0_82] : memref<1x128xf32, #tpu.memory_space<vmem>>, vector<1x128xf32>
    %82 = vector.broadcast %81 : vector<1x128xf32> to vector<16x128xf32>
    %83 = arith.mulf %78, %82 : vector<16x128xf32>
    %cst_83 = arith.constant dense<0.000000e+00> : vector<16xf32>
    %84 = vector.multi_reduction <add>, %83, %cst_83 [1] : vector<16x128xf32> to vector<16xf32>
    %85 = vector.shape_cast %84 : vector<16xf32> to vector<16x1xf32>
    %c0_84 = arith.constant 0 : index
    %c0_85 = arith.constant 0 : index
    %c0_86 = arith.constant 0 : index
    %86 = vector.load %arg8[%c0_84, %c0_85, %c0_86] : memref<1x16x1xf32, #tpu.memory_space<vmem>>, vector<1x16x1xf32>
    %87 = vector.shape_cast %86 : vector<1x16x1xf32> to vector<16x1xf32>
    %88 = vector.shape_cast %85 : vector<16x1xf32> to vector<1x16x1xf32>
    tpu.vector_store %arg8[%c0_84, %c0_85, %c0_86], %88 {strides = array<i32>} : memref<1x16x1xf32, #tpu.memory_space<vmem>>, vector<1x16x1xf32>,
    %89 = arith.mulf %83, %78 : vector<16x128xf32>
    %cst_87 = arith.constant dense<0.000000e+00> : vector<16xf32>
    %90 = vector.multi_reduction <add>, %89, %cst_87 [1] : vector<16x128xf32> to vector<16xf32>
    %91 = vector.shape_cast %90 : vector<16xf32> to vector<16x1xf32>
    %c0_88 = arith.constant 0 : index
    %c0_89 = arith.constant 0 : index
    %c0_90 = arith.constant 0 : index
    %92 = vector.load %arg9[%c0_88, %c0_89, %c0_90] : memref<1x16x1xf32, #tpu.memory_space<vmem>>, vector<1x16x1xf32>
    %93 = vector.shape_cast %92 : vector<1x16x1xf32> to vector<16x1xf32>
    %94 = vector.shape_cast %91 : vector<16x1xf32> to vector<1x16x1xf32>
    tpu.vector_store %arg9[%c0_88, %c0_89, %c0_90], %94 {strides = array<i32>} : memref<1x16x1xf32, #tpu.memory_space<vmem>>, vector<1x16x1xf32>,
    return
  }
  func.func @transform_0(%arg0: i32) -> (i32, i32) {
    %c0_i32 = arith.constant 0 : i32
    %c0_i32_0 = arith.constant 0 : i32
    %c0_i32_1 = arith.constant 0 : i32
    return %c0_i32, %c0_i32_0 : i32, i32
  }
  func.func @transform_1(%arg0: i32) -> (i32, i32) {
    %c0_i32 = arith.constant 0 : i32
    %c0_i32_0 = arith.constant 0 : i32
    %c0_i32_1 = arith.constant 0 : i32
    return %c0_i32, %c0_i32_0 : i32, i32
  }
  func.func @transform_2(%arg0: i32) -> (i32, i32) {
    %c0_i32 = arith.constant 0 : i32
    %c0_i32_0 = arith.constant 0 : i32
    %c0_i32_1 = arith.constant 0 : i32
    return %c0_i32, %c0_i32_0 : i32, i32
  }
  func.func @transform_3(%arg0: i32) -> (i32, i32) {
    %c0_i32 = arith.constant 0 : i32
    %c0_i32_0 = arith.constant 0 : i32
    %c0_i32_1 = arith.constant 0 : i32
    return %c0_i32, %c0_i32_0 : i32, i32
  }
  func.func @transform_4(%arg0: i32) -> (i32, i32, i32) {
    %c0_i32 = arith.constant 0 : i32
    %c0_i32_0 = arith.constant 0 : i32
    %c0_i32_1 = arith.constant 0 : i32
    %c0_i32_2 = arith.constant 0 : i32
    return %c0_i32, %c0_i32_0, %c0_i32_1 : i32, i32, i32
  }
  func.func @transform_5(%arg0: i32) -> (i32, i32) {
    %c0_i32 = arith.constant 0 : i32
    %c0_i32_0 = arith.constant 0 : i32
    return %c0_i32, %arg0 : i32, i32
  }
  func.func @transform_6(%arg0: i32) -> (i32, i32) {
    %c0_i32 = arith.constant 0 : i32
    %c0_i32_0 = arith.constant 0 : i32
    return %c0_i32, %arg0 : i32, i32
  }
  func.func @transform_7(%arg0: i32) -> (i32, i32, i32) {
    %c0_i32 = arith.constant 0 : i32
    %c0_i32_0 = arith.constant 0 : i32
    %c0_i32_1 = arith.constant 0 : i32
    return %arg0, %c0_i32, %c0_i32_0 : i32, i32, i32
  }
  func.func @transform_8(%arg0: i32) -> (i32, i32, i32) {
    %c0_i32 = arith.constant 0 : i32
    %c0_i32_0 = arith.constant 0 : i32
    %c0_i32_1 = arith.constant 0 : i32
    return %arg0, %c0_i32, %c0_i32_0 : i32, i32, i32
  }
}

module attributes {stable_mosaic.version = 11 : i64} {
  func.func @_conv_taps_kernel(%arg0: i32, %arg1: memref<16x256xbf16, #tpu.memory_space<vmem>>, %arg2: memref<16x256xbf16, #tpu.memory_space<vmem>>, %arg3: memref<16x256xbf16, #tpu.memory_space<vmem>>, %arg4: memref<16x256xbf16, #tpu.memory_space<vmem>>, %arg5: memref<16x32x16xbf16, #tpu.memory_space<vmem>>, %arg6: memref<1x128xf32, #tpu.memory_space<vmem>>, %arg7: memref<32x128xbf16, #tpu.memory_space<vmem>>, %arg8: memref<1x32x1xf32, #tpu.memory_space<vmem>>, %arg9: memref<1x32x1xf32, #tpu.memory_space<vmem>>) attributes {dimension_semantics = [#tpu.dimension_semantics<parallel>], iteration_bounds = array<i64: 1>, scalar_prefetch = 0 : i64, scratch_operands = 0 : i64, tpu.core_type = #tpu.core_type<tc>, window_params = [{pipeline_mode = #tpu.pipeline_mode<synchronous>, transform_indices = @transform_0, window_bounds = array<i64: 16, 256>}, {pipeline_mode = #tpu.pipeline_mode<synchronous>, transform_indices = @transform_1, window_bounds = array<i64: 16, 256>}, {pipeline_mode = #tpu.pipeline_mode<synchronous>, transform_indices = @transform_2, window_bounds = array<i64: 16, 256>}, {pipeline_mode = #tpu.pipeline_mode<synchronous>, transform_indices = @transform_3, window_bounds = array<i64: 16, 256>}, {pipeline_mode = #tpu.pipeline_mode<synchronous>, transform_indices = @transform_4, window_bounds = array<i64: 16, 32, 16>}, {transform_indices = @transform_5, window_bounds = array<i64: 1, 128>}, {transform_indices = @transform_6, window_bounds = array<i64: 32, 128>}, {transform_indices = @transform_7, window_bounds = array<i64: 1, 32, 1>}, {transform_indices = @transform_8, window_bounds = array<i64: 1, 32, 1>}]} {
    %c0 = arith.constant 0 : index
    %c0_0 = arith.constant 0 : index
    %0 = vector.load %arg1[%c0, %c0_0] : memref<16x256xbf16, #tpu.memory_space<vmem>>, vector<16x128xbf16>
    %c0_1 = arith.constant 0 : index
    %c0_2 = arith.constant 0 : index
    %c0_3 = arith.constant 0 : index
    %1 = vector.load %arg5[%c0_1, %c0_2, %c0_3] : memref<16x32x16xbf16, #tpu.memory_space<vmem>>, vector<1x32x16xbf16>
    %2 = vector.shape_cast %1 : vector<1x32x16xbf16> to vector<32x16xbf16>
    %cst = arith.constant dense<0.000000e+00> : vector<32x128xf32>
    %3 = tpu.matmul %2, %0, %cst {dimension_numbers = #tpu.dot_dimension_numbers<[1], [0], [0], [1], [0, 0, 1, 1], [], []>} : vector<32x16xbf16>, vector<16x128xbf16>, vector<32x128xf32> -> vector<32x128xf32>
    %c0_4 = arith.constant 0 : index
    %c0_5 = arith.constant 0 : index
    %4 = vector.load %arg2[%c0_4, %c0_5] : memref<16x256xbf16, #tpu.memory_space<vmem>>, vector<16x128xbf16>
    %c1 = arith.constant 1 : index
    %c0_6 = arith.constant 0 : index
    %c0_7 = arith.constant 0 : index
    %5 = vector.load %arg5[%c1, %c0_6, %c0_7] : memref<16x32x16xbf16, #tpu.memory_space<vmem>>, vector<1x32x16xbf16>
    %6 = vector.shape_cast %5 : vector<1x32x16xbf16> to vector<32x16xbf16>
    %cst_8 = arith.constant dense<0.000000e+00> : vector<32x128xf32>
    %7 = tpu.matmul %6, %4, %cst_8 {dimension_numbers = #tpu.dot_dimension_numbers<[1], [0], [0], [1], [0, 0, 1, 1], [], []>} : vector<32x16xbf16>, vector<16x128xbf16>, vector<32x128xf32> -> vector<32x128xf32>
    %8 = arith.addf %3, %7 : vector<32x128xf32>
    %c0_9 = arith.constant 0 : index
    %c1_10 = arith.constant 1 : index
    %9 = vector.load %arg1[%c0_9, %c1_10] : memref<16x256xbf16, #tpu.memory_space<vmem>>, vector<16x128xbf16>
    %c2 = arith.constant 2 : index
    %c0_11 = arith.constant 0 : index
    %c0_12 = arith.constant 0 : index
    %10 = vector.load %arg5[%c2, %c0_11, %c0_12] : memref<16x32x16xbf16, #tpu.memory_space<vmem>>, vector<1x32x16xbf16>
    %11 = vector.shape_cast %10 : vector<1x32x16xbf16> to vector<32x16xbf16>
    %cst_13 = arith.constant dense<0.000000e+00> : vector<32x128xf32>
    %12 = tpu.matmul %11, %9, %cst_13 {dimension_numbers = #tpu.dot_dimension_numbers<[1], [0], [0], [1], [0, 0, 1, 1], [], []>} : vector<32x16xbf16>, vector<16x128xbf16>, vector<32x128xf32> -> vector<32x128xf32>
    %13 = arith.addf %8, %12 : vector<32x128xf32>
    %c0_14 = arith.constant 0 : index
    %c1_15 = arith.constant 1 : index
    %14 = vector.load %arg2[%c0_14, %c1_15] : memref<16x256xbf16, #tpu.memory_space<vmem>>, vector<16x128xbf16>
    %c3 = arith.constant 3 : index
    %c0_16 = arith.constant 0 : index
    %c0_17 = arith.constant 0 : index
    %15 = vector.load %arg5[%c3, %c0_16, %c0_17] : memref<16x32x16xbf16, #tpu.memory_space<vmem>>, vector<1x32x16xbf16>
    %16 = vector.shape_cast %15 : vector<1x32x16xbf16> to vector<32x16xbf16>
    %cst_18 = arith.constant dense<0.000000e+00> : vector<32x128xf32>
    %17 = tpu.matmul %16, %14, %cst_18 {dimension_numbers = #tpu.dot_dimension_numbers<[1], [0], [0], [1], [0, 0, 1, 1], [], []>} : vector<32x16xbf16>, vector<16x128xbf16>, vector<32x128xf32> -> vector<32x128xf32>
    %18 = arith.addf %13, %17 : vector<32x128xf32>
    %c0_19 = arith.constant 0 : index
    %c0_20 = arith.constant 0 : index
    %19 = vector.load %arg3[%c0_19, %c0_20] : memref<16x256xbf16, #tpu.memory_space<vmem>>, vector<16x128xbf16>
    %c4 = arith.constant 4 : index
    %c0_21 = arith.constant 0 : index
    %c0_22 = arith.constant 0 : index
    %20 = vector.load %arg5[%c4, %c0_21, %c0_22] : memref<16x32x16xbf16, #tpu.memory_space<vmem>>, vector<1x32x16xbf16>
    %21 = vector.shape_cast %20 : vector<1x32x16xbf16> to vector<32x16xbf16>
    %cst_23 = arith.constant dense<0.000000e+00> : vector<32x128xf32>
    %22 = tpu.matmul %21, %19, %cst_23 {dimension_numbers = #tpu.dot_dimension_numbers<[1], [0], [0], [1], [0, 0, 1, 1], [], []>} : vector<32x16xbf16>, vector<16x128xbf16>, vector<32x128xf32> -> vector<32x128xf32>
    %23 = arith.addf %18, %22 : vector<32x128xf32>
    %c0_24 = arith.constant 0 : index
    %c0_25 = arith.constant 0 : index
    %24 = vector.load %arg4[%c0_24, %c0_25] : memref<16x256xbf16, #tpu.memory_space<vmem>>, vector<16x128xbf16>
    %c5 = arith.constant 5 : index
    %c0_26 = arith.constant 0 : index
    %c0_27 = arith.constant 0 : index
    %25 = vector.load %arg5[%c5, %c0_26, %c0_27] : memref<16x32x16xbf16, #tpu.memory_space<vmem>>, vector<1x32x16xbf16>
    %26 = vector.shape_cast %25 : vector<1x32x16xbf16> to vector<32x16xbf16>
    %cst_28 = arith.constant dense<0.000000e+00> : vector<32x128xf32>
    %27 = tpu.matmul %26, %24, %cst_28 {dimension_numbers = #tpu.dot_dimension_numbers<[1], [0], [0], [1], [0, 0, 1, 1], [], []>} : vector<32x16xbf16>, vector<16x128xbf16>, vector<32x128xf32> -> vector<32x128xf32>
    %28 = arith.addf %23, %27 : vector<32x128xf32>
    %c0_29 = arith.constant 0 : index
    %c1_30 = arith.constant 1 : index
    %29 = vector.load %arg3[%c0_29, %c1_30] : memref<16x256xbf16, #tpu.memory_space<vmem>>, vector<16x128xbf16>
    %c6 = arith.constant 6 : index
    %c0_31 = arith.constant 0 : index
    %c0_32 = arith.constant 0 : index
    %30 = vector.load %arg5[%c6, %c0_31, %c0_32] : memref<16x32x16xbf16, #tpu.memory_space<vmem>>, vector<1x32x16xbf16>
    %31 = vector.shape_cast %30 : vector<1x32x16xbf16> to vector<32x16xbf16>
    %cst_33 = arith.constant dense<0.000000e+00> : vector<32x128xf32>
    %32 = tpu.matmul %31, %29, %cst_33 {dimension_numbers = #tpu.dot_dimension_numbers<[1], [0], [0], [1], [0, 0, 1, 1], [], []>} : vector<32x16xbf16>, vector<16x128xbf16>, vector<32x128xf32> -> vector<32x128xf32>
    %33 = arith.addf %28, %32 : vector<32x128xf32>
    %c0_34 = arith.constant 0 : index
    %c1_35 = arith.constant 1 : index
    %34 = vector.load %arg4[%c0_34, %c1_35] : memref<16x256xbf16, #tpu.memory_space<vmem>>, vector<16x128xbf16>
    %c7 = arith.constant 7 : index
    %c0_36 = arith.constant 0 : index
    %c0_37 = arith.constant 0 : index
    %35 = vector.load %arg5[%c7, %c0_36, %c0_37] : memref<16x32x16xbf16, #tpu.memory_space<vmem>>, vector<1x32x16xbf16>
    %36 = vector.shape_cast %35 : vector<1x32x16xbf16> to vector<32x16xbf16>
    %cst_38 = arith.constant dense<0.000000e+00> : vector<32x128xf32>
    %37 = tpu.matmul %36, %34, %cst_38 {dimension_numbers = #tpu.dot_dimension_numbers<[1], [0], [0], [1], [0, 0, 1, 1], [], []>} : vector<32x16xbf16>, vector<16x128xbf16>, vector<32x128xf32> -> vector<32x128xf32>
    %38 = arith.addf %33, %37 : vector<32x128xf32>
    %c0_39 = arith.constant 0 : index
    %c3_40 = arith.constant 3 : index
    %39 = vector.load %arg1[%c0_39, %c3_40] : memref<16x256xbf16, #tpu.memory_space<vmem>>, vector<16x128xbf16>
    %c8 = arith.constant 8 : index
    %c0_41 = arith.constant 0 : index
    %c0_42 = arith.constant 0 : index
    %40 = vector.load %arg5[%c8, %c0_41, %c0_42] : memref<16x32x16xbf16, #tpu.memory_space<vmem>>, vector<1x32x16xbf16>
    %41 = vector.shape_cast %40 : vector<1x32x16xbf16> to vector<32x16xbf16>
    %cst_43 = arith.constant dense<0.000000e+00> : vector<32x128xf32>
    %42 = tpu.matmul %41, %39, %cst_43 {dimension_numbers = #tpu.dot_dimension_numbers<[1], [0], [0], [1], [0, 0, 1, 1], [], []>} : vector<32x16xbf16>, vector<16x128xbf16>, vector<32x128xf32> -> vector<32x128xf32>
    %43 = arith.addf %38, %42 : vector<32x128xf32>
    %c0_44 = arith.constant 0 : index
    %c3_45 = arith.constant 3 : index
    %44 = vector.load %arg2[%c0_44, %c3_45] : memref<16x256xbf16, #tpu.memory_space<vmem>>, vector<16x128xbf16>
    %c9 = arith.constant 9 : index
    %c0_46 = arith.constant 0 : index
    %c0_47 = arith.constant 0 : index
    %45 = vector.load %arg5[%c9, %c0_46, %c0_47] : memref<16x32x16xbf16, #tpu.memory_space<vmem>>, vector<1x32x16xbf16>
    %46 = vector.shape_cast %45 : vector<1x32x16xbf16> to vector<32x16xbf16>
    %cst_48 = arith.constant dense<0.000000e+00> : vector<32x128xf32>
    %47 = tpu.matmul %46, %44, %cst_48 {dimension_numbers = #tpu.dot_dimension_numbers<[1], [0], [0], [1], [0, 0, 1, 1], [], []>} : vector<32x16xbf16>, vector<16x128xbf16>, vector<32x128xf32> -> vector<32x128xf32>
    %48 = arith.addf %43, %47 : vector<32x128xf32>
    %c0_49 = arith.constant 0 : index
    %c4_50 = arith.constant 4 : index
    %49 = vector.load %arg1[%c0_49, %c4_50] : memref<16x256xbf16, #tpu.memory_space<vmem>>, vector<16x128xbf16>
    %c10 = arith.constant 10 : index
    %c0_51 = arith.constant 0 : index
    %c0_52 = arith.constant 0 : index
    %50 = vector.load %arg5[%c10, %c0_51, %c0_52] : memref<16x32x16xbf16, #tpu.memory_space<vmem>>, vector<1x32x16xbf16>
    %51 = vector.shape_cast %50 : vector<1x32x16xbf16> to vector<32x16xbf16>
    %cst_53 = arith.constant dense<0.000000e+00> : vector<32x128xf32>
    %52 = tpu.matmul %51, %49, %cst_53 {dimension_numbers = #tpu.dot_dimension_numbers<[1], [0], [0], [1], [0, 0, 1, 1], [], []>} : vector<32x16xbf16>, vector<16x128xbf16>, vector<32x128xf32> -> vector<32x128xf32>
    %53 = arith.addf %48, %52 : vector<32x128xf32>
    %c0_54 = arith.constant 0 : index
    %c4_55 = arith.constant 4 : index
    %54 = vector.load %arg2[%c0_54, %c4_55] : memref<16x256xbf16, #tpu.memory_space<vmem>>, vector<16x128xbf16>
    %c11 = arith.constant 11 : index
    %c0_56 = arith.constant 0 : index
    %c0_57 = arith.constant 0 : index
    %55 = vector.load %arg5[%c11, %c0_56, %c0_57] : memref<16x32x16xbf16, #tpu.memory_space<vmem>>, vector<1x32x16xbf16>
    %56 = vector.shape_cast %55 : vector<1x32x16xbf16> to vector<32x16xbf16>
    %cst_58 = arith.constant dense<0.000000e+00> : vector<32x128xf32>
    %57 = tpu.matmul %56, %54, %cst_58 {dimension_numbers = #tpu.dot_dimension_numbers<[1], [0], [0], [1], [0, 0, 1, 1], [], []>} : vector<32x16xbf16>, vector<16x128xbf16>, vector<32x128xf32> -> vector<32x128xf32>
    %58 = arith.addf %53, %57 : vector<32x128xf32>
    %c0_59 = arith.constant 0 : index
    %c3_60 = arith.constant 3 : index
    %59 = vector.load %arg3[%c0_59, %c3_60] : memref<16x256xbf16, #tpu.memory_space<vmem>>, vector<16x128xbf16>
    %c12 = arith.constant 12 : index
    %c0_61 = arith.constant 0 : index
    %c0_62 = arith.constant 0 : index
    %60 = vector.load %arg5[%c12, %c0_61, %c0_62] : memref<16x32x16xbf16, #tpu.memory_space<vmem>>, vector<1x32x16xbf16>
    %61 = vector.shape_cast %60 : vector<1x32x16xbf16> to vector<32x16xbf16>
    %cst_63 = arith.constant dense<0.000000e+00> : vector<32x128xf32>
    %62 = tpu.matmul %61, %59, %cst_63 {dimension_numbers = #tpu.dot_dimension_numbers<[1], [0], [0], [1], [0, 0, 1, 1], [], []>} : vector<32x16xbf16>, vector<16x128xbf16>, vector<32x128xf32> -> vector<32x128xf32>
    %63 = arith.addf %58, %62 : vector<32x128xf32>
    %c0_64 = arith.constant 0 : index
    %c3_65 = arith.constant 3 : index
    %64 = vector.load %arg4[%c0_64, %c3_65] : memref<16x256xbf16, #tpu.memory_space<vmem>>, vector<16x128xbf16>
    %c13 = arith.constant 13 : index
    %c0_66 = arith.constant 0 : index
    %c0_67 = arith.constant 0 : index
    %65 = vector.load %arg5[%c13, %c0_66, %c0_67] : memref<16x32x16xbf16, #tpu.memory_space<vmem>>, vector<1x32x16xbf16>
    %66 = vector.shape_cast %65 : vector<1x32x16xbf16> to vector<32x16xbf16>
    %cst_68 = arith.constant dense<0.000000e+00> : vector<32x128xf32>
    %67 = tpu.matmul %66, %64, %cst_68 {dimension_numbers = #tpu.dot_dimension_numbers<[1], [0], [0], [1], [0, 0, 1, 1], [], []>} : vector<32x16xbf16>, vector<16x128xbf16>, vector<32x128xf32> -> vector<32x128xf32>
    %68 = arith.addf %63, %67 : vector<32x128xf32>
    %c0_69 = arith.constant 0 : index
    %c4_70 = arith.constant 4 : index
    %69 = vector.load %arg3[%c0_69, %c4_70] : memref<16x256xbf16, #tpu.memory_space<vmem>>, vector<16x128xbf16>
    %c14 = arith.constant 14 : index
    %c0_71 = arith.constant 0 : index
    %c0_72 = arith.constant 0 : index
    %70 = vector.load %arg5[%c14, %c0_71, %c0_72] : memref<16x32x16xbf16, #tpu.memory_space<vmem>>, vector<1x32x16xbf16>
    %71 = vector.shape_cast %70 : vector<1x32x16xbf16> to vector<32x16xbf16>
    %cst_73 = arith.constant dense<0.000000e+00> : vector<32x128xf32>
    %72 = tpu.matmul %71, %69, %cst_73 {dimension_numbers = #tpu.dot_dimension_numbers<[1], [0], [0], [1], [0, 0, 1, 1], [], []>} : vector<32x16xbf16>, vector<16x128xbf16>, vector<32x128xf32> -> vector<32x128xf32>
    %73 = arith.addf %68, %72 : vector<32x128xf32>
    %c0_74 = arith.constant 0 : index
    %c4_75 = arith.constant 4 : index
    %74 = vector.load %arg4[%c0_74, %c4_75] : memref<16x256xbf16, #tpu.memory_space<vmem>>, vector<16x128xbf16>
    %c15 = arith.constant 15 : index
    %c0_76 = arith.constant 0 : index
    %c0_77 = arith.constant 0 : index
    %75 = vector.load %arg5[%c15, %c0_76, %c0_77] : memref<16x32x16xbf16, #tpu.memory_space<vmem>>, vector<1x32x16xbf16>
    %76 = vector.shape_cast %75 : vector<1x32x16xbf16> to vector<32x16xbf16>
    %cst_78 = arith.constant dense<0.000000e+00> : vector<32x128xf32>
    %77 = tpu.matmul %76, %74, %cst_78 {dimension_numbers = #tpu.dot_dimension_numbers<[1], [0], [0], [1], [0, 0, 1, 1], [], []>} : vector<32x16xbf16>, vector<16x128xbf16>, vector<32x128xf32> -> vector<32x128xf32>
    %78 = arith.addf %73, %77 : vector<32x128xf32>
    %79 = arith.truncf %78 : vector<32x128xf32> to vector<32x128xbf16>
    %c0_79 = arith.constant 0 : index
    %c0_80 = arith.constant 0 : index
    %80 = vector.load %arg7[%c0_79, %c0_80] : memref<32x128xbf16, #tpu.memory_space<vmem>>, vector<32x128xbf16>
    tpu.vector_store %arg7[%c0_79, %c0_80], %79 {strides = array<i32>} : memref<32x128xbf16, #tpu.memory_space<vmem>>, vector<32x128xbf16>,
    %c0_81 = arith.constant 0 : index
    %c0_82 = arith.constant 0 : index
    %81 = vector.load %arg6[%c0_81, %c0_82] : memref<1x128xf32, #tpu.memory_space<vmem>>, vector<1x128xf32>
    %82 = vector.broadcast %81 : vector<1x128xf32> to vector<32x128xf32>
    %83 = arith.mulf %78, %82 : vector<32x128xf32>
    %cst_83 = arith.constant dense<0.000000e+00> : vector<32xf32>
    %84 = vector.multi_reduction <add>, %83, %cst_83 [1] : vector<32x128xf32> to vector<32xf32>
    %85 = vector.shape_cast %84 : vector<32xf32> to vector<32x1xf32>
    %c0_84 = arith.constant 0 : index
    %c0_85 = arith.constant 0 : index
    %c0_86 = arith.constant 0 : index
    %86 = vector.load %arg8[%c0_84, %c0_85, %c0_86] : memref<1x32x1xf32, #tpu.memory_space<vmem>>, vector<1x32x1xf32>
    %87 = vector.shape_cast %86 : vector<1x32x1xf32> to vector<32x1xf32>
    %88 = vector.shape_cast %85 : vector<32x1xf32> to vector<1x32x1xf32>
    tpu.vector_store %arg8[%c0_84, %c0_85, %c0_86], %88 {strides = array<i32>} : memref<1x32x1xf32, #tpu.memory_space<vmem>>, vector<1x32x1xf32>,
    %89 = arith.mulf %83, %78 : vector<32x128xf32>
    %cst_87 = arith.constant dense<0.000000e+00> : vector<32xf32>
    %90 = vector.multi_reduction <add>, %89, %cst_87 [1] : vector<32x128xf32> to vector<32xf32>
    %91 = vector.shape_cast %90 : vector<32xf32> to vector<32x1xf32>
    %c0_88 = arith.constant 0 : index
    %c0_89 = arith.constant 0 : index
    %c0_90 = arith.constant 0 : index
    %92 = vector.load %arg9[%c0_88, %c0_89, %c0_90] : memref<1x32x1xf32, #tpu.memory_space<vmem>>, vector<1x32x1xf32>
    %93 = vector.shape_cast %92 : vector<1x32x1xf32> to vector<32x1xf32>
    %94 = vector.shape_cast %91 : vector<32x1xf32> to vector<1x32x1xf32>
    tpu.vector_store %arg9[%c0_88, %c0_89, %c0_90], %94 {strides = array<i32>} : memref<1x32x1xf32, #tpu.memory_space<vmem>>, vector<1x32x1xf32>,
    return
  }
  func.func @transform_0(%arg0: i32) -> (i32, i32) {
    %c0_i32 = arith.constant 0 : i32
    %c0_i32_0 = arith.constant 0 : i32
    %c0_i32_1 = arith.constant 0 : i32
    return %c0_i32, %c0_i32_0 : i32, i32
  }
  func.func @transform_1(%arg0: i32) -> (i32, i32) {
    %c0_i32 = arith.constant 0 : i32
    %c0_i32_0 = arith.constant 0 : i32
    %c0_i32_1 = arith.constant 0 : i32
    return %c0_i32, %c0_i32_0 : i32, i32
  }
  func.func @transform_2(%arg0: i32) -> (i32, i32) {
    %c0_i32 = arith.constant 0 : i32
    %c0_i32_0 = arith.constant 0 : i32
    %c0_i32_1 = arith.constant 0 : i32
    return %c0_i32, %c0_i32_0 : i32, i32
  }
  func.func @transform_3(%arg0: i32) -> (i32, i32) {
    %c0_i32 = arith.constant 0 : i32
    %c0_i32_0 = arith.constant 0 : i32
    %c0_i32_1 = arith.constant 0 : i32
    return %c0_i32, %c0_i32_0 : i32, i32
  }
  func.func @transform_4(%arg0: i32) -> (i32, i32, i32) {
    %c0_i32 = arith.constant 0 : i32
    %c0_i32_0 = arith.constant 0 : i32
    %c0_i32_1 = arith.constant 0 : i32
    %c0_i32_2 = arith.constant 0 : i32
    return %c0_i32, %c0_i32_0, %c0_i32_1 : i32, i32, i32
  }
  func.func @transform_5(%arg0: i32) -> (i32, i32) {
    %c0_i32 = arith.constant 0 : i32
    %c0_i32_0 = arith.constant 0 : i32
    return %c0_i32, %arg0 : i32, i32
  }
  func.func @transform_6(%arg0: i32) -> (i32, i32) {
    %c0_i32 = arith.constant 0 : i32
    %c0_i32_0 = arith.constant 0 : i32
    return %c0_i32, %arg0 : i32, i32
  }
  func.func @transform_7(%arg0: i32) -> (i32, i32, i32) {
    %c0_i32 = arith.constant 0 : i32
    %c0_i32_0 = arith.constant 0 : i32
    %c0_i32_1 = arith.constant 0 : i32
    return %arg0, %c0_i32, %c0_i32_0 : i32, i32, i32
  }
  func.func @transform_8(%arg0: i32) -> (i32, i32, i32) {
    %c0_i32 = arith.constant 0 : i32
    %c0_i32_0 = arith.constant 0 : i32
    %c0_i32_1 = arith.constant 0 : i32
    return %arg0, %c0_i32, %c0_i32_0 : i32, i32, i32
  }
}

module attributes {stable_mosaic.version = 11 : i64} {
  func.func @_conv_taps_kernel(%arg0: i32, %arg1: memref<32x256xbf16, #tpu.memory_space<vmem>>, %arg2: memref<16x16x32xbf16, #tpu.memory_space<vmem>>, %arg3: memref<16x1xf32, #tpu.memory_space<vmem>>, %arg4: memref<16x128xf32, #tpu.memory_space<vmem>>) attributes {dimension_semantics = [#tpu.dimension_semantics<parallel>], iteration_bounds = array<i64: 1>, scalar_prefetch = 0 : i64, scratch_operands = 0 : i64, tpu.core_type = #tpu.core_type<tc>, window_params = [{pipeline_mode = #tpu.pipeline_mode<synchronous>, transform_indices = @transform_0, window_bounds = array<i64: 32, 256>}, {pipeline_mode = #tpu.pipeline_mode<synchronous>, transform_indices = @transform_1, window_bounds = array<i64: 16, 16, 32>}, {pipeline_mode = #tpu.pipeline_mode<synchronous>, transform_indices = @transform_2, window_bounds = array<i64: 16, 1>}, {transform_indices = @transform_3, window_bounds = array<i64: 16, 128>}]} {
    %c0 = arith.constant 0 : index
    %c0_0 = arith.constant 0 : index
    %0 = vector.load %arg1[%c0, %c0_0] : memref<32x256xbf16, #tpu.memory_space<vmem>>, vector<32x128xbf16>
    %c0_1 = arith.constant 0 : index
    %c0_2 = arith.constant 0 : index
    %c0_3 = arith.constant 0 : index
    %1 = vector.load %arg2[%c0_1, %c0_2, %c0_3] : memref<16x16x32xbf16, #tpu.memory_space<vmem>>, vector<1x16x32xbf16>
    %2 = vector.shape_cast %1 : vector<1x16x32xbf16> to vector<16x32xbf16>
    %cst = arith.constant dense<0.000000e+00> : vector<16x128xf32>
    %3 = tpu.matmul %2, %0, %cst {dimension_numbers = #tpu.dot_dimension_numbers<[1], [0], [0], [1], [0, 0, 1, 1], [], []>} : vector<16x32xbf16>, vector<32x128xbf16>, vector<16x128xf32> -> vector<16x128xf32>
    %c0_4 = arith.constant 0 : index
    %c1 = arith.constant 1 : index
    %4 = vector.load %arg1[%c0_4, %c1] : memref<32x256xbf16, #tpu.memory_space<vmem>>, vector<32x128xbf16>
    %c1_5 = arith.constant 1 : index
    %c0_6 = arith.constant 0 : index
    %c0_7 = arith.constant 0 : index
    %5 = vector.load %arg2[%c1_5, %c0_6, %c0_7] : memref<16x16x32xbf16, #tpu.memory_space<vmem>>, vector<1x16x32xbf16>
    %6 = vector.shape_cast %5 : vector<1x16x32xbf16> to vector<16x32xbf16>
    %cst_8 = arith.constant dense<0.000000e+00> : vector<16x128xf32>
    %7 = tpu.matmul %6, %4, %cst_8 {dimension_numbers = #tpu.dot_dimension_numbers<[1], [0], [0], [1], [0, 0, 1, 1], [], []>} : vector<16x32xbf16>, vector<32x128xbf16>, vector<16x128xf32> -> vector<16x128xf32>
    %8 = arith.addf %3, %7 : vector<16x128xf32>
    %c0_9 = arith.constant 0 : index
    %c2 = arith.constant 2 : index
    %9 = vector.load %arg1[%c0_9, %c2] : memref<32x256xbf16, #tpu.memory_space<vmem>>, vector<32x128xbf16>
    %c2_10 = arith.constant 2 : index
    %c0_11 = arith.constant 0 : index
    %c0_12 = arith.constant 0 : index
    %10 = vector.load %arg2[%c2_10, %c0_11, %c0_12] : memref<16x16x32xbf16, #tpu.memory_space<vmem>>, vector<1x16x32xbf16>
    %11 = vector.shape_cast %10 : vector<1x16x32xbf16> to vector<16x32xbf16>
    %cst_13 = arith.constant dense<0.000000e+00> : vector<16x128xf32>
    %12 = tpu.matmul %11, %9, %cst_13 {dimension_numbers = #tpu.dot_dimension_numbers<[1], [0], [0], [1], [0, 0, 1, 1], [], []>} : vector<16x32xbf16>, vector<32x128xbf16>, vector<16x128xf32> -> vector<16x128xf32>
    %13 = arith.addf %8, %12 : vector<16x128xf32>
    %c0_14 = arith.constant 0 : index
    %c3 = arith.constant 3 : index
    %14 = vector.load %arg1[%c0_14, %c3] : memref<32x256xbf16, #tpu.memory_space<vmem>>, vector<32x128xbf16>
    %c3_15 = arith.constant 3 : index
    %c0_16 = arith.constant 0 : index
    %c0_17 = arith.constant 0 : index
    %15 = vector.load %arg2[%c3_15, %c0_16, %c0_17] : memref<16x16x32xbf16, #tpu.memory_space<vmem>>, vector<1x16x32xbf16>
    %16 = vector.shape_cast %15 : vector<1x16x32xbf16> to vector<16x32xbf16>
    %cst_18 = arith.constant dense<0.000000e+00> : vector<16x128xf32>
    %17 = tpu.matmul %16, %14, %cst_18 {dimension_numbers = #tpu.dot_dimension_numbers<[1], [0], [0], [1], [0, 0, 1, 1], [], []>} : vector<16x32xbf16>, vector<32x128xbf16>, vector<16x128xf32> -> vector<16x128xf32>
    %18 = arith.addf %13, %17 : vector<16x128xf32>
    %c0_19 = arith.constant 0 : index
    %c4 = arith.constant 4 : index
    %19 = vector.load %arg1[%c0_19, %c4] : memref<32x256xbf16, #tpu.memory_space<vmem>>, vector<32x128xbf16>
    %c4_20 = arith.constant 4 : index
    %c0_21 = arith.constant 0 : index
    %c0_22 = arith.constant 0 : index
    %20 = vector.load %arg2[%c4_20, %c0_21, %c0_22] : memref<16x16x32xbf16, #tpu.memory_space<vmem>>, vector<1x16x32xbf16>
    %21 = vector.shape_cast %20 : vector<1x16x32xbf16> to vector<16x32xbf16>
    %cst_23 = arith.constant dense<0.000000e+00> : vector<16x128xf32>
    %22 = tpu.matmul %21, %19, %cst_23 {dimension_numbers = #tpu.dot_dimension_numbers<[1], [0], [0], [1], [0, 0, 1, 1], [], []>} : vector<16x32xbf16>, vector<32x128xbf16>, vector<16x128xf32> -> vector<16x128xf32>
    %23 = arith.addf %18, %22 : vector<16x128xf32>
    %c0_24 = arith.constant 0 : index
    %c5 = arith.constant 5 : index
    %24 = vector.load %arg1[%c0_24, %c5] : memref<32x256xbf16, #tpu.memory_space<vmem>>, vector<32x128xbf16>
    %c5_25 = arith.constant 5 : index
    %c0_26 = arith.constant 0 : index
    %c0_27 = arith.constant 0 : index
    %25 = vector.load %arg2[%c5_25, %c0_26, %c0_27] : memref<16x16x32xbf16, #tpu.memory_space<vmem>>, vector<1x16x32xbf16>
    %26 = vector.shape_cast %25 : vector<1x16x32xbf16> to vector<16x32xbf16>
    %cst_28 = arith.constant dense<0.000000e+00> : vector<16x128xf32>
    %27 = tpu.matmul %26, %24, %cst_28 {dimension_numbers = #tpu.dot_dimension_numbers<[1], [0], [0], [1], [0, 0, 1, 1], [], []>} : vector<16x32xbf16>, vector<32x128xbf16>, vector<16x128xf32> -> vector<16x128xf32>
    %28 = arith.addf %23, %27 : vector<16x128xf32>
    %c0_29 = arith.constant 0 : index
    %c6 = arith.constant 6 : index
    %29 = vector.load %arg1[%c0_29, %c6] : memref<32x256xbf16, #tpu.memory_space<vmem>>, vector<32x128xbf16>
    %c6_30 = arith.constant 6 : index
    %c0_31 = arith.constant 0 : index
    %c0_32 = arith.constant 0 : index
    %30 = vector.load %arg2[%c6_30, %c0_31, %c0_32] : memref<16x16x32xbf16, #tpu.memory_space<vmem>>, vector<1x16x32xbf16>
    %31 = vector.shape_cast %30 : vector<1x16x32xbf16> to vector<16x32xbf16>
    %cst_33 = arith.constant dense<0.000000e+00> : vector<16x128xf32>
    %32 = tpu.matmul %31, %29, %cst_33 {dimension_numbers = #tpu.dot_dimension_numbers<[1], [0], [0], [1], [0, 0, 1, 1], [], []>} : vector<16x32xbf16>, vector<32x128xbf16>, vector<16x128xf32> -> vector<16x128xf32>
    %33 = arith.addf %28, %32 : vector<16x128xf32>
    %c0_34 = arith.constant 0 : index
    %c7 = arith.constant 7 : index
    %34 = vector.load %arg1[%c0_34, %c7] : memref<32x256xbf16, #tpu.memory_space<vmem>>, vector<32x128xbf16>
    %c7_35 = arith.constant 7 : index
    %c0_36 = arith.constant 0 : index
    %c0_37 = arith.constant 0 : index
    %35 = vector.load %arg2[%c7_35, %c0_36, %c0_37] : memref<16x16x32xbf16, #tpu.memory_space<vmem>>, vector<1x16x32xbf16>
    %36 = vector.shape_cast %35 : vector<1x16x32xbf16> to vector<16x32xbf16>
    %cst_38 = arith.constant dense<0.000000e+00> : vector<16x128xf32>
    %37 = tpu.matmul %36, %34, %cst_38 {dimension_numbers = #tpu.dot_dimension_numbers<[1], [0], [0], [1], [0, 0, 1, 1], [], []>} : vector<16x32xbf16>, vector<32x128xbf16>, vector<16x128xf32> -> vector<16x128xf32>
    %38 = arith.addf %33, %37 : vector<16x128xf32>
    %c0_39 = arith.constant 0 : index
    %c8 = arith.constant 8 : index
    %39 = vector.load %arg1[%c0_39, %c8] : memref<32x256xbf16, #tpu.memory_space<vmem>>, vector<32x128xbf16>
    %c8_40 = arith.constant 8 : index
    %c0_41 = arith.constant 0 : index
    %c0_42 = arith.constant 0 : index
    %40 = vector.load %arg2[%c8_40, %c0_41, %c0_42] : memref<16x16x32xbf16, #tpu.memory_space<vmem>>, vector<1x16x32xbf16>
    %41 = vector.shape_cast %40 : vector<1x16x32xbf16> to vector<16x32xbf16>
    %cst_43 = arith.constant dense<0.000000e+00> : vector<16x128xf32>
    %42 = tpu.matmul %41, %39, %cst_43 {dimension_numbers = #tpu.dot_dimension_numbers<[1], [0], [0], [1], [0, 0, 1, 1], [], []>} : vector<16x32xbf16>, vector<32x128xbf16>, vector<16x128xf32> -> vector<16x128xf32>
    %43 = arith.addf %38, %42 : vector<16x128xf32>
    %c0_44 = arith.constant 0 : index
    %c9 = arith.constant 9 : index
    %44 = vector.load %arg1[%c0_44, %c9] : memref<32x256xbf16, #tpu.memory_space<vmem>>, vector<32x128xbf16>
    %c9_45 = arith.constant 9 : index
    %c0_46 = arith.constant 0 : index
    %c0_47 = arith.constant 0 : index
    %45 = vector.load %arg2[%c9_45, %c0_46, %c0_47] : memref<16x16x32xbf16, #tpu.memory_space<vmem>>, vector<1x16x32xbf16>
    %46 = vector.shape_cast %45 : vector<1x16x32xbf16> to vector<16x32xbf16>
    %cst_48 = arith.constant dense<0.000000e+00> : vector<16x128xf32>
    %47 = tpu.matmul %46, %44, %cst_48 {dimension_numbers = #tpu.dot_dimension_numbers<[1], [0], [0], [1], [0, 0, 1, 1], [], []>} : vector<16x32xbf16>, vector<32x128xbf16>, vector<16x128xf32> -> vector<16x128xf32>
    %48 = arith.addf %43, %47 : vector<16x128xf32>
    %c0_49 = arith.constant 0 : index
    %c10 = arith.constant 10 : index
    %49 = vector.load %arg1[%c0_49, %c10] : memref<32x256xbf16, #tpu.memory_space<vmem>>, vector<32x128xbf16>
    %c10_50 = arith.constant 10 : index
    %c0_51 = arith.constant 0 : index
    %c0_52 = arith.constant 0 : index
    %50 = vector.load %arg2[%c10_50, %c0_51, %c0_52] : memref<16x16x32xbf16, #tpu.memory_space<vmem>>, vector<1x16x32xbf16>
    %51 = vector.shape_cast %50 : vector<1x16x32xbf16> to vector<16x32xbf16>
    %cst_53 = arith.constant dense<0.000000e+00> : vector<16x128xf32>
    %52 = tpu.matmul %51, %49, %cst_53 {dimension_numbers = #tpu.dot_dimension_numbers<[1], [0], [0], [1], [0, 0, 1, 1], [], []>} : vector<16x32xbf16>, vector<32x128xbf16>, vector<16x128xf32> -> vector<16x128xf32>
    %53 = arith.addf %48, %52 : vector<16x128xf32>
    %c0_54 = arith.constant 0 : index
    %c11 = arith.constant 11 : index
    %54 = vector.load %arg1[%c0_54, %c11] : memref<32x256xbf16, #tpu.memory_space<vmem>>, vector<32x128xbf16>
    %c11_55 = arith.constant 11 : index
    %c0_56 = arith.constant 0 : index
    %c0_57 = arith.constant 0 : index
    %55 = vector.load %arg2[%c11_55, %c0_56, %c0_57] : memref<16x16x32xbf16, #tpu.memory_space<vmem>>, vector<1x16x32xbf16>
    %56 = vector.shape_cast %55 : vector<1x16x32xbf16> to vector<16x32xbf16>
    %cst_58 = arith.constant dense<0.000000e+00> : vector<16x128xf32>
    %57 = tpu.matmul %56, %54, %cst_58 {dimension_numbers = #tpu.dot_dimension_numbers<[1], [0], [0], [1], [0, 0, 1, 1], [], []>} : vector<16x32xbf16>, vector<32x128xbf16>, vector<16x128xf32> -> vector<16x128xf32>
    %58 = arith.addf %53, %57 : vector<16x128xf32>
    %c0_59 = arith.constant 0 : index
    %c12 = arith.constant 12 : index
    %59 = vector.load %arg1[%c0_59, %c12] : memref<32x256xbf16, #tpu.memory_space<vmem>>, vector<32x128xbf16>
    %c12_60 = arith.constant 12 : index
    %c0_61 = arith.constant 0 : index
    %c0_62 = arith.constant 0 : index
    %60 = vector.load %arg2[%c12_60, %c0_61, %c0_62] : memref<16x16x32xbf16, #tpu.memory_space<vmem>>, vector<1x16x32xbf16>
    %61 = vector.shape_cast %60 : vector<1x16x32xbf16> to vector<16x32xbf16>
    %cst_63 = arith.constant dense<0.000000e+00> : vector<16x128xf32>
    %62 = tpu.matmul %61, %59, %cst_63 {dimension_numbers = #tpu.dot_dimension_numbers<[1], [0], [0], [1], [0, 0, 1, 1], [], []>} : vector<16x32xbf16>, vector<32x128xbf16>, vector<16x128xf32> -> vector<16x128xf32>
    %63 = arith.addf %58, %62 : vector<16x128xf32>
    %c0_64 = arith.constant 0 : index
    %c13 = arith.constant 13 : index
    %64 = vector.load %arg1[%c0_64, %c13] : memref<32x256xbf16, #tpu.memory_space<vmem>>, vector<32x128xbf16>
    %c13_65 = arith.constant 13 : index
    %c0_66 = arith.constant 0 : index
    %c0_67 = arith.constant 0 : index
    %65 = vector.load %arg2[%c13_65, %c0_66, %c0_67] : memref<16x16x32xbf16, #tpu.memory_space<vmem>>, vector<1x16x32xbf16>
    %66 = vector.shape_cast %65 : vector<1x16x32xbf16> to vector<16x32xbf16>
    %cst_68 = arith.constant dense<0.000000e+00> : vector<16x128xf32>
    %67 = tpu.matmul %66, %64, %cst_68 {dimension_numbers = #tpu.dot_dimension_numbers<[1], [0], [0], [1], [0, 0, 1, 1], [], []>} : vector<16x32xbf16>, vector<32x128xbf16>, vector<16x128xf32> -> vector<16x128xf32>
    %68 = arith.addf %63, %67 : vector<16x128xf32>
    %c0_69 = arith.constant 0 : index
    %c14 = arith.constant 14 : index
    %69 = vector.load %arg1[%c0_69, %c14] : memref<32x256xbf16, #tpu.memory_space<vmem>>, vector<32x128xbf16>
    %c14_70 = arith.constant 14 : index
    %c0_71 = arith.constant 0 : index
    %c0_72 = arith.constant 0 : index
    %70 = vector.load %arg2[%c14_70, %c0_71, %c0_72] : memref<16x16x32xbf16, #tpu.memory_space<vmem>>, vector<1x16x32xbf16>
    %71 = vector.shape_cast %70 : vector<1x16x32xbf16> to vector<16x32xbf16>
    %cst_73 = arith.constant dense<0.000000e+00> : vector<16x128xf32>
    %72 = tpu.matmul %71, %69, %cst_73 {dimension_numbers = #tpu.dot_dimension_numbers<[1], [0], [0], [1], [0, 0, 1, 1], [], []>} : vector<16x32xbf16>, vector<32x128xbf16>, vector<16x128xf32> -> vector<16x128xf32>
    %73 = arith.addf %68, %72 : vector<16x128xf32>
    %c0_74 = arith.constant 0 : index
    %c15 = arith.constant 15 : index
    %74 = vector.load %arg1[%c0_74, %c15] : memref<32x256xbf16, #tpu.memory_space<vmem>>, vector<32x128xbf16>
    %c15_75 = arith.constant 15 : index
    %c0_76 = arith.constant 0 : index
    %c0_77 = arith.constant 0 : index
    %75 = vector.load %arg2[%c15_75, %c0_76, %c0_77] : memref<16x16x32xbf16, #tpu.memory_space<vmem>>, vector<1x16x32xbf16>
    %76 = vector.shape_cast %75 : vector<1x16x32xbf16> to vector<16x32xbf16>
    %cst_78 = arith.constant dense<0.000000e+00> : vector<16x128xf32>
    %77 = tpu.matmul %76, %74, %cst_78 {dimension_numbers = #tpu.dot_dimension_numbers<[1], [0], [0], [1], [0, 0, 1, 1], [], []>} : vector<16x32xbf16>, vector<32x128xbf16>, vector<16x128xf32> -> vector<16x128xf32>
    %78 = arith.addf %73, %77 : vector<16x128xf32>
    %c0_79 = arith.constant 0 : index
    %c0_80 = arith.constant 0 : index
    %79 = vector.load %arg3[%c0_79, %c0_80] : memref<16x1xf32, #tpu.memory_space<vmem>>, vector<16x1xf32>
    %80 = vector.broadcast %79 : vector<16x1xf32> to vector<16x128xf32>
    %81 = arith.addf %78, %80 : vector<16x128xf32>
    %c0_81 = arith.constant 0 : index
    %c0_82 = arith.constant 0 : index
    %82 = vector.load %arg4[%c0_81, %c0_82] : memref<16x128xf32, #tpu.memory_space<vmem>>, vector<16x128xf32>
    tpu.vector_store %arg4[%c0_81, %c0_82], %81 {strides = array<i32>} : memref<16x128xf32, #tpu.memory_space<vmem>>, vector<16x128xf32>,
    return
  }
  func.func @transform_0(%arg0: i32) -> (i32, i32) {
    %c0_i32 = arith.constant 0 : i32
    %c0_i32_0 = arith.constant 0 : i32
    %c0_i32_1 = arith.constant 0 : i32
    return %c0_i32, %c0_i32_0 : i32, i32
  }
  func.func @transform_1(%arg0: i32) -> (i32, i32, i32) {
    %c0_i32 = arith.constant 0 : i32
    %c0_i32_0 = arith.constant 0 : i32
    %c0_i32_1 = arith.constant 0 : i32
    %c0_i32_2 = arith.constant 0 : i32
    return %c0_i32, %c0_i32_0, %c0_i32_1 : i32, i32, i32
  }
  func.func @transform_2(%arg0: i32) -> (i32, i32) {
    %c0_i32 = arith.constant 0 : i32
    %c0_i32_0 = arith.constant 0 : i32
    %c0_i32_1 = arith.constant 0 : i32
    return %c0_i32, %c0_i32_0 : i32, i32
  }
  func.func @transform_3(%arg0: i32) -> (i32, i32) {
    %c0_i32 = arith.constant 0 : i32
    %c0_i32_0 = arith.constant 0 : i32
    return %c0_i32, %arg0 : i32, i32
  }
}

</mosaic_0001>

<llo_original>
// kernel: tile.9
$region0: #{tile.9}
  %s0 = inlined_call_operand.vmem [shape: f32[5,5], index: 0, kind: input, shape index: {}]
  %s1 = inlined_call_operand.vmem [shape: f32[25], index: 1, kind: output, shape index: {}]
  $region1: #{tile.9} parent=0
    #allocation0 [shape = 'u8[4096]{0}', space=vmem, size = 0x1000, scoped, tag = 'scoped mem for output reshape']
    %v2 = vld [vmem:[%s0] sm:$0x1]
    %vm3 = vcmask 39936
    %4 = vst.msk [vmem:[#allocation0] sm:$0x1] %vm3, %v2
    %s5 = scalar_lea.vmem %s0, 4
    %v6 = vld [vmem:[%s5] sm:$0x1]
    %7 = vrot.lane.b32.xlu0 %v6, 20
    %v8 = vpop.permute.xlu0 %7
    %vm9 = vcmask 203936
    %10 = vst.msk [vmem:[#allocation0] sm:$0x1] %vm9, %v8
    %s11 = scalar_lea.vmem %s0, 3
    %v12 = vld [vmem:[%s11] sm:$0x1]
    %13 = vrot.lane.b32.xlu0 %v12, 15
    %v14 = vpop.permute.xlu0 %13
    %vm15 = vcmask 162936
    %16 = vst.msk [vmem:[#allocation0] sm:$0x1] %vm15, %v14
    %s17 = scalar_lea.vmem %s0, 2
    %v18 = vld [vmem:[%s17] sm:$0x1]
    %19 = vrot.lane.b32.xlu0 %v18, 10
    %v20 = vpop.permute.xlu0 %19
    %vm21 = vcmask 121936
    %22 = vst.msk [vmem:[#allocation0] sm:$0x1] %vm21, %v20
    %s23 = scalar_lea.vmem %s0, 1
    %v24 = vld [vmem:[%s23] sm:$0x1]
    %25 = vrot.lane.b32.xlu0 %v24, 5
    %v26 = vpop.permute.xlu0 %25
    %vm27 = vcmask 80936
    %28 = vst.msk [vmem:[#allocation0] sm:$0x1] %vm27, %v26
    %s30 = sshll.u32 1, 1
    %s31 = ssub.s32 %s30, 1
    %v33 = vld [vmem:[#allocation0] sm:%s31]
    %s34 = sshll.u32 1, 1
    %s35 = ssub.s32 %s34, 1
    %36 = vst [vmem:[%s1] sm:%s35] %v33

// kernel: tile.10
$region0: #{tile.10}
  #allocation0 [shape = 's32[1]{0}', space=sflag, size = 0x4, scoped, tag = 'scoped memory for tile.10']
  %s0 = inlined_call_operand.vmem [shape: f32[25], index: 0, kind: input, shape index: {}]
  %s1 = inlined_call_operand.vmem [shape: f32[2,25], index: 1, kind: output, shape index: {}]
  // Predicated region
  $region2: #{tile.10} parent=0 // pred_check
    _
  $region3: #{tile.10} parent=0 // pred_check_branch
    %3 = sbr.rel (0) target = $region5
  $region4: #{tile.10} parent=0 // pred_region
    _
  $region5: #{tile.10} parent=0 // pred_fallthru
    _
  %v4 = vld [vmem:[%s0] ss:$0 sm:$0xff]
  %5 = vst [vmem:[%s1] sm:$0x3] %v4

// kernel: tile.11
$region0: #{tile.11}
  %s0 = inlined_call_operand.vmem [shape: f32[2,25], index: 0, kind: input, shape index: {}]
  %s1 = inlined_call_operand.vmem [shape: f32[50], index: 1, kind: output, shape index: {}]
  $region1: #{tile.11} parent=0
    #allocation0 [shape = 'u8[4096]{0}', space=vmem, size = 0x1000, scoped, tag = 'scoped mem for output reshape']
    #allocation1 [shape = 'u8[4096]{0}', space=vmem, size = 0x1000, scoped, tag = 'scoped mem for input reshape']
    %s3 = sshll.u32 1, 2
    %s4 = ssub.s32 %s3, 1
    %v5 = vld [vmem:[%s0] sm:%s4]
    %6 = vst [vmem:[#allocation1] sm:%s4] %v5
    %v7 = vld [vmem:[#allocation1] sm:$0x1]
    %vm8 = vcmask 203776
    %9 = vst.msk [vmem:[#allocation0] sm:$0x1] %vm8, %v7
    %s10 = scalar_lea.vmem [#allocation1], 1
    %v11 = vld [vmem:[%s10] sm:$0x1]
    %12 = vrot.lane.b32.xlu0 %v11, 25
    %v13 = vpop.permute.xlu0 %12
    %vm14 = vcmask 408776
    %15 = vst.msk [vmem:[#allocation0] sm:$0x1] %vm14, %v13
    %s17 = sshll.u32 1, 1
    %s18 = ssub.s32 %s17, 1
    %v20 = vld [vmem:[#allocation0] sm:%s18]
    %s21 = sshll.u32 1, 1
    %s22 = ssub.s32 %s21, 1
    %23 = vst [vmem:[%s1] sm:%s22] %v20

// kernel: patchgan_forward.4
$region0: #{patchgan_forward.4}
  #allocation0 [shape = 'u32[]', space=smem, size = 0x4, offset = 0x4, fixed_abs, tag = 'smem constant byte address 0x4 - core index']
  #allocation1 [shape = 'u32[144,128]{1,0:T(1,128)}', space=vmem, size = 0x12000, scoped, tag = 'internal scratch']
  %s0 = inlined_call_operand.vmem [shape: bf16[8,384], index: 0, kind: input, shape index: {}]
  %s1 = inlined_call_operand.vmem [shape: bf16[8,384], index: 1, kind: input, shape index: {}]
  %s2 = inlined_call_operand.vmem [shape: bf16[8,384], index: 2, kind: input, shape index: {}]
  %s3 = inlined_call_operand.vmem [shape: bf16[8,384], index: 3, kind: input, shape index: {}]
  %s4 = inlined_call_operand.vmem [shape: bf16[16,16,8], index: 4, kind: input, shape index: {}]
  %s5 = inlined_call_operand.vmem [shape: f32[16,1], index: 5, kind: input, shape index: {}]
  %s6 = inlined_call_operand.vmem [shape: bf16[16,256], index: 6, kind: output, shape index: {}]
  %s7 = sld [smem:[#allocation0]]
  $region34: #{patchgan_forward.4} parent=0
    _
  %s9 = ssub.s32 1, %s7
  %s10 = scalar_select 0, %s9, %s7
  // Predicated region
  $region2: #{patchgan_forward.4} parent=0 // pred_check
    _
  $region3: #{patchgan_forward.4} parent=0 // pred_check_branch
    %12 = sbr.rel (0) target = $region5
  $region4: #{patchgan_forward.4} parent=0 // pred_region
    _
  $region5: #{patchgan_forward.4} parent=0 // pred_fallthru
    _
  // Predicated region
  $region6: #{patchgan_forward.4} parent=0 // pred_check
    _
  $region7: #{patchgan_forward.4} parent=0 // pred_check_branch
    %14 = sbr.rel (0) target = $region9
  $region8: #{patchgan_forward.4} parent=0 // pred_region
    _
  $region9: #{patchgan_forward.4} parent=0 // pred_fallthru
    _
  // Predicated region
  $region10: #{patchgan_forward.4} parent=0 // pred_check
    _
  $region11: #{patchgan_forward.4} parent=0 // pred_check_branch
    %16 = sbr.rel (0) target = $region13
  $region12: #{patchgan_forward.4} parent=0 // pred_region
    _
  $region13: #{patchgan_forward.4} parent=0 // pred_fallthru
    _
  // Predicated region
  $region14: #{patchgan_forward.4} parent=0 // pred_check
    _
  $region15: #{patchgan_forward.4} parent=0 // pred_check_branch
    %18 = sbr.rel (0) target = $region17
  $region16: #{patchgan_forward.4} parent=0 // pred_region
    _
  $region17: #{patchgan_forward.4} parent=0 // pred_fallthru
    _
  // Predicated region
  $region18: #{patchgan_forward.4} parent=0 // pred_check
    _
  $region19: #{patchgan_forward.4} parent=0 // pred_check_branch
    %20 = sbr.rel (0) target = $region21
  $region20: #{patchgan_forward.4} parent=0 // pred_region
    _
  $region21: #{patchgan_forward.4} parent=0 // pred_fallthru
    _
  // Predicated region
  $region22: #{patchgan_forward.4} parent=0 // pred_check
    _
  $region23: #{patchgan_forward.4} parent=0 // pred_check_branch
    %22 = sbr.rel (0) target = $region25
  $region24: #{patchgan_forward.4} parent=0 // pred_region
    _
  $region25: #{patchgan_forward.4} parent=0 // pred_fallthru
    _
  %v24 = vld [vmem:[%s0] sm:$0xff]
  %v25 = vld [vmem:[%s4] sm:$0xf]
  %v26 = vld [vmem:[%s4 + $0x4] sm:$0xf]
  %v27 = vld [vmem:[%s1] sm:$0xff]
  %s28 = scalar_lea.vmem %s4, 8
  %v29 = vld [vmem:[%s28] sm:$0xf]
  %v30 = vld [vmem:[%s28 + $0x4] sm:$0xf]
  %v33 = vunpack.c.l.b16 %v29
  %v34 = vunpack.c.l.b16 %v30
  %v35 = vpack.c.b16 %v34, %v33
  %v37 = vunpack.c.l.b16 %v27
  %v38 = vunpack.c.h.b16 %v27
  %v39 = vpack.c.b16 %v37, %v37
  %v40 = vpack.c.b16 %v38, %v38
  %vm41 = vcmask 64512
  %v43 = vsel %vm41, %v35, 0
  %vm45 = vcmask 1043456
  %v47 = vsel %vm45, %v39, 0
  %v50 = vsel %vm45, %v40, 0
  %52 = vmatprep.subr.bf16.mxu0 0
  %53 = vmatpush1.bf16.msra.mxu0 0
  %54 = vmatprep.subr.bf16.mxu0 0
  %55 = vmatpush1.bf16.msra.mxu0 0
  %56 = vmatprep.subr.bf16.mxu0 0
  %57 = vmatpush1.bf16.msra.mxu0 0
  %58 = vmatprep.subr.bf16.mxu0 0
  %59 = vmatpush1.bf16.msra.mxu0 0
  %60 = vmatprep.subr.bf16.mxu0 0
  %61 = vmatpush1.bf16.msra.mxu0 0
  %62 = vmatprep.subr.bf16.mxu0 0
  %63 = vmatpush1.bf16.msra.mxu0 0
  %64 = vmatprep.subr.bf16.mxu0 0
  %65 = vmatpush1.bf16.msra.mxu0 0
  %66 = vmatprep.subr.bf16.mxu0 %v50
  %67 = vmatpush1.bf16.msra.mxu0 %v47
  %68 = vmatprep.subr.bf16.mxu0 0
  %69 = vmatpush2.bf16.msra.mxu0 0
  %70 = vmatprep.subr.bf16.mxu0 0
  %71 = vmatpush2.bf16.msra.mxu0 0
  %72 = vmatprep.subr.bf16.mxu0 0
  %73 = vmatpush2.bf16.msra.mxu0 0
  %74 = vmatprep.subr.bf16.mxu0 0
  %75 = vmatpush2.bf16.msra.mxu0 0
  %76 = vmatprep.subr.bf16.mxu0 0
  %77 = vmatpush2.bf16.msra.mxu0 0
  %78 = vmatprep.subr.bf16.mxu0 0
  %79 = vmatpush2.bf16.msra.mxu0 0
  %80 = vmatprep.subr.bf16.mxu0 0
  %81 = vmatpush2.bf16.msra.mxu0 0
  %82 = vmatprep.subr.bf16.mxu0 0
  %83 = vmatpush2.bf16.msra.mxu0 0
  %84 = vmatprep.mubr.bf16.mxu0 0
  %85 = vmatmul.mubr.bf16.gmra.mxu0 %v43
  %v86 = vpop.f32.mrf.mxu0
  %v87 = vadd.f32 0.0, %v86
  %v88 = vpop.f32.mrf.mxu0
  %v89 = vadd.f32 0.0, %v88
  %v90 = vpop.f32.mrf.mxu0
  %v91 = vadd.f32 0.0, %v90
  %v92 = vpop.f32.mrf.mxu0
  %v93 = vadd.f32 0.0, %v92
  %94 = vdwg.mxu0
  %v97 = vunpack.c.l.b16 %v25
  %v98 = vunpack.c.l.b16 %v26
  %v99 = vpack.c.b16 %v98, %v97
  %v101 = vunpack.c.l.b16 %v24
  %v102 = vunpack.c.h.b16 %v24
  %v103 = vpack.c.b16 %v101, %v101
  %v104 = vpack.c.b16 %v102, %v102
  %v106 = vsel %vm41, %v99, 0
  %v109 = vsel %vm45, %v103, 0
  %v112 = vsel %vm45, %v104, 0
  %114 = vmatprep.subr.bf16.mxu0 0
  %115 = vmatpush1.bf16.msra.mxu0 0
  %116 = vmatprep.subr.bf16.mxu0 0
  %117 = vmatpush1.bf16.msra.mxu0 0
  %118 = vmatprep.subr.bf16.mxu0 0
  %119 = vmatpush1.bf16.msra.mxu0 0
  %120 = vmatprep.subr.bf16.mxu0 0
  %121 = vmatpush1.bf16.msra.mxu0 0
  %122 = vmatprep.subr.bf16.mxu0 0
  %123 = vmatpush1.bf16.msra.mxu0 0
  %124 = vmatprep.subr.bf16.mxu0 0
  %125 = vmatpush1.bf16.msra.mxu0 0
  %126 = vmatprep.subr.bf16.mxu0 0
  %127 = vmatpush1.bf16.msra.mxu0 0
  %128 = vmatprep.subr.bf16.mxu0 %v112
  %129 = vmatpush1.bf16.msra.mxu0 %v109
  %130 = vmatprep.subr.bf16.mxu0 0
  %131 = vmatpush2.bf16.msra.mxu0 0
  %132 = vmatprep.subr.bf16.mxu0 0
  %133 = vmatpush2.bf16.msra.mxu0 0
  %134 = vmatprep.subr.bf16.mxu0 0
  %135 = vmatpush2.bf16.msra.mxu0 0
  %136 = vmatprep.subr.bf16.mxu0 0
  %137 = vmatpush2.bf16.msra.mxu0 0
  %138 = vmatprep.subr.bf16.mxu0 0
  %139 = vmatpush2.bf16.msra.mxu0 0
  %140 = vmatprep.subr.bf16.mxu0 0
  %141 = vmatpush2.bf16.msra.mxu0 0
  %142 = vmatprep.subr.bf16.mxu0 0
  %143 = vmatpush2.bf16.msra.mxu0 0
  %144 = vmatprep.subr.bf16.mxu0 0
  %145 = vmatpush2.bf16.msra.mxu0 0
  %146 = vmatprep.mubr.bf16.mxu0 0
  %147 = vmatmul.mubr.bf16.gmra.mxu0 %v106
  %v148 = vpop.f32.mrf.mxu0
  %v149 = vadd.f32 %v87, %v148
  %v150 = vpop.f32.mrf.mxu0
  %v151 = vadd.f32 %v89, %v150
  %v152 = vpop.f32.mrf.mxu0
  %v153 = vadd.f32 %v91, %v152
  %v154 = vpop.f32.mrf.mxu0
  %v155 = vadd.f32 %v93, %v154
  %156 = vdwg.mxu0
  %v157 = vld [vmem:[%s0] sm:$0xff]
  %v158 = vld [vmem:[%s0 + $0x8] sm:$0xf]
  %s159 = scalar_lea.vmem %s4, 16
  %v160 = vld [vmem:[%s159] sm:$0xf]
  %v161 = vld [vmem:[%s159 + $0x4] sm:$0xf]
  %v164 = vunpack.c.l.b16 %v160
  %v165 = vunpack.c.l.b16 %v161
  %v166 = vpack.c.b16 %v165, %v164
  %v169 = vunpack.c.l.b16 %v157
  %v170 = vunpack.c.h.b16 %v157
  %v171 = vunpack.c.l.b16 %v158
  %v172 = vpack.c.b16 %v169, %v169
  %v173 = vpack.c.b16 %v170, %v170
  %v174 = vpack.c.b16 %v171, %v171
  %175 = vrot.lane.b32.xlu0 %v172, 127
  %v176 = vpop.permute.xlu0 %175
  %177 = vrot.lane.b32.xlu0 %v173, 127
  %v178 = vpop.permute.xlu0 %177
  %179 = vrot.lane.b32.xlu0 %v174, 127
  %v180 = vpop.permute.xlu0 %179
  %vm181 = vcmask 1039360
  %v182 = vsel %vm181, %v176, %v178
  %v183 = vsel %vm181, %v178, %v180
  %v185 = vsel %vm41, %v166, 0
  %v188 = vsel %vm45, %v182, 0
  %v191 = vsel %vm45, %v183, 0
  %193 = vmatprep.subr.bf16.mxu0 0
  %194 = vmatpush1.bf16.msra.mxu0 0
  %195 = vmatprep.subr.bf16.mxu0 0
  %196 = vmatpush1.bf16.msra.mxu0 0
  %197 = vmatprep.subr.bf16.mxu0 0
  %198 = vmatpush1.bf16.msra.mxu0 0
  %199 = vmatprep.subr.bf16.mxu0 0
  %200 = vmatpush1.bf16.msra.mxu0 0
  %201 = vmatprep.subr.bf16.mxu0 0
  %202 = vmatpush1.bf16.msra.mxu0 0
  %203 = vmatprep.subr.bf16.mxu0 0
  %204 = vmatpush1.bf16.msra.mxu0 0
  %205 = vmatprep.subr.bf16.mxu0 0
  %206 = vmatpush1.bf16.msra.mxu0 0
  %207 = vmatprep.subr.bf16.mxu0 %v191
  %208 = vmatpush1.bf16.msra.mxu0 %v188
  %209 = vmatprep.subr.bf16.mxu0 0
  %210 = vmatpush2.bf16.msra.mxu0 0
  %211 = vmatprep.subr.bf16.mxu0 0
  %212 = vmatpush2.bf16.msra.mxu0 0
  %213 = vmatprep.subr.bf16.mxu0 0
  %214 = vmatpush2.bf16.msra.mxu0 0
  %215 = vmatprep.subr.bf16.mxu0 0
  %216 = vmatpush2.bf16.msra.mxu0 0
  %217 = vmatprep.subr.bf16.mxu0 0
  %218 = vmatpush2.bf16.msra.mxu0 0
  %219 = vmatprep.subr.bf16.mxu0 0
  %220 = vmatpush2.bf16.msra.mxu0 0
  %221 = vmatprep.subr.bf16.mxu0 0
  %222 = vmatpush2.bf16.msra.mxu0 0
  %223 = vmatprep.subr.bf16.mxu0 0
  %224 = vmatpush2.bf16.msra.mxu0 0
  %225 = vmatprep.mubr.bf16.mxu0 0
  %226 = vmatmul.mubr.bf16.gmra.mxu0 %v185
  %v227 = vpop.f32.mrf.mxu0
  %v228 = vadd.f32 0.0, %v227
  %v229 = vpop.f32.mrf.mxu0
  %v230 = vadd.f32 0.0, %v229
  %v231 = vpop.f32.mrf.mxu0
  %v232 = vadd.f32 0.0, %v231
  %v233 = vpop.f32.mrf.mxu0
  %v234 = vadd.f32 0.0, %v233
  %235 = vdwg.mxu0
  %v236 = vadd.f32 %v149, %v228
  %v237 = vadd.f32 %v151, %v230
  %v238 = vadd.f32 %v153, %v232
  %v239 = vadd.f32 %v155, %v234
  %v240 = vld [vmem:[%s1] sm:$0xff]
  %v241 = vld [vmem:[%s1 + $0x8] sm:$0xf]
  %s242 = scalar_lea.vmem %s4, 24
  %v243 = vld [vmem:[%s242] sm:$0xf]
  %v244 = vld [vmem:[%s242 + $0x4] sm:$0xf]
  %v247 = vunpack.c.l.b16 %v243
  %v248 = vunpack.c.l.b16 %v244
  %v249 = vpack.c.b16 %v248, %v247
  %v252 = vunpack.c.l.b16 %v240
  %v253 = vunpack.c.h.b16 %v240
  %v254 = vunpack.c.l.b16 %v241
  %v255 = vpack.c.b16 %v252, %v252
  %v256 = vpack.c.b16 %v253, %v253
  %v257 = vpack.c.b16 %v254, %v254
  %258 = vrot.lane.b32.xlu0 %v255, 127
  %v259 = vpop.permute.xlu0 %258
  %260 = vrot.lane.b32.xlu0 %v256, 127
  %v261 = vpop.permute.xlu0 %260
  %262 = vrot.lane.b32.xlu0 %v257, 127
  %v263 = vpop.permute.xlu0 %262
  %v264 = vsel %vm181, %v259, %v261
  %v265 = vsel %vm181, %v261, %v263
  %v267 = vsel %vm41, %v249, 0
  %v270 = vsel %vm45, %v264, 0
  %v273 = vsel %vm45, %v265, 0
  %275 = vmatprep.subr.bf16.mxu0 0
  %276 = vmatpush1.bf16.msra.mxu0 0
  %277 = vmatprep.subr.bf16.mxu0 0
  %278 = vmatpush1.bf16.msra.mxu0 0
  %279 = vmatprep.subr.bf16.mxu0 0
  %280 = vmatpush1.bf16.msra.mxu0 0
  %281 = vmatprep.subr.bf16.mxu0 0
  %282 = vmatpush1.bf16.msra.mxu0 0
  %283 = vmatprep.subr.bf16.mxu0 0
  %284 = vmatpush1.bf16.msra.mxu0 0
  %285 = vmatprep.subr.bf16.mxu0 0
  %286 = vmatpush1.bf16.msra.mxu0 0
  %287 = vmatprep.subr.bf16.mxu0 0
  %288 = vmatpush1.bf16.msra.mxu0 0
  %289 = vmatprep.subr.bf16.mxu0 %v273
  %290 = vmatpush1.bf16.msra.mxu0 %v270
  %291 = vmatprep.subr.bf16.mxu0 0
  %292 = vmatpush2.bf16.msra.mxu0 0
  %293 = vmatprep.subr.bf16.mxu0 0
  %294 = vmatpush2.bf16.msra.mxu0 0
  %295 = vmatprep.subr.bf16.mxu0 0
  %296 = vmatpush2.bf16.msra.mxu0 0
  %297 = vmatprep.subr.bf16.mxu0 0
  %298 = vmatpush2.bf16.msra.mxu0 0
  %299 = vmatprep.subr.bf16.mxu0 0
  %300 = vmatpush2.bf16.msra.mxu0 0
  %301 = vmatprep.subr.bf16.mxu0 0
  %302 = vmatpush2.bf16.msra.mxu0 0
  %303 = vmatprep.subr.bf16.mxu0 0
  %304 = vmatpush2.bf16.msra.mxu0 0
  %305 = vmatprep.subr.bf16.mxu0 0
  %306 = vmatpush2.bf16.msra.mxu0 0
  %307 = vmatprep.mubr.bf16.mxu0 0
  %308 = vmatmul.mubr.bf16.gmra.mxu0 %v267
  %v309 = vpop.f32.mrf.mxu0
  %v310 = vadd.f32 0.0, %v309
  %v311 = vpop.f32.mrf.mxu0
  %v312 = vadd.f32 0.0, %v311
  %v313 = vpop.f32.mrf.mxu0
  %v314 = vadd.f32 0.0, %v313
  %v315 = vpop.f32.mrf.mxu0
  %v316 = vadd.f32 0.0, %v315
  %317 = vdwg.mxu0
  %v318 = vadd.f32 %v236, %v310
  %v319 = vadd.f32 %v237, %v312
  %v320 = vadd.f32 %v238, %v314
  %v321 = vadd.f32 %v239, %v316
  %v322 = vld [vmem:[%s2] sm:$0xff]
  %s323 = scalar_lea.vmem %s4, 32
  %v324 = vld [vmem:[%s323] sm:$0xf]
  %v325 = vld [vmem:[%s323 + $0x4] sm:$0xf]
  %v328 = vunpack.c.l.b16 %v324
  %v329 = vunpack.c.l.b16 %v325
  %v330 = vpack.c.b16 %v329, %v328
  %v332 = vunpack.c.l.b16 %v322
  %v333 = vunpack.c.h.b16 %v322
  %v334 = vpack.c.b16 %v332, %v332
  %v335 = vpack.c.b16 %v333, %v333
  %v337 = vsel %vm41, %v330, 0
  %v340 = vsel %vm45, %v334, 0
  %v343 = vsel %vm45, %v335, 0
  %345 = vmatprep.subr.bf16.mxu0 0
  %346 = vmatpush1.bf16.msra.mxu0 0
  %347 = vmatprep.subr.bf16.mxu0 0
  %348 = vmatpush1.bf16.msra.mxu0 0
  %349 = vmatprep.subr.bf16.mxu0 0
  %350 = vmatpush1.bf16.msra.mxu0 0
  %351 = vmatprep.subr.bf16.mxu0 0
  %352 = vmatpush1.bf16.msra.mxu0 0
  %353 = vmatprep.subr.bf16.mxu0 0
  %354 = vmatpush1.bf16.msra.mxu0 0
  %355 = vmatprep.subr.bf16.mxu0 0
  %356 = vmatpush1.bf16.msra.mxu0 0
  %357 = vmatprep.subr.bf16.mxu0 0
  %358 = vmatpush1.bf16.msra.mxu0 0
  %359 = vmatprep.subr.bf16.mxu0 %v343
  %360 = vmatpush1.bf16.msra.mxu0 %v340
  %361 = vmatprep.subr.bf16.mxu0 0
  %362 = vmatpush2.bf16.msra.mxu0 0
  %363 = vmatprep.subr.bf16.mxu0 0
  %364 = vmatpush2.bf16.msra.mxu0 0
  %365 = vmatprep.subr.bf16.mxu0 0
  %366 = vmatpush2.bf16.msra.mxu0 0
  %367 = vmatprep.subr.bf16.mxu0 0
  %368 = vmatpush2.bf16.msra.mxu0 0
  %369 = vmatprep.subr.bf16.mxu0 0
  %370 = vmatpush2.bf16.msra.mxu0 0
  %371 = vmatprep.subr.bf16.mxu0 0
  %372 = vmatpush2.bf16.msra.mxu0 0
  %373 = vmatprep.subr.bf16.mxu0 0
  %374 = vmatpush2.bf16.msra.mxu0 0
  %375 = vmatprep.subr.bf16.mxu0 0
  %376 = vmatpush2.bf16.msra.mxu0 0
  %377 = vmatprep.mubr.bf16.mxu0 0
  %378 = vmatmul.mubr.bf16.gmra.mxu0 %v337
  %v379 = vpop.f32.mrf.mxu0
  %v380 = vadd.f32 0.0, %v379
  %v381 = vpop.f32.mrf.mxu0
  %v382 = vadd.f32 0.0, %v381
  %v383 = vpop.f32.mrf.mxu0
  %v384 = vadd.f32 0.0, %v383
  %v385 = vpop.f32.mrf.mxu0
  %v386 = vadd.f32 0.0, %v385
  %387 = vdwg.mxu0
  %v388 = vadd.f32 %v318, %v380
  %v389 = vadd.f32 %v319, %v382
  %v390 = vadd.f32 %v320, %v384
  %v391 = vadd.f32 %v321, %v386
  %v392 = vld [vmem:[%s3] sm:$0xff]
  %s393 = scalar_lea.vmem %s4, 40
  %v394 = vld [vmem:[%s393] sm:$0xf]
  %v395 = vld [vmem:[%s393 + $0x4] sm:$0xf]
  %v398 = vunpack.c.l.b16 %v394
  %v399 = vunpack.c.l.b16 %v395
  %v400 = vpack.c.b16 %v399, %v398
  %v402 = vunpack.c.l.b16 %v392
  %v403 = vunpack.c.h.b16 %v392
  %v404 = vpack.c.b16 %v402, %v402
  %v405 = vpack.c.b16 %v403, %v403
  %v407 = vsel %vm41, %v400, 0
  %v410 = vsel %vm45, %v404, 0
  %v413 = vsel %vm45, %v405, 0
  %415 = vmatprep.subr.bf16.mxu0 0
  %416 = vmatpush1.bf16.msra.mxu0 0
  %417 = vmatprep.subr.bf16.mxu0 0
  %418 = vmatpush1.bf16.msra.mxu0 0
  %419 = vmatprep.subr.bf16.mxu0 0
  %420 = vmatpush1.bf16.msra.mxu0 0
  %421 = vmatprep.subr.bf16.mxu0 0
  %422 = vmatpush1.bf16.msra.mxu0 0
  %423 = vmatprep.subr.bf16.mxu0 0
  %424 = vmatpush1.bf16.msra.mxu0 0
  %425 = vmatprep.subr.bf16.mxu0 0
  %426 = vmatpush1.bf16.msra.mxu0 0
  %427 = vmatprep.subr.bf16.mxu0 0
  %428 = vmatpush1.bf16.msra.mxu0 0
  %429 = vmatprep.subr.bf16.mxu0 %v413
  %430 = vmatpush1.bf16.msra.mxu0 %v410
  %431 = vmatprep.subr.bf16.mxu0 0
  %432 = vmatpush2.bf16.msra.mxu0 0
  %433 = vmatprep.subr.bf16.mxu0 0
  %434 = vmatpush2.bf16.msra.mxu0 0
  %435 = vmatprep.subr.bf16.mxu0 0
  %436 = vmatpush2.bf16.msra.mxu0 0
  %437 = vmatprep.subr.bf16.mxu0 0
  %438 = vmatpush2.bf16.msra.mxu0 0
  %439 = vmatprep.subr.bf16.mxu0 0
  %440 = vmatpush2.bf16.msra.mxu0 0
  %441 = vmatprep.subr.bf16.mxu0 0
  %442 = vmatpush2.bf16.msra.mxu0 0
  %443 = vmatprep.subr.bf16.mxu0 0
  %444 = vmatpush2.bf16.msra.mxu0 0
  %445 = vmatprep.subr.bf16.mxu0 0
  %446 = vmatpush2.bf16.msra.mxu0 0
  %447 = vmatprep.mubr.bf16.mxu0 0
  %448 = vmatmul.mubr.bf16.gmra.mxu0 %v407
  %v449 = vpop.f32.mrf.mxu0
  %v450 = vadd.f32 0.0, %v449
  %v451 = vpop.f32.mrf.mxu0
  %v452 = vadd.f32 0.0, %v451
  %v453 = vpop.f32.mrf.mxu0
  %v454 = vadd.f32 0.0, %v453
  %v455 = vpop.f32.mrf.mxu0
  %v456 = vadd.f32 0.0, %v455
  %457 = vdwg.mxu0
  %v458 = vadd.f32 %v388, %v450
  %v459 = vadd.f32 %v389, %v452
  %v460 = vadd.f32 %v390, %v454
  %v461 = vadd.f32 %v391, %v456
  %v462 = vld [vmem:[%s2] sm:$0xff]
  %v463 = vld [vmem:[%s2 + $0x8] sm:$0xf]
  %s464 = scalar_lea.vmem %s4, 48
  %v465 = vld [vmem:[%s464] sm:$0xf]
  %v466 = vld [vmem:[%s464 + $0x4] sm:$0xf]
  %v469 = vunpack.c.l.b16 %v465
  %v470 = vunpack.c.l.b16 %v466
  %v471 = vpack.c.b16 %v470, %v469
  %v474 = vunpack.c.l.b16 %v462
  %v475 = vunpack.c.h.b16 %v462
  %v476 = vunpack.c.l.b16 %v463
  %v477 = vpack.c.b16 %v474, %v474
  %v478 = vpack.c.b16 %v475, %v475
  %v479 = vpack.c.b16 %v476, %v476
  %480 = vrot.lane.b32.xlu0 %v477, 127
  %v481 = vpop.permute.xlu0 %480
  %482 = vrot.lane.b32.xlu0 %v478, 127
  %v483 = vpop.permute.xlu0 %482
  %484 = vrot.lane.b32.xlu0 %v479, 127
  %v485 = vpop.permute.xlu0 %484
  %v486 = vsel %vm181, %v481, %v483
  %v487 = vsel %vm181, %v483, %v485
  %v489 = vsel %vm41, %v471, 0
  %v492 = vsel %vm45, %v486, 0
  %v495 = vsel %vm45, %v487, 0
  %497 = vmatprep.subr.bf16.mxu0 0
  %498 = vmatpush1.bf16.msra.mxu0 0
  %499 = vmatprep.subr.bf16.mxu0 0
  %500 = vmatpush1.bf16.msra.mxu0 0
  %501 = vmatprep.subr.bf16.mxu0 0
  %502 = vmatpush1.bf16.msra.mxu0 0
  %503 = vmatprep.subr.bf16.mxu0 0
  %504 = vmatpush1.bf16.msra.mxu0 0
  %505 = vmatprep.subr.bf16.mxu0 0
  %506 = vmatpush1.bf16.msra.mxu0 0
  %507 = vmatprep.subr.bf16.mxu0 0
  %508 = vmatpush1.bf16.msra.mxu0 0
  %509 = vmatprep.subr.bf16.mxu0 0
  %510 = vmatpush1.bf16.msra.mxu0 0
  %511 = vmatprep.subr.bf16.mxu0 %v495
  %512 = vmatpush1.bf16.msra.mxu0 %v492
  %513 = vmatprep.subr.bf16.mxu0 0
  %514 = vmatpush2.bf16.msra.mxu0 0
  %515 = vmatprep.subr.bf16.mxu0 0
  %516 = vmatpush2.bf16.msra.mxu0 0
  %517 = vmatprep.subr.bf16.mxu0 0
  %518 = vmatpush2.bf16.msra.mxu0 0
  %519 = vmatprep.subr.bf16.mxu0 0
  %520 = vmatpush2.bf16.msra.mxu0 0
  %521 = vmatprep.subr.bf16.mxu0 0
  %522 = vmatpush2.bf16.msra.mxu0 0
  %523 = vmatprep.subr.bf16.mxu0 0
  %524 = vmatpush2.bf16.msra.mxu0 0
  %525 = vmatprep.subr.bf16.mxu0 0
  %526 = vmatpush2.bf16.msra.mxu0 0
  %527 = vmatprep.subr.bf16.mxu0 0
  %528 = vmatpush2.bf16.msra.mxu0 0
  %529 = vmatprep.mubr.bf16.mxu0 0
  %530 = vmatmul.mubr.bf16.gmra.mxu0 %v489
  %v531 = vpop.f32.mrf.mxu0
  %v532 = vadd.f32 0.0, %v531
  %v533 = vpop.f32.mrf.mxu0
  %v534 = vadd.f32 0.0, %v533
  %v535 = vpop.f32.mrf.mxu0
  %v536 = vadd.f32 0.0, %v535
  %v537 = vpop.f32.mrf.mxu0
  %v538 = vadd.f32 0.0, %v537
  %539 = vdwg.mxu0
  %v540 = vadd.f32 %v458, %v532
  %v541 = vadd.f32 %v459, %v534
  %v542 = vadd.f32 %v460, %v536
  %v543 = vadd.f32 %v461, %v538
  %v544 = vld [vmem:[%s3] sm:$0xff]
  %v545 = vld [vmem:[%s3 + $0x8] sm:$0xf]
  %s546 = scalar_lea.vmem %s4, 56
  %v547 = vld [vmem:[%s546] sm:$0xf]
  %v548 = vld [vmem:[%s546 + $0x4] sm:$0xf]
  %v551 = vunpack.c.l.b16 %v547
  %v552 = vunpack.c.l.b16 %v548
  %v553 = vpack.c.b16 %v552, %v551
  %v556 = vunpack.c.l.b16 %v544
  %v557 = vunpack.c.h.b16 %v544
  %v558 = vunpack.c.l.b16 %v545
  %v559 = vpack.c.b16 %v556, %v556
  %v560 = vpack.c.b16 %v557, %v557
  %v561 = vpack.c.b16 %v558, %v558
  %562 = vrot.lane.b32.xlu0 %v559, 127
  %v563 = vpop.permute.xlu0 %562
  %564 = vrot.lane.b32.xlu0 %v560, 127
  %v565 = vpop.permute.xlu0 %564
  %566 = vrot.lane.b32.xlu0 %v561, 127
  %v567 = vpop.permute.xlu0 %566
  %v568 = vsel %vm181, %v563, %v565
  %v569 = vsel %vm181, %v565, %v567
  %v571 = vsel %vm41, %v553, 0
  %v574 = vsel %vm45, %v568, 0
  %v577 = vsel %vm45, %v569, 0
  %579 = vmatprep.subr.bf16.mxu0 0
  %580 = vmatpush1.bf16.msra.mxu0 0
  %581 = vmatprep.subr.bf16.mxu0 0
  %582 = vmatpush1.bf16.msra.mxu0 0
  %583 = vmatprep.subr.bf16.mxu0 0
  %584 = vmatpush1.bf16.msra.mxu0 0
  %585 = vmatprep.subr.bf16.mxu0 0
  %586 = vmatpush1.bf16.msra.mxu0 0
  %587 = vmatprep.subr.bf16.mxu0 0
  %588 = vmatpush1.bf16.msra.mxu0 0
  %589 = vmatprep.subr.bf16.mxu0 0
  %590 = vmatpush1.bf16.msra.mxu0 0
  %591 = vmatprep.subr.bf16.mxu0 0
  %592 = vmatpush1.bf16.msra.mxu0 0
  %593 = vmatprep.subr.bf16.mxu0 %v577
  %594 = vmatpush1.bf16.msra.mxu0 %v574
  %595 = vmatprep.subr.bf16.mxu0 0
  %596 = vmatpush2.bf16.msra.mxu0 0
  %597 = vmatprep.subr.bf16.mxu0 0
  %598 = vmatpush2.bf16.msra.mxu0 0
  %599 = vmatprep.subr.bf16.mxu0 0
  %600 = vmatpush2.bf16.msra.mxu0 0
  %601 = vmatprep.subr.bf16.mxu0 0
  %602 = vmatpush2.bf16.msra.mxu0 0
  %603 = vmatprep.subr.bf16.mxu0 0
  %604 = vmatpush2.bf16.msra.mxu0 0
  %605 = vmatprep.subr.bf16.mxu0 0
  %606 = vmatpush2.bf16.msra.mxu0 0
  %607 = vmatprep.subr.bf16.mxu0 0
  %608 = vmatpush2.bf16.msra.mxu0 0
  %609 = vmatprep.subr.bf16.mxu0 0
  %610 = vmatpush2.bf16.msra.mxu0 0
  %611 = vmatprep.mubr.bf16.mxu0 0
  %612 = vmatmul.mubr.bf16.gmra.mxu0 %v571
  %v613 = vpop.f32.mrf.mxu0
  %v614 = vadd.f32 0.0, %v613
  %v615 = vpop.f32.mrf.mxu0
  %v616 = vadd.f32 0.0, %v615
  %v617 = vpop.f32.mrf.mxu0
  %v618 = vadd.f32 0.0, %v617
  %v619 = vpop.f32.mrf.mxu0
  %v620 = vadd.f32 0.0, %v619
  %621 = vdwg.mxu0
  %v622 = vadd.f32 %v540, %v614
  %v623 = vadd.f32 %v541, %v616
  %v624 = vadd.f32 %v542, %v618
  %v625 = vadd.f32 %v543, %v620
  %s626 = scalar_lea.vmem %s4, 64
  %v627 = vld [vmem:[%s626] sm:$0xf]
  %v628 = vld [vmem:[%s626 + $0x4] sm:$0xf]
  %v631 = vunpack.c.l.b16 %v627
  %v632 = vunpack.c.l.b16 %v628
  %v633 = vpack.c.b16 %v632, %v631
  %634 = vrot.lane.b32.xlu0 %v172, 119
  %v635 = vpop.permute.xlu0 %634
  %636 = vrot.lane.b32.xlu0 %v173, 119
  %v637 = vpop.permute.xlu0 %636
  %638 = vrot.lane.b32.xlu0 %v174, 119
  %v639 = vpop.permute.xlu0 %638
  %vm640 = vcmask 973824
  %v641 = vsel %vm640, %v635, %v637
  %v642 = vsel %vm640, %v637, %v639
  %v644 = vsel %vm41, %v633, 0
  %v647 = vsel %vm45, %v641, 0
  %v650 = vsel %vm45, %v642, 0
  %652 = vmatprep.subr.bf16.mxu0 0
  %653 = vmatpush1.bf16.msra.mxu0 0
  %654 = vmatprep.subr.bf16.mxu0 0
  %655 = vmatpush1.bf16.msra.mxu0 0
  %656 = vmatprep.subr.bf16.mxu0 0
  %657 = vmatpush1.bf16.msra.mxu0 0
  %658 = vmatprep.subr.bf16.mxu0 0
  %659 = vmatpush1.bf16.msra.mxu0 0
  %660 = vmatprep.subr.bf16.mxu0 0
  %661 = vmatpush1.bf16.msra.mxu0 0
  %662 = vmatprep.subr.bf16.mxu0 0
  %663 = vmatpush1.bf16.msra.mxu0 0
  %664 = vmatprep.subr.bf16.mxu0 0
  %665 = vmatpush1.bf16.msra.mxu0 0
  %666 = vmatprep.subr.bf16.mxu0 %v650
  %667 = vmatpush1.bf16.msra.mxu0 %v647
  %668 = vmatprep.subr.bf16.mxu0 0
  %669 = vmatpush2.bf16.msra.mxu0 0
  %670 = vmatprep.subr.bf16.mxu0 0
  %671 = vmatpush2.bf16.msra.mxu0 0
  %672 = vmatprep.subr.bf16.mxu0 0
  %673 = vmatpush2.bf16.msra.mxu0 0
  %674 = vmatprep.subr.bf16.mxu0 0
  %675 = vmatpush2.bf16.msra.mxu0 0
  %676 = vmatprep.subr.bf16.mxu0 0
  %677 = vmatpush2.bf16.msra.mxu0 0
  %678 = vmatprep.subr.bf16.mxu0 0
  %679 = vmatpush2.bf16.msra.mxu0 0
  %680 = vmatprep.subr.bf16.mxu0 0
  %681 = vmatpush2.bf16.msra.mxu0 0
  %682 = vmatprep.subr.bf16.mxu0 0
  %683 = vmatpush2.bf16.msra.mxu0 0
  %684 = vmatprep.mubr.bf16.mxu0 0
  %685 = vmatmul.mubr.bf16.gmra.mxu0 %v644
  %v686 = vpop.f32.mrf.mxu0
  %v687 = vadd.f32 0.0, %v686
  %v688 = vpop.f32.mrf.mxu0
  %v689 = vadd.f32 0.0, %v688
  %v690 = vpop.f32.mrf.mxu0
  %v691 = vadd.f32 0.0, %v690
  %v692 = vpop.f32.mrf.mxu0
  %v693 = vadd.f32 0.0, %v692
  %694 = vdwg.mxu0
  %v695 = vadd.f32 %v622, %v687
  %v696 = vadd.f32 %v623, %v689
  %v697 = vadd.f32 %v624, %v691
  %v698 = vadd.f32 %v625, %v693
  %s699 = scalar_lea.vmem %s4, 72
  %v700 = vld [vmem:[%s699] sm:$0xf]
  %v701 = vld [vmem:[%s699 + $0x4] sm:$0xf]
  %v704 = vunpack.c.l.b16 %v700
  %v705 = vunpack.c.l.b16 %v701
  %v706 = vpack.c.b16 %v705, %v704
  %707 = vrot.lane.b32.xlu0 %v255, 119
  %v708 = vpop.permute.xlu0 %707
  %709 = vrot.lane.b32.xlu0 %v256, 119
  %v710 = vpop.permute.xlu0 %709
  %711 = vrot.lane.b32.xlu0 %v257, 119
  %v712 = vpop.permute.xlu0 %711
  %v713 = vsel %vm640, %v708, %v710
  %v714 = vsel %vm640, %v710, %v712
  %v716 = vsel %vm41, %v706, 0
  %v719 = vsel %vm45, %v713, 0
  %v722 = vsel %vm45, %v714, 0
  %724 = vmatprep.subr.bf16.mxu0 0
  %725 = vmatpush1.bf16.msra.mxu0 0
  %726 = vmatprep.subr.bf16.mxu0 0
  %727 = vmatpush1.bf16.msra.mxu0 0
  %728 = vmatprep.subr.bf16.mxu0 0
  %729 = vmatpush1.bf16.msra.mxu0 0
  %730 = vmatprep.subr.bf16.mxu0 0
  %731 = vmatpush1.bf16.msra.mxu0 0
  %732 = vmatprep.subr.bf16.mxu0 0
  %733 = vmatpush1.bf16.msra.mxu0 0
  %734 = vmatprep.subr.bf16.mxu0 0
  %735 = vmatpush1.bf16.msra.mxu0 0
  %736 = vmatprep.subr.bf16.mxu0 0
  %737 = vmatpush1.bf16.msra.mxu0 0
  %738 = vmatprep.subr.bf16.mxu0 %v722
  %739 = vmatpush1.bf16.msra.mxu0 %v719
  %740 = vmatprep.subr.bf16.mxu0 0
  %741 = vmatpush2.bf16.msra.mxu0 0
  %742 = vmatprep.subr.bf16.mxu0 0
  %743 = vmatpush2.bf16.msra.mxu0 0
  %744 = vmatprep.subr.bf16.mxu0 0
  %745 = vmatpush2.bf16.msra.mxu0 0
  %746 = vmatprep.subr.bf16.mxu0 0
  %747 = vmatpush2.bf16.msra.mxu0 0
  %748 = vmatprep.subr.bf16.mxu0 0
  %749 = vmatpush2.bf16.msra.mxu0 0
  %750 = vmatprep.subr.bf16.mxu0 0
  %751 = vmatpush2.bf16.msra.mxu0 0
  %752 = vmatprep.subr.bf16.mxu0 0
  %753 = vmatpush2.bf16.msra.mxu0 0
  %754 = vmatprep.subr.bf16.mxu0 0
  %755 = vmatpush2.bf16.msra.mxu0 0
  %756 = vmatprep.mubr.bf16.mxu0 0
  %757 = vmatmul.mubr.bf16.gmra.mxu0 %v716
  %v758 = vpop.f32.mrf.mxu0
  %v759 = vadd.f32 0.0, %v758
  %v760 = vpop.f32.mrf.mxu0
  %v761 = vadd.f32 0.0, %v760
  %v762 = vpop.f32.mrf.mxu0
  %v763 = vadd.f32 0.0, %v762
  %v764 = vpop.f32.mrf.mxu0
  %v765 = vadd.f32 0.0, %v764
  %766 = vdwg.mxu0
  %v767 = vadd.f32 %v695, %v759
  %v768 = vadd.f32 %v696, %v761
  %v769 = vadd.f32 %v697, %v763
  %v770 = vadd.f32 %v698, %v765
  %s771 = scalar_lea.vmem %s4, 80
  %v772 = vld [vmem:[%s771] sm:$0xf]
  %v773 = vld [vmem:[%s771 + $0x4] sm:$0xf]
  %v776 = vunpack.c.l.b16 %v772
  %v777 = vunpack.c.l.b16 %v773
  %v778 = vpack.c.b16 %v777, %v776
  %779 = vrot.lane.b32.xlu0 %v172, 118
  %v780 = vpop.permute.xlu0 %779
  %781 = vrot.lane.b32.xlu0 %v173, 118
  %v782 = vpop.permute.xlu0 %781
  %783 = vrot.lane.b32.xlu0 %v174, 118
  %v784 = vpop.permute.xlu0 %783
  %vm785 = vcmask 965632
  %v786 = vsel %vm785, %v780, %v782
  %v787 = vsel %vm785, %v782, %v784
  %v789 = vsel %vm41, %v778, 0
  %v792 = vsel %vm45, %v786, 0
  %v795 = vsel %vm45, %v787, 0
  %797 = vmatprep.subr.bf16.mxu0 0
  %798 = vmatpush1.bf16.msra.mxu0 0
  %799 = vmatprep.subr.bf16.mxu0 0
  %800 = vmatpush1.bf16.msra.mxu0 0
  %801 = vmatprep.subr.bf16.mxu0 0
  %802 = vmatpush1.bf16.msra.mxu0 0
  %803 = vmatprep.subr.bf16.mxu0 0
  %804 = vmatpush1.bf16.msra.mxu0 0
  %805 = vmatprep.subr.bf16.mxu0 0
  %806 = vmatpush1.bf16.msra.mxu0 0
  %807 = vmatprep.subr.bf16.mxu0 0
  %808 = vmatpush1.bf16.msra.mxu0 0
  %809 = vmatprep.subr.bf16.mxu0 0
  %810 = vmatpush1.bf16.msra.mxu0 0
  %811 = vmatprep.subr.bf16.mxu0 %v795
  %812 = vmatpush1.bf16.msra.mxu0 %v792
  %813 = vmatprep.subr.bf16.mxu0 0
  %814 = vmatpush2.bf16.msra.mxu0 0
  %815 = vmatprep.subr.bf16.mxu0 0
  %816 = vmatpush2.bf16.msra.mxu0 0
  %817 = vmatprep.subr.bf16.mxu0 0
  %818 = vmatpush2.bf16.msra.mxu0 0
  %819 = vmatprep.subr.bf16.mxu0 0
  %820 = vmatpush2.bf16.msra.mxu0 0
  %821 = vmatprep.subr.bf16.mxu0 0
  %822 = vmatpush2.bf16.msra.mxu0 0
  %823 = vmatprep.subr.bf16.mxu0 0
  %824 = vmatpush2.bf16.msra.mxu0 0
  %825 = vmatprep.subr.bf16.mxu0 0
  %826 = vmatpush2.bf16.msra.mxu0 0
  %827 = vmatprep.subr.bf16.mxu0 0
  %828 = vmatpush2.bf16.msra.mxu0 0
  %829 = vmatprep.mubr.bf16.mxu0 0
  %830 = vmatmul.mubr.bf16.gmra.mxu0 %v789
  %v831 = vpop.f32.mrf.mxu0
  %v832 = vadd.f32 0.0, %v831
  %v833 = vpop.f32.mrf.mxu0
  %v834 = vadd.f32 0.0, %v833
  %v835 = vpop.f32.mrf.mxu0
  %v836 = vadd.f32 0.0, %v835
  %v837 = vpop.f32.mrf.mxu0
  %v838 = vadd.f32 0.0, %v837
  %839 = vdwg.mxu0
  %v840 = vadd.f32 %v767, %v832
  %v841 = vadd.f32 %v768, %v834
  %v842 = vadd.f32 %v769, %v836
  %v843 = vadd.f32 %v770, %v838
  %s844 = scalar_lea.vmem %s4, 88
  %v845 = vld [vmem:[%s844] sm:$0xf]
  %v846 = vld [vmem:[%s844 + $0x4] sm:$0xf]
  %v849 = vunpack.c.l.b16 %v845
  %v850 = vunpack.c.l.b16 %v846
  %v851 = vpack.c.b16 %v850, %v849
  %852 = vrot.lane.b32.xlu0 %v255, 118
  %v853 = vpop.permute.xlu0 %852
  %854 = vrot.lane.b32.xlu0 %v256, 118
  %v855 = vpop.permute.xlu0 %854
  %856 = vrot.lane.b32.xlu0 %v257, 118
  %v857 = vpop.permute.xlu0 %856
  %v858 = vsel %vm785, %v853, %v855
  %v859 = vsel %vm785, %v855, %v857
  %v861 = vsel %vm41, %v851, 0
  %v864 = vsel %vm45, %v858, 0
  %v867 = vsel %vm45, %v859, 0
  %869 = vmatprep.subr.bf16.mxu0 0
  %870 = vmatpush1.bf16.msra.mxu0 0
  %871 = vmatprep.subr.bf16.mxu0 0
  %872 = vmatpush1.bf16.msra.mxu0 0
  %873 = vmatprep.subr.bf16.mxu0 0
  %874 = vmatpush1.bf16.msra.mxu0 0
  %875 = vmatprep.subr.bf16.mxu0 0
  %876 = vmatpush1.bf16.msra.mxu0 0
  %877 = vmatprep.subr.bf16.mxu0 0
  %878 = vmatpush1.bf16.msra.mxu0 0
  %879 = vmatprep.subr.bf16.mxu0 0
  %880 = vmatpush1.bf16.msra.mxu0 0
  %881 = vmatprep.subr.bf16.mxu0 0
  %882 = vmatpush1.bf16.msra.mxu0 0
  %883 = vmatprep.subr.bf16.mxu0 %v867
  %884 = vmatpush1.bf16.msra.mxu0 %v864
  %885 = vmatprep.subr.bf16.mxu0 0
  %886 = vmatpush2.bf16.msra.mxu0 0
  %887 = vmatprep.subr.bf16.mxu0 0
  %888 = vmatpush2.bf16.msra.mxu0 0
  %889 = vmatprep.subr.bf16.mxu0 0
  %890 = vmatpush2.bf16.msra.mxu0 0
  %891 = vmatprep.subr.bf16.mxu0 0
  %892 = vmatpush2.bf16.msra.mxu0 0
  %893 = vmatprep.subr.bf16.mxu0 0
  %894 = vmatpush2.bf16.msra.mxu0 0
  %895 = vmatprep.subr.bf16.mxu0 0
  %896 = vmatpush2.bf16.msra.mxu0 0
  %897 = vmatprep.subr.bf16.mxu0 0
  %898 = vmatpush2.bf16.msra.mxu0 0
  %899 = vmatprep.subr.bf16.mxu0 0
  %900 = vmatpush2.bf16.msra.mxu0 0
  %901 = vmatprep.mubr.bf16.mxu0 0
  %902 = vmatmul.mubr.bf16.gmra.mxu0 %v861
  %v903 = vpop.f32.mrf.mxu0
  %v904 = vadd.f32 0.0, %v903
  %v905 = vpop.f32.mrf.mxu0
  %v906 = vadd.f32 0.0, %v905
  %v907 = vpop.f32.mrf.mxu0
  %v908 = vadd.f32 0.0, %v907
  %v909 = vpop.f32.mrf.mxu0
  %v910 = vadd.f32 0.0, %v909
  %911 = vdwg.mxu0
  %v912 = vadd.f32 %v840, %v904
  %v913 = vadd.f32 %v841, %v906
  %v914 = vadd.f32 %v842, %v908
  %v915 = vadd.f32 %v843, %v910
  %s916 = scalar_lea.vmem %s4, 96
  %v917 = vld [vmem:[%s916] sm:$0xf]
  %v918 = vld [vmem:[%s916 + $0x4] sm:$0xf]
  %v921 = vunpack.c.l.b16 %v917
  %v922 = vunpack.c.l.b16 %v918
  %v923 = vpack.c.b16 %v922, %v921
  %924 = vrot.lane.b32.xlu0 %v477, 119
  %v925 = vpop.permute.xlu0 %924
  %926 = vrot.lane.b32.xlu0 %v478, 119
  %v927 = vpop.permute.xlu0 %926
  %928 = vrot.lane.b32.xlu0 %v479, 119
  %v929 = vpop.permute.xlu0 %928
  %v930 = vsel %vm640, %v925, %v927
  %v931 = vsel %vm640, %v927, %v929
  %v933 = vsel %vm41, %v923, 0
  %v936 = vsel %vm45, %v930, 0
  %v939 = vsel %vm45, %v931, 0
  %941 = vmatprep.subr.bf16.mxu0 0
  %942 = vmatpush1.bf16.msra.mxu0 0
  %943 = vmatprep.subr.bf16.mxu0 0
  %944 = vmatpush1.bf16.msra.mxu0 0
  %945 = vmatprep.subr.bf16.mxu0 0
  %946 = vmatpush1.bf16.msra.mxu0 0
  %947 = vmatprep.subr.bf16.mxu0 0
  %948 = vmatpush1.bf16.msra.mxu0 0
  %949 = vmatprep.subr.bf16.mxu0 0
  %950 = vmatpush1.bf16.msra.mxu0 0
  %951 = vmatprep.subr.bf16.mxu0 0
  %952 = vmatpush1.bf16.msra.mxu0 0
  %953 = vmatprep.subr.bf16.mxu0 0
  %954 = vmatpush1.bf16.msra.mxu0 0
  %955 = vmatprep.subr.bf16.mxu0 %v939
  %956 = vmatpush1.bf16.msra.mxu0 %v936
  %957 = vmatprep.subr.bf16.mxu0 0
  %958 = vmatpush2.bf16.msra.mxu0 0
  %959 = vmatprep.subr.bf16.mxu0 0
  %960 = vmatpush2.bf16.msra.mxu0 0
  %961 = vmatprep.subr.bf16.mxu0 0
  %962 = vmatpush2.bf16.msra.mxu0 0
  %963 = vmatprep.subr.bf16.mxu0 0
  %964 = vmatpush2.bf16.msra.mxu0 0
  %965 = vmatprep.subr.bf16.mxu0 0
  %966 = vmatpush2.bf16.msra.mxu0 0
  %967 = vmatprep.subr.bf16.mxu0 0
  %968 = vmatpush2.bf16.msra.mxu0 0
  %969 = vmatprep.subr.bf16.mxu0 0
  %970 = vmatpush2.bf16.msra.mxu0 0
  %971 = vmatprep.subr.bf16.mxu0 0
  %972 = vmatpush2.bf16.msra.mxu0 0
  %973 = vmatprep.mubr.bf16.mxu0 0
  %974 = vmatmul.mubr.bf16.gmra.mxu0 %v933
  %v975 = vpop.f32.mrf.mxu0
  %v976 = vadd.f32 0.0, %v975
  %v977 = vpop.f32.mrf.mxu0
  %v978 = vadd.f32 0.0, %v977
  %v979 = vpop.f32.mrf.mxu0
  %v980 = vadd.f32 0.0, %v979
  %v981 = vpop.f32.mrf.mxu0
  %v982 = vadd.f32 0.0, %v981
  %983 = vdwg.mxu0
  %v984 = vadd.f32 %v912, %v976
  %v985 = vadd.f32 %v913, %v978
  %v986 = vadd.f32 %v914, %v980
  %v987 = vadd.f32 %v915, %v982
  %s988 = scalar_lea.vmem %s4, 104
  %v989 = vld [vmem:[%s988] sm:$0xf]
  %v990 = vld [vmem:[%s988 + $0x4] sm:$0xf]
  %v993 = vunpack.c.l.b16 %v989
  %v994 = vunpack.c.l.b16 %v990
  %v995 = vpack.c.b16 %v994, %v993
  %996 = vrot.lane.b32.xlu0 %v559, 119
  %v997 = vpop.permute.xlu0 %996
  %998 = vrot.lane.b32.xlu0 %v560, 119
  %v999 = vpop.permute.xlu0 %998
  %1000 = vrot.lane.b32.xlu0 %v561, 119
  %v1001 = vpop.permute.xlu0 %1000
  %v1002 = vsel %vm640, %v997, %v999
  %v1003 = vsel %vm640, %v999, %v1001
  %v1005 = vsel %vm41, %v995, 0
  %v1008 = vsel %vm45, %v1002, 0
  %v1011 = vsel %vm45, %v1003, 0
  %1013 = vmatprep.subr.bf16.mxu0 0
  %1014 = vmatpush1.bf16.msra.mxu0 0
  %1015 = vmatprep.subr.bf16.mxu0 0
  %1016 = vmatpush1.bf16.msra.mxu0 0
  %1017 = vmatprep.subr.bf16.mxu0 0
  %1018 = vmatpush1.bf16.msra.mxu0 0
  %1019 = vmatprep.subr.bf16.mxu0 0
  %1020 = vmatpush1.bf16.msra.mxu0 0
  %1021 = vmatprep.subr.bf16.mxu0 0
  %1022 = vmatpush1.bf16.msra.mxu0 0
  %1023 = vmatprep.subr.bf16.mxu0 0
  %1024 = vmatpush1.bf16.msra.mxu0 0
  %1025 = vmatprep.subr.bf16.mxu0 0
  %1026 = vmatpush1.bf16.msra.mxu0 0
  %1027 = vmatprep.subr.bf16.mxu0 %v1011
  %1028 = vmatpush1.bf16.msra.mxu0 %v1008
  %1029 = vmatprep.subr.bf16.mxu0 0
  %1030 = vmatpush2.bf16.msra.mxu0 0
  %1031 = vmatprep.subr.bf16.mxu0 0
  %1032 = vmatpush2.bf16.msra.mxu0 0
  %1033 = vmatprep.subr.bf16.mxu0 0
  %1034 = vmatpush2.bf16.msra.mxu0 0
  %1035 = vmatprep.subr.bf16.mxu0 0
  %1036 = vmatpush2.bf16.msra.mxu0 0
  %1037 = vmatprep.subr.bf16.mxu0 0
  %1038 = vmatpush2.bf16.msra.mxu0 0
  %1039 = vmatprep.subr.bf16.mxu0 0
  %1040 = vmatpush2.bf16.msra.mxu0 0
  %1041 = vmatprep.subr.bf16.mxu0 0
  %1042 = vmatpush2.bf16.msra.mxu0 0
  %1043 = vmatprep.subr.bf16.mxu0 0
  %1044 = vmatpush2.bf16.msra.mxu0 0
  %1045 = vmatprep.mubr.bf16.mxu0 0
  %1046 = vmatmul.mubr.bf16.gmra.mxu0 %v1005
  %v1047 = vpop.f32.mrf.mxu0
  %v1048 = vadd.f32 0.0, %v1047
  %v1049 = vpop.f32.mrf.mxu0
  %v1050 = vadd.f32 0.0, %v1049
  %v1051 = vpop.f32.mrf.mxu0
  %v1052 = vadd.f32 0.0, %v1051
  %v1053 = vpop.f32.mrf.mxu0
  %v1054 = vadd.f32 0.0, %v1053
  %1055 = vdwg.mxu0
  %v1056 = vadd.f32 %v984, %v1048
  %v1057 = vadd.f32 %v985, %v1050
  %v1058 = vadd.f32 %v986, %v1052
  %v1059 = vadd.f32 %v987, %v1054
  %s1060 = scalar_lea.vmem %s4, 112
  %v1061 = vld [vmem:[%s1060] sm:$0xf]
  %v1062 = vld [vmem:[%s1060 + $0x4] sm:$0xf]
  %v1065 = vunpack.c.l.b16 %v1061
  %v1066 = vunpack.c.l.b16 %v1062
  %v1067 = vpack.c.b16 %v1066, %v1065
  %1068 = vrot.lane.b32.xlu0 %v477, 118
  %v1069 = vpop.permute.xlu0 %1068
  %1070 = vrot.lane.b32.xlu0 %v478, 118
  %v1071 = vpop.permute.xlu0 %1070
  %1072 = vrot.lane.b32.xlu0 %v479, 118
  %v1073 = vpop.permute.xlu0 %1072
  %v1074 = vsel %vm785, %v1069, %v1071
  %v1075 = vsel %vm785, %v1071, %v1073
  %v1077 = vsel %vm41, %v1067, 0
  %v1080 = vsel %vm45, %v1074, 0
  %v1083 = vsel %vm45, %v1075, 0
  %1085 = vmatprep.subr.bf16.mxu0 0
  %1086 = vmatpush1.bf16.msra.mxu0 0
  %1087 = vmatprep.subr.bf16.mxu0 0
  %1088 = vmatpush1.bf16.msra.mxu0 0
  %1089 = vmatprep.subr.bf16.mxu0 0
  %1090 = vmatpush1.bf16.msra.mxu0 0
  %1091 = vmatprep.subr.bf16.mxu0 0
  %1092 = vmatpush1.bf16.msra.mxu0 0
  %1093 = vmatprep.subr.bf16.mxu0 0
  %1094 = vmatpush1.bf16.msra.mxu0 0
  %1095 = vmatprep.subr.bf16.mxu0 0
  %1096 = vmatpush1.bf16.msra.mxu0 0
  %1097 = vmatprep.subr.bf16.mxu0 0
  %1098 = vmatpush1.bf16.msra.mxu0 0
  %1099 = vmatprep.subr.bf16.mxu0 %v1083
  %1100 = vmatpush1.bf16.msra.mxu0 %v1080
  %1101 = vmatprep.subr.bf16.mxu0 0
  %1102 = vmatpush2.bf16.msra.mxu0 0
  %1103 = vmatprep.subr.bf16.mxu0 0
  %1104 = vmatpush2.bf16.msra.mxu0 0
  %1105 = vmatprep.subr.bf16.mxu0 0
  %1106 = vmatpush2.bf16.msra.mxu0 0
  %1107 = vmatprep.subr.bf16.mxu0 0
  %1108 = vmatpush2.bf16.msra.mxu0 0
  %1109 = vmatprep.subr.bf16.mxu0 0
  %1110 = vmatpush2.bf16.msra.mxu0 0
  %1111 = vmatprep.subr.bf16.mxu0 0
  %1112 = vmatpush2.bf16.msra.mxu0 0
  %1113 = vmatprep.subr.bf16.mxu0 0
  %1114 = vmatpush2.bf16.msra.mxu0 0
  %1115 = vmatprep.subr.bf16.mxu0 0
  %1116 = vmatpush2.bf16.msra.mxu0 0
  %1117 = vmatprep.mubr.bf16.mxu0 0
  %1118 = vmatmul.mubr.bf16.gmra.mxu0 %v1077
  %v1119 = vpop.f32.mrf.mxu0
  %v1120 = vadd.f32 0.0, %v1119
  %v1121 = vpop.f32.mrf.mxu0
  %v1122 = vadd.f32 0.0, %v1121
  %v1123 = vpop.f32.mrf.mxu0
  %v1124 = vadd.f32 0.0, %v1123
  %v1125 = vpop.f32.mrf.mxu0
  %v1126 = vadd.f32 0.0, %v1125
  %1127 = vdwg.mxu0
  %v1128 = vadd.f32 %v1056, %v1120
  %v1129 = vadd.f32 %v1057, %v1122
  %v1130 = vadd.f32 %v1058, %v1124
  %v1131 = vadd.f32 %v1059, %v1126
  %s1132 = scalar_lea.vmem %s4, 120
  %v1133 = vld [vmem:[%s1132] sm:$0xf]
  %v1134 = vld [vmem:[%s1132 + $0x4] sm:$0xf]
  %v1137 = vunpack.c.l.b16 %v1133
  %v1138 = vunpack.c.l.b16 %v1134
  %v1139 = vpack.c.b16 %v1138, %v1137
  %1140 = vrot.lane.b32.xlu0 %v559, 118
  %v1141 = vpop.permute.xlu0 %1140
  %1142 = vrot.lane.b32.xlu0 %v560, 118
  %v1143 = vpop.permute.xlu0 %1142
  %1144 = vrot.lane.b32.xlu0 %v561, 118
  %v1145 = vpop.permute.xlu0 %1144
  %v1146 = vsel %vm785, %v1141, %v1143
  %v1147 = vsel %vm785, %v1143, %v1145
  %v1149 = vsel %vm41, %v1139, 0
  %v1152 = vsel %vm45, %v1146, 0
  %v1155 = vsel %vm45, %v1147, 0
  %1157 = vmatprep.subr.bf16.mxu0 0
  %1158 = vmatpush1.bf16.msra.mxu0 0
  %1159 = vmatprep.subr.bf16.mxu0 0
  %1160 = vmatpush1.bf16.msra.mxu0 0
  %1161 = vmatprep.subr.bf16.mxu0 0
  %1162 = vmatpush1.bf16.msra.mxu0 0
  %1163 = vmatprep.subr.bf16.mxu0 0
  %1164 = vmatpush1.bf16.msra.mxu0 0
  %1165 = vmatprep.subr.bf16.mxu0 0
  %1166 = vmatpush1.bf16.msra.mxu0 0
  %1167 = vmatprep.subr.bf16.mxu0 0
  %1168 = vmatpush1.bf16.msra.mxu0 0
  %1169 = vmatprep.subr.bf16.mxu0 0
  %1170 = vmatpush1.bf16.msra.mxu0 0
  %1171 = vmatprep.subr.bf16.mxu0 %v1155
  %1172 = vmatpush1.bf16.msra.mxu0 %v1152
  %1173 = vmatprep.subr.bf16.mxu0 0
  %1174 = vmatpush2.bf16.msra.mxu0 0
  %1175 = vmatprep.subr.bf16.mxu0 0
  %1176 = vmatpush2.bf16.msra.mxu0 0
  %1177 = vmatprep.subr.bf16.mxu0 0
  %1178 = vmatpush2.bf16.msra.mxu0 0
  %1179 = vmatprep.subr.bf16.mxu0 0
  %1180 = vmatpush2.bf16.msra.mxu0 0
  %1181 = vmatprep.subr.bf16.mxu0 0
  %1182 = vmatpush2.bf16.msra.mxu0 0
  %1183 = vmatprep.subr.bf16.mxu0 0
  %1184 = vmatpush2.bf16.msra.mxu0 0
  %1185 = vmatprep.subr.bf16.mxu0 0
  %1186 = vmatpush2.bf16.msra.mxu0 0
  %1187 = vmatprep.subr.bf16.mxu0 0
  %1188 = vmatpush2.bf16.msra.mxu0 0
  %1189 = vmatprep.mubr.bf16.mxu0 0
  %1190 = vmatmul.mubr.bf16.gmra.mxu0 %v1149
  %v1191 = vpop.f32.mrf.mxu0
  %v1192 = vadd.f32 0.0, %v1191
  %v1193 = vpop.f32.mrf.mxu0
  %v1194 = vadd.f32 0.0, %v1193
  %v1195 = vpop.f32.mrf.mxu0
  %v1196 = vadd.f32 0.0, %v1195
  %v1197 = vpop.f32.mrf.mxu0
  %v1198 = vadd.f32 0.0, %v1197
  %1199 = vdwg.mxu0
  %v1200 = vadd.f32 %v1128, %v1192
  %v1201 = vadd.f32 %v1129, %v1194
  %v1202 = vadd.f32 %v1130, %v1196
  %v1203 = vadd.f32 %v1131, %v1198
  %v1204 = vld [vmem:[%s5] sm:$0xff]
  %v1205 = vld [vmem:[%s5 + $0x8] sm:$0xff]
  %1207 = vset.pattern.permute.xlu0 0
  %1208 = vperm.xlu0 %1207, %v1204
  %v1209 = vpop.permute.xlu0 %1208
  %1212 = vset.pattern.permute.xlu0 0
  %1213 = vperm.xlu0 %1212, %v1205
  %v1214 = vpop.permute.xlu0 %1213
  %v1216 = vadd.f32 %v1200, %v1209
  %v1217 = vadd.f32 %v1201, %v1209
  %v1218 = vadd.f32 %v1202, %v1214
  %v1219 = vadd.f32 %v1203, %v1214
  %vm1220 = vcmp.gt.f32.partialorder %v1216, 0.0
  %vm1221 = vcmp.gt.f32.partialorder %v1217, 0.0
  %vm1222 = vcmp.gt.f32.partialorder %v1218, 0.0
  %vm1223 = vcmp.gt.f32.partialorder %v1219, 0.0
  %v1224 = vmul.f32 %v1216, 0.2
  %v1225 = vmul.f32 %v1217, 0.2
  %v1226 = vmul.f32 %v1218, 0.2
  %v1227 = vmul.f32 %v1219, 0.2
  %v1228 = vsel %vm1220, %v1216, %v1224
  %v1229 = vsel %vm1221, %v1217, %v1225
  %v1230 = vsel %vm1222, %v1218, %v1226
  %v1231 = vsel %vm1223, %v1219, %v1227
  %v1232 = vpack.c.bf16 %v1230, %v1228
  %v1233 = vpack.c.bf16 %v1231, %v1229
  %v1236 = vunpack.c.l.b16 %v1232
  %v1237 = vunpack.c.l.b16 %v1233
  %v1238 = vunpack.c.h.b16 %v1232
  %v1239 = vunpack.c.h.b16 %v1233
  %v1240 = vpack.c.b16 %v1237, %v1236
  %v1241 = vpack.c.b16 %v1239, %v1238
  %1244 = vst [vmem:[%s6] sm:$0xff] %v1240
  %1245 = vst [vmem:[%s6 + $0x8] sm:$0xff] %v1241
  // Predicated region
  $region26: #{patchgan_forward.4} parent=0 // pred_check
    _
  $region27: #{patchgan_forward.4} parent=0 // pred_check_branch
    %1247 = sbr.rel (0) target = $region29
  $region28: #{patchgan_forward.4} parent=0 // pred_region
    _
  $region29: #{patchgan_forward.4} parent=0 // pred_fallthru
    _
  // Predicated region
  $region30: #{patchgan_forward.4} parent=0 // pred_check
    _
  $region31: #{patchgan_forward.4} parent=0 // pred_check_branch
    %1249 = sbr.rel (0) target = $region33
  $region32: #{patchgan_forward.4} parent=0 // pred_region
    _
  $region33: #{patchgan_forward.4} parent=0 // pred_fallthru
    _

// kernel: tile.13
$region0: #{tile.13}
  %s0 = inlined_call_operand.vmem [shape: f32[3,3], index: 0, kind: input, shape index: {}]
  %s1 = inlined_call_operand.vmem [shape: f32[9], index: 1, kind: output, shape index: {}]
  $region1: #{tile.13} parent=0
    #allocation0 [shape = 'u8[4096]{0}', space=vmem, size = 0x1000, scoped, tag = 'scoped mem for output reshape']
    #allocation1 [shape = 'u8[4096]{0}', space=vmem, size = 0x1000, scoped, tag = 'scoped mem for input reshape']
    %s3 = sshll.u32 1, 4
    %s4 = ssub.s32 %s3, 1
    %v5 = vld [vmem:[%s0] sm:%s4]
    %6 = vst [vmem:[#allocation1] sm:%s4] %v5
    %v7 = vld [vmem:[#allocation1] sm:$0x1]
    %vm8 = vcmask 23552
    %9 = vst.msk [vmem:[#allocation0] sm:$0x1] %vm8, %v7
    %s10 = scalar_lea.vmem [#allocation1], 2
    %v11 = vld [vmem:[%s10] sm:$0x1]
    %12 = vrot.lane.b32.xlu0 %v11, 6
    %v13 = vpop.permute.xlu0 %12
    %vm14 = vcmask 72752
    %15 = vst.msk [vmem:[#allocation0] sm:$0x1] %vm14, %v13
    %s16 = scalar_lea.vmem [#allocation1], 1
    %v17 = vld [vmem:[%s16] sm:$0x1]
    %18 = vrot.lane.b32.xlu0 %v17, 3
    %v19 = vpop.permute.xlu0 %18
    %vm20 = vcmask 48152
    %21 = vst.msk [vmem:[#allocation0] sm:$0x1] %vm20, %v19
    %s23 = sshll.u32 1, 1
    %s24 = ssub.s32 %s23, 1
    %v26 = vld [vmem:[#allocation0] sm:%s24]
    %s27 = sshll.u32 1, 1
    %s28 = ssub.s32 %s27, 1
    %29 = vst [vmem:[%s1] sm:%s28] %v26

// kernel: tile.14
$region0: #{tile.14}
  #allocation0 [shape = 's32[1]{0}', space=sflag, size = 0x4, scoped, tag = 'scoped memory for tile.14']
  %s0 = inlined_call_operand.vmem [shape: f32[9], index: 0, kind: input, shape index: {}]
  %s1 = inlined_call_operand.vmem [shape: f32[2,9], index: 1, kind: output, shape index: {}]
  // Predicated region
  $region2: #{tile.14} parent=0 // pred_check
    _
  $region3: #{tile.14} parent=0 // pred_check_branch
    %3 = sbr.rel (0) target = $region5
  $region4: #{tile.14} parent=0 // pred_region
    _
  $region5: #{tile.14} parent=0 // pred_fallthru
    _
  %v4 = vld [vmem:[%s0] ss:$0 sm:$0xff]
  %5 = vst [vmem:[%s1] sm:$0x3] %v4

// kernel: tile.15
$region0: #{tile.15}
  %s0 = inlined_call_operand.vmem [shape: f32[2,9], index: 0, kind: input, shape index: {}]
  %s1 = inlined_call_operand.vmem [shape: f32[18], index: 1, kind: output, shape index: {}]
  $region1: #{tile.15} parent=0
    #allocation0 [shape = 'u8[4096]{0}', space=vmem, size = 0x1000, scoped, tag = 'scoped mem for output reshape']
    #allocation1 [shape = 'u8[4096]{0}', space=vmem, size = 0x1000, scoped, tag = 'scoped mem for input reshape']
    %s3 = sshll.u32 1, 2
    %s4 = ssub.s32 %s3, 1
    %v5 = vld [vmem:[%s0] sm:%s4]
    %6 = vst [vmem:[#allocation1] sm:%s4] %v5
    %v7 = vld [vmem:[#allocation1] sm:$0x1]
    %vm8 = vcmask 72704
    %9 = vst.msk [vmem:[#allocation0] sm:$0x1] %vm8, %v7
    %s10 = scalar_lea.vmem [#allocation1], 1
    %v11 = vld [vmem:[%s10] sm:$0x1]
    %12 = vrot.lane.b32.xlu0 %v11, 9
    %v13 = vpop.permute.xlu0 %12
    %vm14 = vcmask 146504
    %15 = vst.msk [vmem:[#allocation0] sm:$0x1] %vm14, %v13
    %s17 = sshll.u32 1, 1
    %s18 = ssub.s32 %s17, 1
    %v20 = vld [vmem:[#allocation0] sm:%s18]
    %s21 = sshll.u32 1, 1
    %s22 = ssub.s32 %s21, 1
    %23 = vst [vmem:[%s1] sm:%s22] %v20

// kernel: patchgan_forward.5
$region0: #{patchgan_forward.5}
  #allocation0 [shape = 'u32[]', space=smem, size = 0x4, offset = 0x4, fixed_abs, tag = 'smem constant byte address 0x4 - core index']
  #allocation1 [shape = 'u32[144,128]{1,0:T(1,128)}', space=vmem, size = 0x12000, scoped, tag = 'internal scratch']
  %s0 = inlined_call_operand.vmem [shape: bf16[8,256], index: 0, kind: input, shape index: {}]
  %s1 = inlined_call_operand.vmem [shape: bf16[8,256], index: 1, kind: input, shape index: {}]
  %s2 = inlined_call_operand.vmem [shape: bf16[8,256], index: 2, kind: input, shape index: {}]
  %s3 = inlined_call_operand.vmem [shape: bf16[8,256], index: 3, kind: input, shape index: {}]
  %s4 = inlined_call_operand.vmem [shape: bf16[16,16,8], index: 4, kind: input, shape index: {}]
  %s5 = inlined_call_operand.vmem [shape: f32[1,128], index: 5, kind: input, shape index: {}]
  %s6 = inlined_call_operand.vmem [shape: bf16[16,128], index: 6, kind: output, shape index: {0}]
  %s7 = inlined_call_operand.vmem [shape: f32[1,16,1], index: 7, kind: output, shape index: {1}]
  %s8 = inlined_call_operand.vmem [shape: f32[1,16,1], index: 8, kind: output, shape index: {2}]
  %9 = xla_tuple %s6, %s7, %s8
  %s10 = sld [smem:[#allocation0]]
  $region50: #{patchgan_forward.5} parent=0
    _
  %s12 = ssub.s32 1, %s10
  %s13 = scalar_select 0, %s12, %s10
  // Predicated region
  $region2: #{patchgan_forward.5} parent=0 // pred_check
    _
  $region3: #{patchgan_forward.5} parent=0 // pred_check_branch
    %15 = sbr.rel (0) target = $region5
  $region4: #{patchgan_forward.5} parent=0 // pred_region
    _
  $region5: #{patchgan_forward.5} parent=0 // pred_fallthru
    _
  // Predicated region
  $region6: #{patchgan_forward.5} parent=0 // pred_check
    _
  $region7: #{patchgan_forward.5} parent=0 // pred_check_branch
    %17 = sbr.rel (0) target = $region9
  $region8: #{patchgan_forward.5} parent=0 // pred_region
    _
  $region9: #{patchgan_forward.5} parent=0 // pred_fallthru
    _
  // Predicated region
  $region10: #{patchgan_forward.5} parent=0 // pred_check
    _
  $region11: #{patchgan_forward.5} parent=0 // pred_check_branch
    %19 = sbr.rel (0) target = $region13
  $region12: #{patchgan_forward.5} parent=0 // pred_region
    _
  $region13: #{patchgan_forward.5} parent=0 // pred_fallthru
    _
  // Predicated region
  $region14: #{patchgan_forward.5} parent=0 // pred_check
    _
  $region15: #{patchgan_forward.5} parent=0 // pred_check_branch
    %21 = sbr.rel (0) target = $region17
  $region16: #{patchgan_forward.5} parent=0 // pred_region
    _
  $region17: #{patchgan_forward.5} parent=0 // pred_fallthru
    _
  // Predicated region
  $region18: #{patchgan_forward.5} parent=0 // pred_check
    _
  $region19: #{patchgan_forward.5} parent=0 // pred_check_branch
    %23 = sbr.rel (0) target = $region21
  $region20: #{patchgan_forward.5} parent=0 // pred_region
    _
  $region21: #{patchgan_forward.5} parent=0 // pred_fallthru
    _
  // Predicated region
  $region22: #{patchgan_forward.5} parent=0 // pred_check
    _
  $region23: #{patchgan_forward.5} parent=0 // pred_check_branch
    %25 = sbr.rel (0) target = $region25
  $region24: #{patchgan_forward.5} parent=0 // pred_region
    _
  $region25: #{patchgan_forward.5} parent=0 // pred_fallthru
    _
  %v27 = vld [vmem:[%s0] sm:$0xf]
  %v28 = vld [vmem:[%s4] sm:$0xf]
  %v29 = vld [vmem:[%s4 + $0x4] sm:$0xf]
  %v30 = vld [vmem:[%s1] sm:$0xf]
  %s31 = scalar_lea.vmem %s4, 8
  %v32 = vld [vmem:[%s31] sm:$0xf]
  %v33 = vld [vmem:[%s31 + $0x4] sm:$0xf]
  %v36 = vunpack.c.l.b16 %v32
  %v37 = vunpack.c.l.b16 %v33
  %v38 = vpack.c.b16 %v37, %v36
  %vm39 = vcmask 64512
  %v41 = vsel %vm39, %v38, 0
  %vm43 = vcmask 1043456
  %v45 = vsel %vm43, %v30, 0
  %47 = vmatprep.subr.bf16.mxu0 0
  %48 = vmatpush1.bf16.msra.mxu0 0
  %49 = vmatprep.subr.bf16.mxu0 0
  %50 = vmatpush1.bf16.msra.mxu0 0
  %51 = vmatprep.subr.bf16.mxu0 0
  %52 = vmatpush1.bf16.msra.mxu0 0
  %53 = vmatprep.subr.bf16.mxu0 0
  %54 = vmatpush1.bf16.msra.mxu0 0
  %55 = vmatprep.subr.bf16.mxu0 0
  %56 = vmatpush1.bf16.msra.mxu0 0
  %57 = vmatprep.subr.bf16.mxu0 0
  %58 = vmatpush1.bf16.msra.mxu0 0
  %59 = vmatprep.subr.bf16.mxu0 0
  %60 = vmatpush1.bf16.msra.mxu0 0
  %61 = vmatprep.subr.bf16.mxu0 0
  %62 = vmatpush1.bf16.msra.mxu0 %v45
  %63 = vmatprep.subr.bf16.mxu0 0
  %64 = vmatpush2.bf16.msra.mxu0 0
  %65 = vmatprep.subr.bf16.mxu0 0
  %66 = vmatpush2.bf16.msra.mxu0 0
  %67 = vmatprep.subr.bf16.mxu0 0
  %68 = vmatpush2.bf16.msra.mxu0 0
  %69 = vmatprep.subr.bf16.mxu0 0
  %70 = vmatpush2.bf16.msra.mxu0 0
  %71 = vmatprep.subr.bf16.mxu0 0
  %72 = vmatpush2.bf16.msra.mxu0 0
  %73 = vmatprep.subr.bf16.mxu0 0
  %74 = vmatpush2.bf16.msra.mxu0 0
  %75 = vmatprep.subr.bf16.mxu0 0
  %76 = vmatpush2.bf16.msra.mxu0 0
  %77 = vmatprep.subr.bf16.mxu0 0
  %78 = vmatpush2.bf16.msra.mxu0 0
  %79 = vmatprep.mubr.bf16.mxu0 0
  %80 = vmatmul.mubr.bf16.gmra.mxu0 %v41
  %v81 = vpop.f32.mrf.mxu0
  %v82 = vadd.f32 0.0, %v81
  %v83 = vpop.f32.mrf.mxu0
  %v84 = vpop.f32.mrf.mxu0
  %v85 = vadd.f32 0.0, %v84
  %v86 = vpop.f32.mrf.mxu0
  %87 = vdwg.mxu0
  %v90 = vunpack.c.l.b16 %v28
  %v91 = vunpack.c.l.b16 %v29
  %v92 = vpack.c.b16 %v91, %v90
  %v94 = vsel %vm39, %v92, 0
  %v97 = vsel %vm43, %v27, 0
  %99 = vmatprep.subr.bf16.mxu0 0
  %100 = vmatpush1.bf16.msra.mxu0 0
  %101 = vmatprep.subr.bf16.mxu0 0
  %102 = vmatpush1.bf16.msra.mxu0 0
  %103 = vmatprep.subr.bf16.mxu0 0
  %104 = vmatpush1.bf16.msra.mxu0 0
  %105 = vmatprep.subr.bf16.mxu0 0
  %106 = vmatpush1.bf16.msra.mxu0 0
  %107 = vmatprep.subr.bf16.mxu0 0
  %108 = vmatpush1.bf16.msra.mxu0 0
  %109 = vmatprep.subr.bf16.mxu0 0
  %110 = vmatpush1.bf16.msra.mxu0 0
  %111 = vmatprep.subr.bf16.mxu0 0
  %112 = vmatpush1.bf16.msra.mxu0 0
  %113 = vmatprep.subr.bf16.mxu0 0
  %114 = vmatpush1.bf16.msra.mxu0 %v97
  %115 = vmatprep.subr.bf16.mxu0 0
  %116 = vmatpush2.bf16.msra.mxu0 0
  %117 = vmatprep.subr.bf16.mxu0 0
  %118 = vmatpush2.bf16.msra.mxu0 0
  %119 = vmatprep.subr.bf16.mxu0 0
  %120 = vmatpush2.bf16.msra.mxu0 0
  %121 = vmatprep.subr.bf16.mxu0 0
  %122 = vmatpush2.bf16.msra.mxu0 0
  %123 = vmatprep.subr.bf16.mxu0 0
  %124 = vmatpush2.bf16.msra.mxu0 0
  %125 = vmatprep.subr.bf16.mxu0 0
  %126 = vmatpush2.bf16.msra.mxu0 0
  %127 = vmatprep.subr.bf16.mxu0 0
  %128 = vmatpush2.bf16.msra.mxu0 0
  %129 = vmatprep.subr.bf16.mxu0 0
  %130 = vmatpush2.bf16.msra.mxu0 0
  %131 = vmatprep.mubr.bf16.mxu0 0
  %132 = vmatmul.mubr.bf16.gmra.mxu0 %v94
  %v133 = vpop.f32.mrf.mxu0
  %v134 = vadd.f32 %v82, %v133
  %v135 = vpop.f32.mrf.mxu0
  %v136 = vpop.f32.mrf.mxu0
  %v137 = vadd.f32 %v85, %v136
  %v138 = vpop.f32.mrf.mxu0
  %139 = vdwg.mxu0
  %v140 = vld [vmem:[%s0] sm:$0xff]
  %s141 = scalar_lea.vmem %s4, 16
  %v142 = vld [vmem:[%s141] sm:$0xf]
  %v143 = vld [vmem:[%s141 + $0x4] sm:$0xf]
  %v146 = vunpack.c.l.b16 %v142
  %v147 = vunpack.c.l.b16 %v143
  %v148 = vpack.c.b16 %v147, %v146
  %v150 = vunpack.c.l.b16 %v140
  %v151 = vunpack.c.h.b16 %v140
  %v152 = vpack.c.b16 %v150, %v150
  %v153 = vpack.c.b16 %v151, %v151
  %154 = vrot.lane.b32.xlu0 %v152, 127
  %v155 = vpop.permute.xlu0 %154
  %156 = vrot.lane.b32.xlu0 %v153, 127
  %v157 = vpop.permute.xlu0 %156
  %vm158 = vcmask 1039360
  %v159 = vsel %vm158, %v155, %v157
  %v161 = vsel %vm39, %v148, 0
  %v164 = vsel %vm43, %v159, 0
  %166 = vmatprep.subr.bf16.mxu0 0
  %167 = vmatpush1.bf16.msra.mxu0 0
  %168 = vmatprep.subr.bf16.mxu0 0
  %169 = vmatpush1.bf16.msra.mxu0 0
  %170 = vmatprep.subr.bf16.mxu0 0
  %171 = vmatpush1.bf16.msra.mxu0 0
  %172 = vmatprep.subr.bf16.mxu0 0
  %173 = vmatpush1.bf16.msra.mxu0 0
  %174 = vmatprep.subr.bf16.mxu0 0
  %175 = vmatpush1.bf16.msra.mxu0 0
  %176 = vmatprep.subr.bf16.mxu0 0
  %177 = vmatpush1.bf16.msra.mxu0 0
  %178 = vmatprep.subr.bf16.mxu0 0
  %179 = vmatpush1.bf16.msra.mxu0 0
  %180 = vmatprep.subr.bf16.mxu0 0
  %181 = vmatpush1.bf16.msra.mxu0 %v164
  %182 = vmatprep.subr.bf16.mxu0 0
  %183 = vmatpush2.bf16.msra.mxu0 0
  %184 = vmatprep.subr.bf16.mxu0 0
  %185 = vmatpush2.bf16.msra.mxu0 0
  %186 = vmatprep.subr.bf16.mxu0 0
  %187 = vmatpush2.bf16.msra.mxu0 0
  %188 = vmatprep.subr.bf16.mxu0 0
  %189 = vmatpush2.bf16.msra.mxu0 0
  %190 = vmatprep.subr.bf16.mxu0 0
  %191 = vmatpush2.bf16.msra.mxu0 0
  %192 = vmatprep.subr.bf16.mxu0 0
  %193 = vmatpush2.bf16.msra.mxu0 0
  %194 = vmatprep.subr.bf16.mxu0 0
  %195 = vmatpush2.bf16.msra.mxu0 0
  %196 = vmatprep.subr.bf16.mxu0 0
  %197 = vmatpush2.bf16.msra.mxu0 0
  %198 = vmatprep.mubr.bf16.mxu0 0
  %199 = vmatmul.mubr.bf16.gmra.mxu0 %v161
  %v200 = vpop.f32.mrf.mxu0
  %v201 = vadd.f32 0.0, %v200
  %v202 = vpop.f32.mrf.mxu0
  %v203 = vpop.f32.mrf.mxu0
  %v204 = vadd.f32 0.0, %v203
  %v205 = vpop.f32.mrf.mxu0
  %206 = vdwg.mxu0
  %v207 = vadd.f32 %v134, %v201
  %v208 = vadd.f32 %v137, %v204
  %v209 = vld [vmem:[%s1] sm:$0xff]
  %s210 = scalar_lea.vmem %s4, 24
  %v211 = vld [vmem:[%s210] sm:$0xf]
  %v212 = vld [vmem:[%s210 + $0x4] sm:$0xf]
  %v215 = vunpack.c.l.b16 %v211
  %v216 = vunpack.c.l.b16 %v212
  %v217 = vpack.c.b16 %v216, %v215
  %v219 = vunpack.c.l.b16 %v209
  %v220 = vunpack.c.h.b16 %v209
  %v221 = vpack.c.b16 %v219, %v219
  %v222 = vpack.c.b16 %v220, %v220
  %223 = vrot.lane.b32.xlu0 %v221, 127
  %v224 = vpop.permute.xlu0 %223
  %225 = vrot.lane.b32.xlu0 %v222, 127
  %v226 = vpop.permute.xlu0 %225
  %v227 = vsel %vm158, %v224, %v226
  %v229 = vsel %vm39, %v217, 0
  %v232 = vsel %vm43, %v227, 0
  %234 = vmatprep.subr.bf16.mxu0 0
  %235 = vmatpush1.bf16.msra.mxu0 0
  %236 = vmatprep.subr.bf16.mxu0 0
  %237 = vmatpush1.bf16.msra.mxu0 0
  %238 = vmatprep.subr.bf16.mxu0 0
  %239 = vmatpush1.bf16.msra.mxu0 0
  %240 = vmatprep.subr.bf16.mxu0 0
  %241 = vmatpush1.bf16.msra.mxu0 0
  %242 = vmatprep.subr.bf16.mxu0 0
  %243 = vmatpush1.bf16.msra.mxu0 0
  %244 = vmatprep.subr.bf16.mxu0 0
  %245 = vmatpush1.bf16.msra.mxu0 0
  %246 = vmatprep.subr.bf16.mxu0 0
  %247 = vmatpush1.bf16.msra.mxu0 0
  %248 = vmatprep.subr.bf16.mxu0 0
  %249 = vmatpush1.bf16.msra.mxu0 %v232
  %250 = vmatprep.subr.bf16.mxu0 0
  %251 = vmatpush2.bf16.msra.mxu0 0
  %252 = vmatprep.subr.bf16.mxu0 0
  %253 = vmatpush2.bf16.msra.mxu0 0
  %254 = vmatprep.subr.bf16.mxu0 0
  %255 = vmatpush2.bf16.msra.mxu0 0
  %256 = vmatprep.subr.bf16.mxu0 0
  %257 = vmatpush2.bf16.msra.mxu0 0
  %258 = vmatprep.subr.bf16.mxu0 0
  %259 = vmatpush2.bf16.msra.mxu0 0
  %260 = vmatprep.subr.bf16.mxu0 0
  %261 = vmatpush2.bf16.msra.mxu0 0
  %262 = vmatprep.subr.bf16.mxu0 0
  %263 = vmatpush2.bf16.msra.mxu0 0
  %264 = vmatprep.subr.bf16.mxu0 0
  %265 = vmatpush2.bf16.msra.mxu0 0
  %266 = vmatprep.mubr.bf16.mxu0 0
  %267 = vmatmul.mubr.bf16.gmra.mxu0 %v229
  %v268 = vpop.f32.mrf.mxu0
  %v269 = vadd.f32 0.0, %v268
  %v270 = vpop.f32.mrf.mxu0
  %v271 = vpop.f32.mrf.mxu0
  %v272 = vadd.f32 0.0, %v271
  %v273 = vpop.f32.mrf.mxu0
  %274 = vdwg.mxu0
  %v275 = vadd.f32 %v207, %v269
  %v276 = vadd.f32 %v208, %v272
  %v277 = vld [vmem:[%s2] sm:$0xf]
  %s278 = scalar_lea.vmem %s4, 32
  %v279 = vld [vmem:[%s278] sm:$0xf]
  %v280 = vld [vmem:[%s278 + $0x4] sm:$0xf]
  %v283 = vunpack.c.l.b16 %v279
  %v284 = vunpack.c.l.b16 %v280
  %v285 = vpack.c.b16 %v284, %v283
  %v287 = vsel %vm39, %v285, 0
  %v290 = vsel %vm43, %v277, 0
  %292 = vmatprep.subr.bf16.mxu0 0
  %293 = vmatpush1.bf16.msra.mxu0 0
  %294 = vmatprep.subr.bf16.mxu0 0
  %295 = vmatpush1.bf16.msra.mxu0 0
  %296 = vmatprep.subr.bf16.mxu0 0
  %297 = vmatpush1.bf16.msra.mxu0 0
  %298 = vmatprep.subr.bf16.mxu0 0
  %299 = vmatpush1.bf16.msra.mxu0 0
  %300 = vmatprep.subr.bf16.mxu0 0
  %301 = vmatpush1.bf16.msra.mxu0 0
  %302 = vmatprep.subr.bf16.mxu0 0
  %303 = vmatpush1.bf16.msra.mxu0 0
  %304 = vmatprep.subr.bf16.mxu0 0
  %305 = vmatpush1.bf16.msra.mxu0 0
  %306 = vmatprep.subr.bf16.mxu0 0
  %307 = vmatpush1.bf16.msra.mxu0 %v290
  %308 = vmatprep.subr.bf16.mxu0 0
  %309 = vmatpush2.bf16.msra.mxu0 0
  %310 = vmatprep.subr.bf16.mxu0 0
  %311 = vmatpush2.bf16.msra.mxu0 0
  %312 = vmatprep.subr.bf16.mxu0 0
  %313 = vmatpush2.bf16.msra.mxu0 0
  %314 = vmatprep.subr.bf16.mxu0 0
  %315 = vmatpush2.bf16.msra.mxu0 0
  %316 = vmatprep.subr.bf16.mxu0 0
  %317 = vmatpush2.bf16.msra.mxu0 0
  %318 = vmatprep.subr.bf16.mxu0 0
  %319 = vmatpush2.bf16.msra.mxu0 0
  %320 = vmatprep.subr.bf16.mxu0 0
  %321 = vmatpush2.bf16.msra.mxu0 0
  %322 = vmatprep.subr.bf16.mxu0 0
  %323 = vmatpush2.bf16.msra.mxu0 0
  %324 = vmatprep.mubr.bf16.mxu0 0
  %325 = vmatmul.mubr.bf16.gmra.mxu0 %v287
  %v326 = vpop.f32.mrf.mxu0
  %v327 = vadd.f32 0.0, %v326
  %v328 = vpop.f32.mrf.mxu0
  %v329 = vpop.f32.mrf.mxu0
  %v330 = vadd.f32 0.0, %v329
  %v331 = vpop.f32.mrf.mxu0
  %332 = vdwg.mxu0
  %v333 = vadd.f32 %v275, %v327
  %v334 = vadd.f32 %v276, %v330
  %v335 = vld [vmem:[%s3] sm:$0xf]
  %s336 = scalar_lea.vmem %s4, 40
  %v337 = vld [vmem:[%s336] sm:$0xf]
  %v338 = vld [vmem:[%s336 + $0x4] sm:$0xf]
  %v341 = vunpack.c.l.b16 %v337
  %v342 = vunpack.c.l.b16 %v338
  %v343 = vpack.c.b16 %v342, %v341
  %v345 = vsel %vm39, %v343, 0
  %v348 = vsel %vm43, %v335, 0
  %350 = vmatprep.subr.bf16.mxu0 0
  %351 = vmatpush1.bf16.msra.mxu0 0
  %352 = vmatprep.subr.bf16.mxu0 0
  %353 = vmatpush1.bf16.msra.mxu0 0
  %354 = vmatprep.subr.bf16.mxu0 0
  %355 = vmatpush1.bf16.msra.mxu0 0
  %356 = vmatprep.subr.bf16.mxu0 0
  %357 = vmatpush1.bf16.msra.mxu0 0
  %358 = vmatprep.subr.bf16.mxu0 0
  %359 = vmatpush1.bf16.msra.mxu0 0
  %360 = vmatprep.subr.bf16.mxu0 0
  %361 = vmatpush1.bf16.msra.mxu0 0
  %362 = vmatprep.subr.bf16.mxu0 0
  %363 = vmatpush1.bf16.msra.mxu0 0
  %364 = vmatprep.subr.bf16.mxu0 0
  %365 = vmatpush1.bf16.msra.mxu0 %v348
  %366 = vmatprep.subr.bf16.mxu0 0
  %367 = vmatpush2.bf16.msra.mxu0 0
  %368 = vmatprep.subr.bf16.mxu0 0
  %369 = vmatpush2.bf16.msra.mxu0 0
  %370 = vmatprep.subr.bf16.mxu0 0
  %371 = vmatpush2.bf16.msra.mxu0 0
  %372 = vmatprep.subr.bf16.mxu0 0
  %373 = vmatpush2.bf16.msra.mxu0 0
  %374 = vmatprep.subr.bf16.mxu0 0
  %375 = vmatpush2.bf16.msra.mxu0 0
  %376 = vmatprep.subr.bf16.mxu0 0
  %377 = vmatpush2.bf16.msra.mxu0 0
  %378 = vmatprep.subr.bf16.mxu0 0
  %379 = vmatpush2.bf16.msra.mxu0 0
  %380 = vmatprep.subr.bf16.mxu0 0
  %381 = vmatpush2.bf16.msra.mxu0 0
  %382 = vmatprep.mubr.bf16.mxu0 0
  %383 = vmatmul.mubr.bf16.gmra.mxu0 %v345
  %v384 = vpop.f32.mrf.mxu0
  %v385 = vadd.f32 0.0, %v384
  %v386 = vpop.f32.mrf.mxu0
  %v387 = vpop.f32.mrf.mxu0
  %v388 = vadd.f32 0.0, %v387
  %v389 = vpop.f32.mrf.mxu0
  %390 = vdwg.mxu0
  %v391 = vadd.f32 %v333, %v385
  %v392 = vadd.f32 %v334, %v388
  %v393 = vld [vmem:[%s2] sm:$0xff]
  %s394 = scalar_lea.vmem %s4, 48
  %v395 = vld [vmem:[%s394] sm:$0xf]
  %v396 = vld [vmem:[%s394 + $0x4] sm:$0xf]
  %v399 = vunpack.c.l.b16 %v395
  %v400 = vunpack.c.l.b16 %v396
  %v401 = vpack.c.b16 %v400, %v399
  %v403 = vunpack.c.l.b16 %v393
  %v404 = vunpack.c.h.b16 %v393
  %v405 = vpack.c.b16 %v403, %v403
  %v406 = vpack.c.b16 %v404, %v404
  %407 = vrot.lane.b32.xlu0 %v405, 127
  %v408 = vpop.permute.xlu0 %407
  %409 = vrot.lane.b32.xlu0 %v406, 127
  %v410 = vpop.permute.xlu0 %409
  %v411 = vsel %vm158, %v408, %v410
  %v413 = vsel %vm39, %v401, 0
  %v416 = vsel %vm43, %v411, 0
  %418 = vmatprep.subr.bf16.mxu0 0
  %419 = vmatpush1.bf16.msra.mxu0 0
  %420 = vmatprep.subr.bf16.mxu0 0
  %421 = vmatpush1.bf16.msra.mxu0 0
  %422 = vmatprep.subr.bf16.mxu0 0
  %423 = vmatpush1.bf16.msra.mxu0 0
  %424 = vmatprep.subr.bf16.mxu0 0
  %425 = vmatpush1.bf16.msra.mxu0 0
  %426 = vmatprep.subr.bf16.mxu0 0
  %427 = vmatpush1.bf16.msra.mxu0 0
  %428 = vmatprep.subr.bf16.mxu0 0
  %429 = vmatpush1.bf16.msra.mxu0 0
  %430 = vmatprep.subr.bf16.mxu0 0
  %431 = vmatpush1.bf16.msra.mxu0 0
  %432 = vmatprep.subr.bf16.mxu0 0
  %433 = vmatpush1.bf16.msra.mxu0 %v416
  %434 = vmatprep.subr.bf16.mxu0 0
  %435 = vmatpush2.bf16.msra.mxu0 0
  %436 = vmatprep.subr.bf16.mxu0 0
  %437 = vmatpush2.bf16.msra.mxu0 0
  %438 = vmatprep.subr.bf16.mxu0 0
  %439 = vmatpush2.bf16.msra.mxu0 0
  %440 = vmatprep.subr.bf16.mxu0 0
  %441 = vmatpush2.bf16.msra.mxu0 0
  %442 = vmatprep.subr.bf16.mxu0 0
  %443 = vmatpush2.bf16.msra.mxu0 0
  %444 = vmatprep.subr.bf16.mxu0 0
  %445 = vmatpush2.bf16.msra.mxu0 0
  %446 = vmatprep.subr.bf16.mxu0 0
  %447 = vmatpush2.bf16.msra.mxu0 0
  %448 = vmatprep.subr.bf16.mxu0 0
  %449 = vmatpush2.bf16.msra.mxu0 0
  %450 = vmatprep.mubr.bf16.mxu0 0
  %451 = vmatmul.mubr.bf16.gmra.mxu0 %v413
  %v452 = vpop.f32.mrf.mxu0
  %v453 = vadd.f32 0.0, %v452
  %v454 = vpop.f32.mrf.mxu0
  %v455 = vpop.f32.mrf.mxu0
  %v456 = vadd.f32 0.0, %v455
  %v457 = vpop.f32.mrf.mxu0
  %458 = vdwg.mxu0
  %v459 = vadd.f32 %v391, %v453
  %v460 = vadd.f32 %v392, %v456
  %v461 = vld [vmem:[%s3] sm:$0xff]
  %s462 = scalar_lea.vmem %s4, 56
  %v463 = vld [vmem:[%s462] sm:$0xf]
  %v464 = vld [vmem:[%s462 + $0x4] sm:$0xf]
  %v467 = vunpack.c.l.b16 %v463
  %v468 = vunpack.c.l.b16 %v464
  %v469 = vpack.c.b16 %v468, %v467
  %v471 = vunpack.c.l.b16 %v461
  %v472 = vunpack.c.h.b16 %v461
  %v473 = vpack.c.b16 %v471, %v471
  %v474 = vpack.c.b16 %v472, %v472
  %475 = vrot.lane.b32.xlu0 %v473, 127
  %v476 = vpop.permute.xlu0 %475
  %477 = vrot.lane.b32.xlu0 %v474, 127
  %v478 = vpop.permute.xlu0 %477
  %v479 = vsel %vm158, %v476, %v478
  %v481 = vsel %vm39, %v469, 0
  %v484 = vsel %vm43, %v479, 0
  %486 = vmatprep.subr.bf16.mxu0 0
  %487 = vmatpush1.bf16.msra.mxu0 0
  %488 = vmatprep.subr.bf16.mxu0 0
  %489 = vmatpush1.bf16.msra.mxu0 0
  %490 = vmatprep.subr.bf16.mxu0 0
  %491 = vmatpush1.bf16.msra.mxu0 0
  %492 = vmatprep.subr.bf16.mxu0 0
  %493 = vmatpush1.bf16.msra.mxu0 0
  %494 = vmatprep.subr.bf16.mxu0 0
  %495 = vmatpush1.bf16.msra.mxu0 0
  %496 = vmatprep.subr.bf16.mxu0 0
  %497 = vmatpush1.bf16.msra.mxu0 0
  %498 = vmatprep.subr.bf16.mxu0 0
  %499 = vmatpush1.bf16.msra.mxu0 0
  %500 = vmatprep.subr.bf16.mxu0 0
  %501 = vmatpush1.bf16.msra.mxu0 %v484
  %502 = vmatprep.subr.bf16.mxu0 0
  %503 = vmatpush2.bf16.msra.mxu0 0
  %504 = vmatprep.subr.bf16.mxu0 0
  %505 = vmatpush2.bf16.msra.mxu0 0
  %506 = vmatprep.subr.bf16.mxu0 0
  %507 = vmatpush2.bf16.msra.mxu0 0
  %508 = vmatprep.subr.bf16.mxu0 0
  %509 = vmatpush2.bf16.msra.mxu0 0
  %510 = vmatprep.subr.bf16.mxu0 0
  %511 = vmatpush2.bf16.msra.mxu0 0
  %512 = vmatprep.subr.bf16.mxu0 0
  %513 = vmatpush2.bf16.msra.mxu0 0
  %514 = vmatprep.subr.bf16.mxu0 0
  %515 = vmatpush2.bf16.msra.mxu0 0
  %516 = vmatprep.subr.bf16.mxu0 0
  %517 = vmatpush2.bf16.msra.mxu0 0
  %518 = vmatprep.mubr.bf16.mxu0 0
  %519 = vmatmul.mubr.bf16.gmra.mxu0 %v481
  %v520 = vpop.f32.mrf.mxu0
  %v521 = vadd.f32 0.0, %v520
  %v522 = vpop.f32.mrf.mxu0
  %v523 = vpop.f32.mrf.mxu0
  %v524 = vadd.f32 0.0, %v523
  %v525 = vpop.f32.mrf.mxu0
  %526 = vdwg.mxu0
  %v527 = vadd.f32 %v459, %v521
  %v528 = vadd.f32 %v460, %v524
  %s529 = scalar_lea.vmem %s4, 64
  %v530 = vld [vmem:[%s529] sm:$0xf]
  %v531 = vld [vmem:[%s529 + $0x4] sm:$0xf]
  %v534 = vunpack.c.l.b16 %v530
  %v535 = vunpack.c.l.b16 %v531
  %v536 = vpack.c.b16 %v535, %v534
  %537 = vrot.lane.b32.xlu0 %v152, 123
  %v538 = vpop.permute.xlu0 %537
  %539 = vrot.lane.b32.xlu0 %v153, 123
  %v540 = vpop.permute.xlu0 %539
  %vm541 = vcmask 1006592
  %v542 = vsel %vm541, %v538, %v540
  %v544 = vsel %vm39, %v536, 0
  %v547 = vsel %vm43, %v542, 0
  %549 = vmatprep.subr.bf16.mxu0 0
  %550 = vmatpush1.bf16.msra.mxu0 0
  %551 = vmatprep.subr.bf16.mxu0 0
  %552 = vmatpush1.bf16.msra.mxu0 0
  %553 = vmatprep.subr.bf16.mxu0 0
  %554 = vmatpush1.bf16.msra.mxu0 0
  %555 = vmatprep.subr.bf16.mxu0 0
  %556 = vmatpush1.bf16.msra.mxu0 0
  %557 = vmatprep.subr.bf16.mxu0 0
  %558 = vmatpush1.bf16.msra.mxu0 0
  %559 = vmatprep.subr.bf16.mxu0 0
  %560 = vmatpush1.bf16.msra.mxu0 0
  %561 = vmatprep.subr.bf16.mxu0 0
  %562 = vmatpush1.bf16.msra.mxu0 0
  %563 = vmatprep.subr.bf16.mxu0 0
  %564 = vmatpush1.bf16.msra.mxu0 %v547
  %565 = vmatprep.subr.bf16.mxu0 0
  %566 = vmatpush2.bf16.msra.mxu0 0
  %567 = vmatprep.subr.bf16.mxu0 0
  %568 = vmatpush2.bf16.msra.mxu0 0
  %569 = vmatprep.subr.bf16.mxu0 0
  %570 = vmatpush2.bf16.msra.mxu0 0
  %571 = vmatprep.subr.bf16.mxu0 0
  %572 = vmatpush2.bf16.msra.mxu0 0
  %573 = vmatprep.subr.bf16.mxu0 0
  %574 = vmatpush2.bf16.msra.mxu0 0
  %575 = vmatprep.subr.bf16.mxu0 0
  %576 = vmatpush2.bf16.msra.mxu0 0
  %577 = vmatprep.subr.bf16.mxu0 0
  %578 = vmatpush2.bf16.msra.mxu0 0
  %579 = vmatprep.subr.bf16.mxu0 0
  %580 = vmatpush2.bf16.msra.mxu0 0
  %581 = vmatprep.mubr.bf16.mxu0 0
  %582 = vmatmul.mubr.bf16.gmra.mxu0 %v544
  %v583 = vpop.f32.mrf.mxu0
  %v584 = vadd.f32 0.0, %v583
  %v585 = vpop.f32.mrf.mxu0
  %v586 = vpop.f32.mrf.mxu0
  %v587 = vadd.f32 0.0, %v586
  %v588 = vpop.f32.mrf.mxu0
  %589 = vdwg.mxu0
  %v590 = vadd.f32 %v527, %v584
  %v591 = vadd.f32 %v528, %v587
  %s592 = scalar_lea.vmem %s4, 72
  %v593 = vld [vmem:[%s592] sm:$0xf]
  %v594 = vld [vmem:[%s592 + $0x4] sm:$0xf]
  %v597 = vunpack.c.l.b16 %v593
  %v598 = vunpack.c.l.b16 %v594
  %v599 = vpack.c.b16 %v598, %v597
  %600 = vrot.lane.b32.xlu0 %v221, 123
  %v601 = vpop.permute.xlu0 %600
  %602 = vrot.lane.b32.xlu0 %v222, 123
  %v603 = vpop.permute.xlu0 %602
  %v604 = vsel %vm541, %v601, %v603
  %v606 = vsel %vm39, %v599, 0
  %v609 = vsel %vm43, %v604, 0
  %611 = vmatprep.subr.bf16.mxu0 0
  %612 = vmatpush1.bf16.msra.mxu0 0
  %613 = vmatprep.subr.bf16.mxu0 0
  %614 = vmatpush1.bf16.msra.mxu0 0
  %615 = vmatprep.subr.bf16.mxu0 0
  %616 = vmatpush1.bf16.msra.mxu0 0
  %617 = vmatprep.subr.bf16.mxu0 0
  %618 = vmatpush1.bf16.msra.mxu0 0
  %619 = vmatprep.subr.bf16.mxu0 0
  %620 = vmatpush1.bf16.msra.mxu0 0
  %621 = vmatprep.subr.bf16.mxu0 0
  %622 = vmatpush1.bf16.msra.mxu0 0
  %623 = vmatprep.subr.bf16.mxu0 0
  %624 = vmatpush1.bf16.msra.mxu0 0
  %625 = vmatprep.subr.bf16.mxu0 0
  %626 = vmatpush1.bf16.msra.mxu0 %v609
  %627 = vmatprep.subr.bf16.mxu0 0
  %628 = vmatpush2.bf16.msra.mxu0 0
  %629 = vmatprep.subr.bf16.mxu0 0
  %630 = vmatpush2.bf16.msra.mxu0 0
  %631 = vmatprep.subr.bf16.mxu0 0
  %632 = vmatpush2.bf16.msra.mxu0 0
  %633 = vmatprep.subr.bf16.mxu0 0
  %634 = vmatpush2.bf16.msra.mxu0 0
  %635 = vmatprep.subr.bf16.mxu0 0
  %636 = vmatpush2.bf16.msra.mxu0 0
  %637 = vmatprep.subr.bf16.mxu0 0
  %638 = vmatpush2.bf16.msra.mxu0 0
  %639 = vmatprep.subr.bf16.mxu0 0
  %640 = vmatpush2.bf16.msra.mxu0 0
  %641 = vmatprep.subr.bf16.mxu0 0
  %642 = vmatpush2.bf16.msra.mxu0 0
  %643 = vmatprep.mubr.bf16.mxu0 0
  %644 = vmatmul.mubr.bf16.gmra.mxu0 %v606
  %v645 = vpop.f32.mrf.mxu0
  %v646 = vadd.f32 0.0, %v645
  %v647 = vpop.f32.mrf.mxu0
  %v648 = vpop.f32.mrf.mxu0
  %v649 = vadd.f32 0.0, %v648
  %v650 = vpop.f32.mrf.mxu0
  %651 = vdwg.mxu0
  %v652 = vadd.f32 %v590, %v646
  %v653 = vadd.f32 %v591, %v649
  %s654 = scalar_lea.vmem %s4, 80
  %v655 = vld [vmem:[%s654] sm:$0xf]
  %v656 = vld [vmem:[%s654 + $0x4] sm:$0xf]
  %v659 = vunpack.c.l.b16 %v655
  %v660 = vunpack.c.l.b16 %v656
  %v661 = vpack.c.b16 %v660, %v659
  %662 = vrot.lane.b32.xlu0 %v152, 122
  %v663 = vpop.permute.xlu0 %662
  %664 = vrot.lane.b32.xlu0 %v153, 122
  %v665 = vpop.permute.xlu0 %664
  %vm666 = vcmask 998400
  %v667 = vsel %vm666, %v663, %v665
  %v669 = vsel %vm39, %v661, 0
  %v672 = vsel %vm43, %v667, 0
  %674 = vmatprep.subr.bf16.mxu0 0
  %675 = vmatpush1.bf16.msra.mxu0 0
  %676 = vmatprep.subr.bf16.mxu0 0
  %677 = vmatpush1.bf16.msra.mxu0 0
  %678 = vmatprep.subr.bf16.mxu0 0
  %679 = vmatpush1.bf16.msra.mxu0 0
  %680 = vmatprep.subr.bf16.mxu0 0
  %681 = vmatpush1.bf16.msra.mxu0 0
  %682 = vmatprep.subr.bf16.mxu0 0
  %683 = vmatpush1.bf16.msra.mxu0 0
  %684 = vmatprep.subr.bf16.mxu0 0
  %685 = vmatpush1.bf16.msra.mxu0 0
  %686 = vmatprep.subr.bf16.mxu0 0
  %687 = vmatpush1.bf16.msra.mxu0 0
  %688 = vmatprep.subr.bf16.mxu0 0
  %689 = vmatpush1.bf16.msra.mxu0 %v672
  %690 = vmatprep.subr.bf16.mxu0 0
  %691 = vmatpush2.bf16.msra.mxu0 0
  %692 = vmatprep.subr.bf16.mxu0 0
  %693 = vmatpush2.bf16.msra.mxu0 0
  %694 = vmatprep.subr.bf16.mxu0 0
  %695 = vmatpush2.bf16.msra.mxu0 0
  %696 = vmatprep.subr.bf16.mxu0 0
  %697 = vmatpush2.bf16.msra.mxu0 0
  %698 = vmatprep.subr.bf16.mxu0 0
  %699 = vmatpush2.bf16.msra.mxu0 0
  %700 = vmatprep.subr.bf16.mxu0 0
  %701 = vmatpush2.bf16.msra.mxu0 0
  %702 = vmatprep.subr.bf16.mxu0 0
  %703 = vmatpush2.bf16.msra.mxu0 0
  %704 = vmatprep.subr.bf16.mxu0 0
  %705 = vmatpush2.bf16.msra.mxu0 0
  %706 = vmatprep.mubr.bf16.mxu0 0
  %707 = vmatmul.mubr.bf16.gmra.mxu0 %v669
  %v708 = vpop.f32.mrf.mxu0
  %v709 = vadd.f32 0.0, %v708
  %v710 = vpop.f32.mrf.mxu0
  %v711 = vpop.f32.mrf.mxu0
  %v712 = vadd.f32 0.0, %v711
  %v713 = vpop.f32.mrf.mxu0
  %714 = vdwg.mxu0
  %v715 = vadd.f32 %v652, %v709
  %v716 = vadd.f32 %v653, %v712
  %s717 = scalar_lea.vmem %s4, 88
  %v718 = vld [vmem:[%s717] sm:$0xf]
  %v719 = vld [vmem:[%s717 + $0x4] sm:$0xf]
  %v722 = vunpack.c.l.b16 %v718
  %v723 = vunpack.c.l.b16 %v719
  %v724 = vpack.c.b16 %v723, %v722
  %725 = vrot.lane.b32.xlu0 %v221, 122
  %v726 = vpop.permute.xlu0 %725
  %727 = vrot.lane.b32.xlu0 %v222, 122
  %v728 = vpop.permute.xlu0 %727
  %v729 = vsel %vm666, %v726, %v728
  %v731 = vsel %vm39, %v724, 0
  %v734 = vsel %vm43, %v729, 0
  %736 = vmatprep.subr.bf16.mxu0 0
  %737 = vmatpush1.bf16.msra.mxu0 0
  %738 = vmatprep.subr.bf16.mxu0 0
  %739 = vmatpush1.bf16.msra.mxu0 0
  %740 = vmatprep.subr.bf16.mxu0 0
  %741 = vmatpush1.bf16.msra.mxu0 0
  %742 = vmatprep.subr.bf16.mxu0 0
  %743 = vmatpush1.bf16.msra.mxu0 0
  %744 = vmatprep.subr.bf16.mxu0 0
  %745 = vmatpush1.bf16.msra.mxu0 0
  %746 = vmatprep.subr.bf16.mxu0 0
  %747 = vmatpush1.bf16.msra.mxu0 0
  %748 = vmatprep.subr.bf16.mxu0 0
  %749 = vmatpush1.bf16.msra.mxu0 0
  %750 = vmatprep.subr.bf16.mxu0 0
  %751 = vmatpush1.bf16.msra.mxu0 %v734
  %752 = vmatprep.subr.bf16.mxu0 0
  %753 = vmatpush2.bf16.msra.mxu0 0
  %754 = vmatprep.subr.bf16.mxu0 0
  %755 = vmatpush2.bf16.msra.mxu0 0
  %756 = vmatprep.subr.bf16.mxu0 0
  %757 = vmatpush2.bf16.msra.mxu0 0
  %758 = vmatprep.subr.bf16.mxu0 0
  %759 = vmatpush2.bf16.msra.mxu0 0
  %760 = vmatprep.subr.bf16.mxu0 0
  %761 = vmatpush2.bf16.msra.mxu0 0
  %762 = vmatprep.subr.bf16.mxu0 0
  %763 = vmatpush2.bf16.msra.mxu0 0
  %764 = vmatprep.subr.bf16.mxu0 0
  %765 = vmatpush2.bf16.msra.mxu0 0
  %766 = vmatprep.subr.bf16.mxu0 0
  %767 = vmatpush2.bf16.msra.mxu0 0
  %768 = vmatprep.mubr.bf16.mxu0 0
  %769 = vmatmul.mubr.bf16.gmra.mxu0 %v731
  %v770 = vpop.f32.mrf.mxu0
  %v771 = vadd.f32 0.0, %v770
  %v772 = vpop.f32.mrf.mxu0
  %v773 = vpop.f32.mrf.mxu0
  %v774 = vadd.f32 0.0, %v773
  %v775 = vpop.f32.mrf.mxu0
  %776 = vdwg.mxu0
  %v777 = vadd.f32 %v715, %v771
  %v778 = vadd.f32 %v716, %v774
  %s779 = scalar_lea.vmem %s4, 96
  %v780 = vld [vmem:[%s779] sm:$0xf]
  %v781 = vld [vmem:[%s779 + $0x4] sm:$0xf]
  %v784 = vunpack.c.l.b16 %v780
  %v785 = vunpack.c.l.b16 %v781
  %v786 = vpack.c.b16 %v785, %v784
  %787 = vrot.lane.b32.xlu0 %v405, 123
  %v788 = vpop.permute.xlu0 %787
  %789 = vrot.lane.b32.xlu0 %v406, 123
  %v790 = vpop.permute.xlu0 %789
  %v791 = vsel %vm541, %v788, %v790
  %v793 = vsel %vm39, %v786, 0
  %v796 = vsel %vm43, %v791, 0
  %798 = vmatprep.subr.bf16.mxu0 0
  %799 = vmatpush1.bf16.msra.mxu0 0
  %800 = vmatprep.subr.bf16.mxu0 0
  %801 = vmatpush1.bf16.msra.mxu0 0
  %802 = vmatprep.subr.bf16.mxu0 0
  %803 = vmatpush1.bf16.msra.mxu0 0
  %804 = vmatprep.subr.bf16.mxu0 0
  %805 = vmatpush1.bf16.msra.mxu0 0
  %806 = vmatprep.subr.bf16.mxu0 0
  %807 = vmatpush1.bf16.msra.mxu0 0
  %808 = vmatprep.subr.bf16.mxu0 0
  %809 = vmatpush1.bf16.msra.mxu0 0
  %810 = vmatprep.subr.bf16.mxu0 0
  %811 = vmatpush1.bf16.msra.mxu0 0
  %812 = vmatprep.subr.bf16.mxu0 0
  %813 = vmatpush1.bf16.msra.mxu0 %v796
  %814 = vmatprep.subr.bf16.mxu0 0
  %815 = vmatpush2.bf16.msra.mxu0 0
  %816 = vmatprep.subr.bf16.mxu0 0
  %817 = vmatpush2.bf16.msra.mxu0 0
  %818 = vmatprep.subr.bf16.mxu0 0
  %819 = vmatpush2.bf16.msra.mxu0 0
  %820 = vmatprep.subr.bf16.mxu0 0
  %821 = vmatpush2.bf16.msra.mxu0 0
  %822 = vmatprep.subr.bf16.mxu0 0
  %823 = vmatpush2.bf16.msra.mxu0 0
  %824 = vmatprep.subr.bf16.mxu0 0
  %825 = vmatpush2.bf16.msra.mxu0 0
  %826 = vmatprep.subr.bf16.mxu0 0
  %827 = vmatpush2.bf16.msra.mxu0 0
  %828 = vmatprep.subr.bf16.mxu0 0
  %829 = vmatpush2.bf16.msra.mxu0 0
  %830 = vmatprep.mubr.bf16.mxu0 0
  %831 = vmatmul.mubr.bf16.gmra.mxu0 %v793
  %v832 = vpop.f32.mrf.mxu0
  %v833 = vadd.f32 0.0, %v832
  %v834 = vpop.f32.mrf.mxu0
  %v835 = vpop.f32.mrf.mxu0
  %v836 = vadd.f32 0.0, %v835
  %v837 = vpop.f32.mrf.mxu0
  %838 = vdwg.mxu0
  %v839 = vadd.f32 %v777, %v833
  %v840 = vadd.f32 %v778, %v836
  %s841 = scalar_lea.vmem %s4, 104
  %v842 = vld [vmem:[%s841] sm:$0xf]
  %v843 = vld [vmem:[%s841 + $0x4] sm:$0xf]
  %v846 = vunpack.c.l.b16 %v842
  %v847 = vunpack.c.l.b16 %v843
  %v848 = vpack.c.b16 %v847, %v846
  %849 = vrot.lane.b32.xlu0 %v473, 123
  %v850 = vpop.permute.xlu0 %849
  %851 = vrot.lane.b32.xlu0 %v474, 123
  %v852 = vpop.permute.xlu0 %851
  %v853 = vsel %vm541, %v850, %v852
  %v855 = vsel %vm39, %v848, 0
  %v858 = vsel %vm43, %v853, 0
  %860 = vmatprep.subr.bf16.mxu0 0
  %861 = vmatpush1.bf16.msra.mxu0 0
  %862 = vmatprep.subr.bf16.mxu0 0
  %863 = vmatpush1.bf16.msra.mxu0 0
  %864 = vmatprep.subr.bf16.mxu0 0
  %865 = vmatpush1.bf16.msra.mxu0 0
  %866 = vmatprep.subr.bf16.mxu0 0
  %867 = vmatpush1.bf16.msra.mxu0 0
  %868 = vmatprep.subr.bf16.mxu0 0
  %869 = vmatpush1.bf16.msra.mxu0 0
  %870 = vmatprep.subr.bf16.mxu0 0
  %871 = vmatpush1.bf16.msra.mxu0 0
  %872 = vmatprep.subr.bf16.mxu0 0
  %873 = vmatpush1.bf16.msra.mxu0 0
  %874 = vmatprep.subr.bf16.mxu0 0
  %875 = vmatpush1.bf16.msra.mxu0 %v858
  %876 = vmatprep.subr.bf16.mxu0 0
  %877 = vmatpush2.bf16.msra.mxu0 0
  %878 = vmatprep.subr.bf16.mxu0 0
  %879 = vmatpush2.bf16.msra.mxu0 0
  %880 = vmatprep.subr.bf16.mxu0 0
  %881 = vmatpush2.bf16.msra.mxu0 0
  %882 = vmatprep.subr.bf16.mxu0 0
  %883 = vmatpush2.bf16.msra.mxu0 0
  %884 = vmatprep.subr.bf16.mxu0 0
  %885 = vmatpush2.bf16.msra.mxu0 0
  %886 = vmatprep.subr.bf16.mxu0 0
  %887 = vmatpush2.bf16.msra.mxu0 0
  %888 = vmatprep.subr.bf16.mxu0 0
  %889 = vmatpush2.bf16.msra.mxu0 0
  %890 = vmatprep.subr.bf16.mxu0 0
  %891 = vmatpush2.bf16.msra.mxu0 0
  %892 = vmatprep.mubr.bf16.mxu0 0
  %893 = vmatmul.mubr.bf16.gmra.mxu0 %v855
  %v894 = vpop.f32.mrf.mxu0
  %v895 = vadd.f32 0.0, %v894
  %v896 = vpop.f32.mrf.mxu0
  %v897 = vpop.f32.mrf.mxu0
  %v898 = vadd.f32 0.0, %v897
  %v899 = vpop.f32.mrf.mxu0
  %900 = vdwg.mxu0
  %v901 = vadd.f32 %v839, %v895
  %v902 = vadd.f32 %v840, %v898
  %s903 = scalar_lea.vmem %s4, 112
  %v904 = vld [vmem:[%s903] sm:$0xf]
  %v905 = vld [vmem:[%s903 + $0x4] sm:$0xf]
  %v908 = vunpack.c.l.b16 %v904
  %v909 = vunpack.c.l.b16 %v905
  %v910 = vpack.c.b16 %v909, %v908
  %911 = vrot.lane.b32.xlu0 %v405, 122
  %v912 = vpop.permute.xlu0 %911
  %913 = vrot.lane.b32.xlu0 %v406, 122
  %v914 = vpop.permute.xlu0 %913
  %v915 = vsel %vm666, %v912, %v914
  %v917 = vsel %vm39, %v910, 0
  %v920 = vsel %vm43, %v915, 0
  %922 = vmatprep.subr.bf16.mxu0 0
  %923 = vmatpush1.bf16.msra.mxu0 0
  %924 = vmatprep.subr.bf16.mxu0 0
  %925 = vmatpush1.bf16.msra.mxu0 0
  %926 = vmatprep.subr.bf16.mxu0 0
  %927 = vmatpush1.bf16.msra.mxu0 0
  %928 = vmatprep.subr.bf16.mxu0 0
  %929 = vmatpush1.bf16.msra.mxu0 0
  %930 = vmatprep.subr.bf16.mxu0 0
  %931 = vmatpush1.bf16.msra.mxu0 0
  %932 = vmatprep.subr.bf16.mxu0 0
  %933 = vmatpush1.bf16.msra.mxu0 0
  %934 = vmatprep.subr.bf16.mxu0 0
  %935 = vmatpush1.bf16.msra.mxu0 0
  %936 = vmatprep.subr.bf16.mxu0 0
  %937 = vmatpush1.bf16.msra.mxu0 %v920
  %938 = vmatprep.subr.bf16.mxu0 0
  %939 = vmatpush2.bf16.msra.mxu0 0
  %940 = vmatprep.subr.bf16.mxu0 0
  %941 = vmatpush2.bf16.msra.mxu0 0
  %942 = vmatprep.subr.bf16.mxu0 0
  %943 = vmatpush2.bf16.msra.mxu0 0
  %944 = vmatprep.subr.bf16.mxu0 0
  %945 = vmatpush2.bf16.msra.mxu0 0
  %946 = vmatprep.subr.bf16.mxu0 0
  %947 = vmatpush2.bf16.msra.mxu0 0
  %948 = vmatprep.subr.bf16.mxu0 0
  %949 = vmatpush2.bf16.msra.mxu0 0
  %950 = vmatprep.subr.bf16.mxu0 0
  %951 = vmatpush2.bf16.msra.mxu0 0
  %952 = vmatprep.subr.bf16.mxu0 0
  %953 = vmatpush2.bf16.msra.mxu0 0
  %954 = vmatprep.mubr.bf16.mxu0 0
  %955 = vmatmul.mubr.bf16.gmra.mxu0 %v917
  %v956 = vpop.f32.mrf.mxu0
  %v957 = vadd.f32 0.0, %v956
  %v958 = vpop.f32.mrf.mxu0
  %v959 = vpop.f32.mrf.mxu0
  %v960 = vadd.f32 0.0, %v959
  %v961 = vpop.f32.mrf.mxu0
  %962 = vdwg.mxu0
  %v963 = vadd.f32 %v901, %v957
  %v964 = vadd.f32 %v902, %v960
  %s965 = scalar_lea.vmem %s4, 120
  %v966 = vld [vmem:[%s965] sm:$0xf]
  %v967 = vld [vmem:[%s965 + $0x4] sm:$0xf]
  %v970 = vunpack.c.l.b16 %v966
  %v971 = vunpack.c.l.b16 %v967
  %v972 = vpack.c.b16 %v971, %v970
  %973 = vrot.lane.b32.xlu0 %v473, 122
  %v974 = vpop.permute.xlu0 %973
  %975 = vrot.lane.b32.xlu0 %v474, 122
  %v976 = vpop.permute.xlu0 %975
  %v977 = vsel %vm666, %v974, %v976
  %v979 = vsel %vm39, %v972, 0
  %v982 = vsel %vm43, %v977, 0
  %984 = vmatprep.subr.bf16.mxu0 0
  %985 = vmatpush1.bf16.msra.mxu0 0
  %986 = vmatprep.subr.bf16.mxu0 0
  %987 = vmatpush1.bf16.msra.mxu0 0
  %988 = vmatprep.subr.bf16.mxu0 0
  %989 = vmatpush1.bf16.msra.mxu0 0
  %990 = vmatprep.subr.bf16.mxu0 0
  %991 = vmatpush1.bf16.msra.mxu0 0
  %992 = vmatprep.subr.bf16.mxu0 0
  %993 = vmatpush1.bf16.msra.mxu0 0
  %994 = vmatprep.subr.bf16.mxu0 0
  %995 = vmatpush1.bf16.msra.mxu0 0
  %996 = vmatprep.subr.bf16.mxu0 0
  %997 = vmatpush1.bf16.msra.mxu0 0
  %998 = vmatprep.subr.bf16.mxu0 0
  %999 = vmatpush1.bf16.msra.mxu0 %v982
  %1000 = vmatprep.subr.bf16.mxu0 0
  %1001 = vmatpush2.bf16.msra.mxu0 0
  %1002 = vmatprep.subr.bf16.mxu0 0
  %1003 = vmatpush2.bf16.msra.mxu0 0
  %1004 = vmatprep.subr.bf16.mxu0 0
  %1005 = vmatpush2.bf16.msra.mxu0 0
  %1006 = vmatprep.subr.bf16.mxu0 0
  %1007 = vmatpush2.bf16.msra.mxu0 0
  %1008 = vmatprep.subr.bf16.mxu0 0
  %1009 = vmatpush2.bf16.msra.mxu0 0
  %1010 = vmatprep.subr.bf16.mxu0 0
  %1011 = vmatpush2.bf16.msra.mxu0 0
  %1012 = vmatprep.subr.bf16.mxu0 0
  %1013 = vmatpush2.bf16.msra.mxu0 0
  %1014 = vmatprep.subr.bf16.mxu0 0
  %1015 = vmatpush2.bf16.msra.mxu0 0
  %1016 = vmatprep.mubr.bf16.mxu0 0
  %1017 = vmatmul.mubr.bf16.gmra.mxu0 %v979
  %v1018 = vpop.f32.mrf.mxu0
  %v1019 = vadd.f32 0.0, %v1018
  %v1020 = vpop.f32.mrf.mxu0
  %v1021 = vpop.f32.mrf.mxu0
  %v1022 = vadd.f32 0.0, %v1021
  %v1023 = vpop.f32.mrf.mxu0
  %1024 = vdwg.mxu0
  %v1025 = vadd.f32 %v963, %v1019
  %v1026 = vadd.f32 %v964, %v1022
  %v1027 = vpack.c.bf16 %v1026, %v1025
  %v1029 = vunpack.c.l.b16 %v1027
  %v1030 = vunpack.c.h.b16 %v1027
  %v1031 = vpack.c.b16 %v1029, %v1029
  %v1032 = vpack.c.b16 %v1030, %v1030
  %1035 = vst [vmem:[%s6] sm:$0xf] %v1031
  %1036 = vst [vmem:[%s6 + $0x4] sm:$0xf] %v1032
  %v1037 = vld [vmem:[%s5] sm:$0x1]
  %v1039 = vlaneseq
  %v1040 = vshrl.u32 %v1039, 7
  %v1041 = vsub.s32 0, %v1040
  %v1042 = vrot.slane %v1037, %v1041
  %v1044 = vmul.f32 %v1025, %v1042
  %v1045 = vmul.f32 %v1026, %v1042
  %1046 = vadd.xlane.f32.xlu0 %v1044
  %v1047 = vpop.xlane.xlu0 %1046
  %1048 = vadd.xlane.f32.xlu0 %v1045
  %v1049 = vpop.xlane.xlu0 %1048
  %vm1050 = vcmask 7168
  %1051 = vst.msk [vmem:[%s7] sm:$0xff] %vm1050, %v1047
  %1052 = vst.msk [vmem:[%s7 + $0x8] sm:$0xff] %vm1050, %v1049
  %v1053 = vmul.f32 %v1044, %v1025
  %v1054 = vmul.f32 %v1045, %v1026
  %1055 = vadd.xlane.f32.xlu0 %v1053
  %v1056 = vpop.xlane.xlu0 %1055
  %1057 = vadd.xlane.f32.xlu0 %v1054
  %v1058 = vpop.xlane.xlu0 %1057
  %1059 = vst.msk [vmem:[%s8] sm:$0xff] %vm1050, %v1056
  %1060 = vst.msk [vmem:[%s8 + $0x8] sm:$0xff] %vm1050, %v1058
  // Predicated region
  $region26: #{patchgan_forward.5} parent=0 // pred_check
    _
  $region27: #{patchgan_forward.5} parent=0 // pred_check_branch
    %1062 = sbr.rel (0) target = $region29
  $region28: #{patchgan_forward.5} parent=0 // pred_region
    _
  $region29: #{patchgan_forward.5} parent=0 // pred_fallthru
    _
  // Predicated region
  $region30: #{patchgan_forward.5} parent=0 // pred_check
    _
  $region31: #{patchgan_forward.5} parent=0 // pred_check_branch
    %1064 = sbr.rel (0) target = $region33
  $region32: #{patchgan_forward.5} parent=0 // pred_region
    _
  $region33: #{patchgan_forward.5} parent=0 // pred_fallthru
    _
  // Predicated region
  $region34: #{patchgan_forward.5} parent=0 // pred_check
    _
  $region35: #{patchgan_forward.5} parent=0 // pred_check_branch
    %1066 = sbr.rel (0) target = $region37
  $region36: #{patchgan_forward.5} parent=0 // pred_region
    _
  $region37: #{patchgan_forward.5} parent=0 // pred_fallthru
    _
  // Predicated region
  $region38: #{patchgan_forward.5} parent=0 // pred_check
    _
  $region39: #{patchgan_forward.5} parent=0 // pred_check_branch
    %1068 = sbr.rel (0) target = $region41
  $region40: #{patchgan_forward.5} parent=0 // pred_region
    _
  $region41: #{patchgan_forward.5} parent=0 // pred_fallthru
    _
  // Predicated region
  $region42: #{patchgan_forward.5} parent=0 // pred_check
    _
  $region43: #{patchgan_forward.5} parent=0 // pred_check_branch
    %1070 = sbr.rel (0) target = $region45
  $region44: #{patchgan_forward.5} parent=0 // pred_region
    _
  $region45: #{patchgan_forward.5} parent=0 // pred_fallthru
    _
  // Predicated region
  $region46: #{patchgan_forward.5} parent=0 // pred_check
    _
  $region47: #{patchgan_forward.5} parent=0 // pred_check_branch
    %1072 = sbr.rel (0) target = $region49
  $region48: #{patchgan_forward.5} parent=0 // pred_region
    _
  $region49: #{patchgan_forward.5} parent=0 // pred_fallthru
    _

// kernel: patchgan_forward.6
$region0: #{patchgan_forward.6}
  #allocation0 [shape = 'u32[]', space=smem, size = 0x4, offset = 0x4, fixed_abs, tag = 'smem constant byte address 0x4 - core index']
  #allocation1 [shape = 'u32[144,128]{1,0:T(1,128)}', space=vmem, size = 0x12000, scoped, tag = 'internal scratch']
  %s0 = inlined_call_operand.vmem [shape: bf16[16,256], index: 0, kind: input, shape index: {}]
  %s1 = inlined_call_operand.vmem [shape: bf16[16,256], index: 1, kind: input, shape index: {}]
  %s2 = inlined_call_operand.vmem [shape: bf16[16,256], index: 2, kind: input, shape index: {}]
  %s3 = inlined_call_operand.vmem [shape: bf16[16,256], index: 3, kind: input, shape index: {}]
  %s4 = inlined_call_operand.vmem [shape: bf16[16,32,16], index: 4, kind: input, shape index: {}]
  %s5 = inlined_call_operand.vmem [shape: f32[1,128], index: 5, kind: input, shape index: {}]
  %s6 = inlined_call_operand.vmem [shape: bf16[32,128], index: 6, kind: output, shape index: {0}]
  %s7 = inlined_call_operand.vmem [shape: f32[1,32,1], index: 7, kind: output, shape index: {1}]
  %s8 = inlined_call_operand.vmem [shape: f32[1,32,1], index: 8, kind: output, shape index: {2}]
  %9 = xla_tuple %s6, %s7, %s8
  %s10 = sld [smem:[#allocation0]]
  $region50: #{patchgan_forward.6} parent=0
    _
  %s12 = ssub.s32 1, %s10
  %s13 = scalar_select 0, %s12, %s10
  // Predicated region
  $region2: #{patchgan_forward.6} parent=0 // pred_check
    _
  $region3: #{patchgan_forward.6} parent=0 // pred_check_branch
    %15 = sbr.rel (0) target = $region5
  $region4: #{patchgan_forward.6} parent=0 // pred_region
    _
  $region5: #{patchgan_forward.6} parent=0 // pred_fallthru
    _
  // Predicated region
  $region6: #{patchgan_forward.6} parent=0 // pred_check
    _
  $region7: #{patchgan_forward.6} parent=0 // pred_check_branch
    %17 = sbr.rel (0) target = $region9
  $region8: #{patchgan_forward.6} parent=0 // pred_region
    _
  $region9: #{patchgan_forward.6} parent=0 // pred_fallthru
    _
  // Predicated region
  $region10: #{patchgan_forward.6} parent=0 // pred_check
    _
  $region11: #{patchgan_forward.6} parent=0 // pred_check_branch
    %19 = sbr.rel (0) target = $region13
  $region12: #{patchgan_forward.6} parent=0 // pred_region
    _
  $region13: #{patchgan_forward.6} parent=0 // pred_fallthru
    _
  // Predicated region
  $region14: #{patchgan_forward.6} parent=0 // pred_check
    _
  $region15: #{patchgan_forward.6} parent=0 // pred_check_branch
    %21 = sbr.rel (0) target = $region17
  $region16: #{patchgan_forward.6} parent=0 // pred_region
    _
  $region17: #{patchgan_forward.6} parent=0 // pred_fallthru
    _
  // Predicated region
  $region18: #{patchgan_forward.6} parent=0 // pred_check
    _
  $region19: #{patchgan_forward.6} parent=0 // pred_check_branch
    %23 = sbr.rel (0) target = $region21
  $region20: #{patchgan_forward.6} parent=0 // pred_region
    _
  $region21: #{patchgan_forward.6} parent=0 // pred_fallthru
    _
  // Predicated region
  $region22: #{patchgan_forward.6} parent=0 // pred_check
    _
  $region23: #{patchgan_forward.6} parent=0 // pred_check_branch
    %25 = sbr.rel (0) target = $region25
  $region24: #{patchgan_forward.6} parent=0 // pred_region
    _
  $region25: #{patchgan_forward.6} parent=0 // pred_fallthru
    _
  %v27 = vld [vmem:[%s0] sm:$0xf]
  %v28 = vld [vmem:[%s0 + $0x8] sm:$0xf]
  %v29 = vld [vmem:[%s4] sm:$0xf]
  %v30 = vld [vmem:[%s4 + $0x4] sm:$0xf]
  %v31 = vld [vmem:[%s4 + $0x8] sm:$0xf]
  %v32 = vld [vmem:[%s4 + $0xc] sm:$0xf]
  %v33 = vld [vmem:[%s1] sm:$0xf]
  %v34 = vld [vmem:[%s1 + $0x8] sm:$0xf]
  %s35 = scalar_lea.vmem %s4, 16
  %v36 = vld [vmem:[%s35] sm:$0xf]
  %v37 = vld [vmem:[%s35 + $0x4] sm:$0xf]
  %v38 = vld [vmem:[%s35 + $0x8] sm:$0xf]
  %v39 = vld [vmem:[%s35 + $0xc] sm:$0xf]
  %v44 = vunpack.c.l.b16 %v36
  %v45 = vunpack.c.l.b16 %v37
  %v46 = vunpack.c.l.b16 %v38
  %v47 = vunpack.c.l.b16 %v39
  %v48 = vpack.c.b16 %v45, %v44
  %v49 = vpack.c.b16 %v47, %v46
  %v52 = vunpack.c.l.b16 %v33
  %v53 = vunpack.c.l.b16 %v34
  %v54 = vpack.c.b16 %v53, %v52
  %vm56 = vcmask 130048
  %v58 = vsel %vm56, %v48, 0
  %v61 = vsel %vm56, %v49, 0
  %63 = vmatprep.subr.bf16.mxu0 0
  %64 = vmatpush1.bf16.msra.mxu0 0
  %65 = vmatprep.subr.bf16.mxu0 0
  %66 = vmatpush1.bf16.msra.mxu0 0
  %67 = vmatprep.subr.bf16.mxu0 0
  %68 = vmatpush1.bf16.msra.mxu0 0
  %69 = vmatprep.subr.bf16.mxu0 0
  %70 = vmatpush1.bf16.msra.mxu0 0
  %71 = vmatprep.subr.bf16.mxu0 0
  %72 = vmatpush1.bf16.msra.mxu0 0
  %73 = vmatprep.subr.bf16.mxu0 0
  %74 = vmatpush1.bf16.msra.mxu0 0
  %75 = vmatprep.subr.bf16.mxu0 0
  %76 = vmatpush1.bf16.msra.mxu0 0
  %77 = vmatprep.subr.bf16.mxu0 0
  %78 = vmatpush1.bf16.msra.mxu0 %v54
  %79 = vmatprep.subr.bf16.mxu0 0
  %80 = vmatpush2.bf16.msra.mxu0 0
  %81 = vmatprep.subr.bf16.mxu0 0
  %82 = vmatpush2.bf16.msra.mxu0 0
  %83 = vmatprep.subr.bf16.mxu0 0
  %84 = vmatpush2.bf16.msra.mxu0 0
  %85 = vmatprep.subr.bf16.mxu0 0
  %86 = vmatpush2.bf16.msra.mxu0 0
  %87 = vmatprep.subr.bf16.mxu0 0
  %88 = vmatpush2.bf16.msra.mxu0 0
  %89 = vmatprep.subr.bf16.mxu0 0
  %90 = vmatpush2.bf16.msra.mxu0 0
  %91 = vmatprep.subr.bf16.mxu0 0
  %92 = vmatpush2.bf16.msra.mxu0 0
  %93 = vmatprep.subr.bf16.mxu0 0
  %94 = vmatpush2.bf16.msra.mxu0 0
  %95 = vmatprep.mubr.bf16.mxu0 0
  %96 = vmatmul.mubr.bf16.gmra.mxu0 %v58
  %v97 = vpop.f32.mrf.mxu0
  %v98 = vadd.f32 0.0, %v97
  %v99 = vpop.f32.mrf.mxu0
  %v100 = vpop.f32.mrf.mxu0
  %v101 = vadd.f32 0.0, %v100
  %v102 = vpop.f32.mrf.mxu0
  %103 = vmatprep.mubr.bf16.mxu0 0
  %104 = vmatmul.mubr.bf16.gmra.mxu0 %v61
  %v105 = vpop.f32.mrf.mxu0
  %v106 = vadd.f32 0.0, %v105
  %v107 = vpop.f32.mrf.mxu0
  %v108 = vpop.f32.mrf.mxu0
  %v109 = vadd.f32 0.0, %v108
  %v110 = vpop.f32.mrf.mxu0
  %111 = vdwg.mxu0
  %v116 = vunpack.c.l.b16 %v29
  %v117 = vunpack.c.l.b16 %v30
  %v118 = vunpack.c.l.b16 %v31
  %v119 = vunpack.c.l.b16 %v32
  %v120 = vpack.c.b16 %v117, %v116
  %v121 = vpack.c.b16 %v119, %v118
  %v124 = vunpack.c.l.b16 %v27
  %v125 = vunpack.c.l.b16 %v28
  %v126 = vpack.c.b16 %v125, %v124
  %v129 = vsel %vm56, %v120, 0
  %v132 = vsel %vm56, %v121, 0
  %134 = vmatprep.subr.bf16.mxu0 0
  %135 = vmatpush1.bf16.msra.mxu0 0
  %136 = vmatprep.subr.bf16.mxu0 0
  %137 = vmatpush1.bf16.msra.mxu0 0
  %138 = vmatprep.subr.bf16.mxu0 0
  %139 = vmatpush1.bf16.msra.mxu0 0
  %140 = vmatprep.subr.bf16.mxu0 0
  %141 = vmatpush1.bf16.msra.mxu0 0
  %142 = vmatprep.subr.bf16.mxu0 0
  %143 = vmatpush1.bf16.msra.mxu0 0
  %144 = vmatprep.subr.bf16.mxu0 0
  %145 = vmatpush1.bf16.msra.mxu0 0
  %146 = vmatprep.subr.bf16.mxu0 0
  %147 = vmatpush1.bf16.msra.mxu0 0
  %148 = vmatprep.subr.bf16.mxu0 0
  %149 = vmatpush1.bf16.msra.mxu0 %v126
  %150 = vmatprep.subr.bf16.mxu0 0
  %151 = vmatpush2.bf16.msra.mxu0 0
  %152 = vmatprep.subr.bf16.mxu0 0
  %153 = vmatpush2.bf16.msra.mxu0 0
  %154 = vmatprep.subr.bf16.mxu0 0
  %155 = vmatpush2.bf16.msra.mxu0 0
  %156 = vmatprep.subr.bf16.mxu0 0
  %157 = vmatpush2.bf16.msra.mxu0 0
  %158 = vmatprep.subr.bf16.mxu0 0
  %159 = vmatpush2.bf16.msra.mxu0 0
  %160 = vmatprep.subr.bf16.mxu0 0
  %161 = vmatpush2.bf16.msra.mxu0 0
  %162 = vmatprep.subr.bf16.mxu0 0
  %163 = vmatpush2.bf16.msra.mxu0 0
  %164 = vmatprep.subr.bf16.mxu0 0
  %165 = vmatpush2.bf16.msra.mxu0 0
  %166 = vmatprep.mubr.bf16.mxu0 0
  %167 = vmatmul.mubr.bf16.gmra.mxu0 %v129
  %v168 = vpop.f32.mrf.mxu0
  %v169 = vadd.f32 %v98, %v168
  %v170 = vpop.f32.mrf.mxu0
  %v171 = vpop.f32.mrf.mxu0
  %v172 = vadd.f32 %v101, %v171
  %v173 = vpop.f32.mrf.mxu0
  %174 = vmatprep.mubr.bf16.mxu0 0
  %175 = vmatmul.mubr.bf16.gmra.mxu0 %v132
  %v176 = vpop.f32.mrf.mxu0
  %v177 = vadd.f32 %v106, %v176
  %v178 = vpop.f32.mrf.mxu0
  %v179 = vpop.f32.mrf.mxu0
  %v180 = vadd.f32 %v109, %v179
  %v181 = vpop.f32.mrf.mxu0
  %182 = vdwg.mxu0
  %v183 = vld [vmem:[%s0] sm:$0xff]
  %v184 = vld [vmem:[%s0 + $0x8] sm:$0xff]
  %s185 = scalar_lea.vmem %s4, 32
  %v186 = vld [vmem:[%s185] sm:$0xf]
  %v187 = vld [vmem:[%s185 + $0x4] sm:$0xf]
  %v188 = vld [vmem:[%s185 + $0x8] sm:$0xf]
  %v189 = vld [vmem:[%s185 + $0xc] sm:$0xf]
  %v194 = vunpack.c.l.b16 %v186
  %v195 = vunpack.c.l.b16 %v187
  %v196 = vunpack.c.l.b16 %v188
  %v197 = vunpack.c.l.b16 %v189
  %v198 = vpack.c.b16 %v195, %v194
  %v199 = vpack.c.b16 %v197, %v196
  %v202 = vunpack.c.l.b16 %v183
  %v203 = vunpack.c.h.b16 %v183
  %v204 = vunpack.c.l.b16 %v184
  %v205 = vunpack.c.h.b16 %v184
  %v206 = vpack.c.b16 %v204, %v202
  %v207 = vpack.c.b16 %v205, %v203
  %208 = vrot.lane.b32.xlu0 %v206, 127
  %v209 = vpop.permute.xlu0 %208
  %210 = vrot.lane.b32.xlu0 %v207, 127
  %v211 = vpop.permute.xlu0 %210
  %vm212 = vcmask 1039360
  %v213 = vsel %vm212, %v209, %v211
  %v216 = vsel %vm56, %v198, 0
  %v219 = vsel %vm56, %v199, 0
  %221 = vmatprep.subr.bf16.mxu0 0
  %222 = vmatpush1.bf16.msra.mxu0 0
  %223 = vmatprep.subr.bf16.mxu0 0
  %224 = vmatpush1.bf16.msra.mxu0 0
  %225 = vmatprep.subr.bf16.mxu0 0
  %226 = vmatpush1.bf16.msra.mxu0 0
  %227 = vmatprep.subr.bf16.mxu0 0
  %228 = vmatpush1.bf16.msra.mxu0 0
  %229 = vmatprep.subr.bf16.mxu0 0
  %230 = vmatpush1.bf16.msra.mxu0 0
  %231 = vmatprep.subr.bf16.mxu0 0
  %232 = vmatpush1.bf16.msra.mxu0 0
  %233 = vmatprep.subr.bf16.mxu0 0
  %234 = vmatpush1.bf16.msra.mxu0 0
  %235 = vmatprep.subr.bf16.mxu0 0
  %236 = vmatpush1.bf16.msra.mxu0 %v213
  %237 = vmatprep.subr.bf16.mxu0 0
  %238 = vmatpush2.bf16.msra.mxu0 0
  %239 = vmatprep.subr.bf16.mxu0 0
  %240 = vmatpush2.bf16.msra.mxu0 0
  %241 = vmatprep.subr.bf16.mxu0 0
  %242 = vmatpush2.bf16.msra.mxu0 0
  %243 = vmatprep.subr.bf16.mxu0 0
  %244 = vmatpush2.bf16.msra.mxu0 0
  %245 = vmatprep.subr.bf16.mxu0 0
  %246 = vmatpush2.bf16.msra.mxu0 0
  %247 = vmatprep.subr.bf16.mxu0 0
  %248 = vmatpush2.bf16.msra.mxu0 0
  %249 = vmatprep.subr.bf16.mxu0 0
  %250 = vmatpush2.bf16.msra.mxu0 0
  %251 = vmatprep.subr.bf16.mxu0 0
  %252 = vmatpush2.bf16.msra.mxu0 0
  %253 = vmatprep.mubr.bf16.mxu0 0
  %254 = vmatmul.mubr.bf16.gmra.mxu0 %v216
  %v255 = vpop.f32.mrf.mxu0
  %v256 = vadd.f32 0.0, %v255
  %v257 = vpop.f32.mrf.mxu0
  %v258 = vpop.f32.mrf.mxu0
  %v259 = vadd.f32 0.0, %v258
  %v260 = vpop.f32.mrf.mxu0
  %261 = vmatprep.mubr.bf16.mxu0 0
  %262 = vmatmul.mubr.bf16.gmra.mxu0 %v219
  %v263 = vpop.f32.mrf.mxu0
  %v264 = vadd.f32 0.0, %v263
  %v265 = vpop.f32.mrf.mxu0
  %v266 = vpop.f32.mrf.mxu0
  %v267 = vadd.f32 0.0, %v266
  %v268 = vpop.f32.mrf.mxu0
  %269 = vdwg.mxu0
  %v270 = vadd.f32 %v169, %v256
  %v271 = vadd.f32 %v172, %v259
  %v272 = vadd.f32 %v177, %v264
  %v273 = vadd.f32 %v180, %v267
  %v274 = vld [vmem:[%s1] sm:$0xff]
  %v275 = vld [vmem:[%s1 + $0x8] sm:$0xff]
  %s276 = scalar_lea.vmem %s4, 48
  %v277 = vld [vmem:[%s276] sm:$0xf]
  %v278 = vld [vmem:[%s276 + $0x4] sm:$0xf]
  %v279 = vld [vmem:[%s276 + $0x8] sm:$0xf]
  %v280 = vld [vmem:[%s276 + $0xc] sm:$0xf]
  %v285 = vunpack.c.l.b16 %v277
  %v286 = vunpack.c.l.b16 %v278
  %v287 = vunpack.c.l.b16 %v279
  %v288 = vunpack.c.l.b16 %v280
  %v289 = vpack.c.b16 %v286, %v285
  %v290 = vpack.c.b16 %v288, %v287
  %v293 = vunpack.c.l.b16 %v274
  %v294 = vunpack.c.h.b16 %v274
  %v295 = vunpack.c.l.b16 %v275
  %v296 = vunpack.c.h.b16 %v275
  %v297 = vpack.c.b16 %v295, %v293
  %v298 = vpack.c.b16 %v296, %v294
  %299 = vrot.lane.b32.xlu0 %v297, 127
  %v300 = vpop.permute.xlu0 %299
  %301 = vrot.lane.b32.xlu0 %v298, 127
  %v302 = vpop.permute.xlu0 %301
  %v303 = vsel %vm212, %v300, %v302
  %v306 = vsel %vm56, %v289, 0
  %v309 = vsel %vm56, %v290, 0
  %311 = vmatprep.subr.bf16.mxu0 0
  %312 = vmatpush1.bf16.msra.mxu0 0
  %313 = vmatprep.subr.bf16.mxu0 0
  %314 = vmatpush1.bf16.msra.mxu0 0
  %315 = vmatprep.subr.bf16.mxu0 0
  %316 = vmatpush1.bf16.msra.mxu0 0
  %317 = vmatprep.subr.bf16.mxu0 0
  %318 = vmatpush1.bf16.msra.mxu0 0
  %319 = vmatprep.subr.bf16.mxu0 0
  %320 = vmatpush1.bf16.msra.mxu0 0
  %321 = vmatprep.subr.bf16.mxu0 0
  %322 = vmatpush1.bf16.msra.mxu0 0
  %323 = vmatprep.subr.bf16.mxu0 0
  %324 = vmatpush1.bf16.msra.mxu0 0
  %325 = vmatprep.subr.bf16.mxu0 0
  %326 = vmatpush1.bf16.msra.mxu0 %v303
  %327 = vmatprep.subr.bf16.mxu0 0
  %328 = vmatpush2.bf16.msra.mxu0 0
  %329 = vmatprep.subr.bf16.mxu0 0
  %330 = vmatpush2.bf16.msra.mxu0 0
  %331 = vmatprep.subr.bf16.mxu0 0
  %332 = vmatpush2.bf16.msra.mxu0 0
  %333 = vmatprep.subr.bf16.mxu0 0
  %334 = vmatpush2.bf16.msra.mxu0 0
  %335 = vmatprep.subr.bf16.mxu0 0
  %336 = vmatpush2.bf16.msra.mxu0 0
  %337 = vmatprep.subr.bf16.mxu0 0
  %338 = vmatpush2.bf16.msra.mxu0 0
  %339 = vmatprep.subr.bf16.mxu0 0
  %340 = vmatpush2.bf16.msra.mxu0 0
  %341 = vmatprep.subr.bf16.mxu0 0
  %342 = vmatpush2.bf16.msra.mxu0 0
  %343 = vmatprep.mubr.bf16.mxu0 0
  %344 = vmatmul.mubr.bf16.gmra.mxu0 %v306
  %v345 = vpop.f32.mrf.mxu0
  %v346 = vadd.f32 0.0, %v345
  %v347 = vpop.f32.mrf.mxu0
  %v348 = vpop.f32.mrf.mxu0
  %v349 = vadd.f32 0.0, %v348
  %v350 = vpop.f32.mrf.mxu0
  %351 = vmatprep.mubr.bf16.mxu0 0
  %352 = vmatmul.mubr.bf16.gmra.mxu0 %v309
  %v353 = vpop.f32.mrf.mxu0
  %v354 = vadd.f32 0.0, %v353
  %v355 = vpop.f32.mrf.mxu0
  %v356 = vpop.f32.mrf.mxu0
  %v357 = vadd.f32 0.0, %v356
  %v358 = vpop.f32.mrf.mxu0
  %359 = vdwg.mxu0
  %v360 = vadd.f32 %v270, %v346
  %v361 = vadd.f32 %v271, %v349
  %v362 = vadd.f32 %v272, %v354
  %v363 = vadd.f32 %v273, %v357
  %v364 = vld [vmem:[%s2] sm:$0xf]
  %v365 = vld [vmem:[%s2 + $0x8] sm:$0xf]
  %s366 = scalar_lea.vmem %s4, 64
  %v367 = vld [vmem:[%s366] sm:$0xf]
  %v368 = vld [vmem:[%s366 + $0x4] sm:$0xf]
  %v369 = vld [vmem:[%s366 + $0x8] sm:$0xf]
  %v370 = vld [vmem:[%s366 + $0xc] sm:$0xf]
  %v375 = vunpack.c.l.b16 %v367
  %v376 = vunpack.c.l.b16 %v368
  %v377 = vunpack.c.l.b16 %v369
  %v378 = vunpack.c.l.b16 %v370
  %v379 = vpack.c.b16 %v376, %v375
  %v380 = vpack.c.b16 %v378, %v377
  %v383 = vunpack.c.l.b16 %v364
  %v384 = vunpack.c.l.b16 %v365
  %v385 = vpack.c.b16 %v384, %v383
  %v388 = vsel %vm56, %v379, 0
  %v391 = vsel %vm56, %v380, 0
  %393 = vmatprep.subr.bf16.mxu0 0
  %394 = vmatpush1.bf16.msra.mxu0 0
  %395 = vmatprep.subr.bf16.mxu0 0
  %396 = vmatpush1.bf16.msra.mxu0 0
  %397 = vmatprep.subr.bf16.mxu0 0
  %398 = vmatpush1.bf16.msra.mxu0 0
  %399 = vmatprep.subr.bf16.mxu0 0
  %400 = vmatpush1.bf16.msra.mxu0 0
  %401 = vmatprep.subr.bf16.mxu0 0
  %402 = vmatpush1.bf16.msra.mxu0 0
  %403 = vmatprep.subr.bf16.mxu0 0
  %404 = vmatpush1.bf16.msra.mxu0 0
  %405 = vmatprep.subr.bf16.mxu0 0
  %406 = vmatpush1.bf16.msra.mxu0 0
  %407 = vmatprep.subr.bf16.mxu0 0
  %408 = vmatpush1.bf16.msra.mxu0 %v385
  %409 = vmatprep.subr.bf16.mxu0 0
  %410 = vmatpush2.bf16.msra.mxu0 0
  %411 = vmatprep.subr.bf16.mxu0 0
  %412 = vmatpush2.bf16.msra.mxu0 0
  %413 = vmatprep.subr.bf16.mxu0 0
  %414 = vmatpush2.bf16.msra.mxu0 0
  %415 = vmatprep.subr.bf16.mxu0 0
  %416 = vmatpush2.bf16.msra.mxu0 0
  %417 = vmatprep.subr.bf16.mxu0 0
  %418 = vmatpush2.bf16.msra.mxu0 0
  %419 = vmatprep.subr.bf16.mxu0 0
  %420 = vmatpush2.bf16.msra.mxu0 0
  %421 = vmatprep.subr.bf16.mxu0 0
  %422 = vmatpush2.bf16.msra.mxu0 0
  %423 = vmatprep.subr.bf16.mxu0 0
  %424 = vmatpush2.bf16.msra.mxu0 0
  %425 = vmatprep.mubr.bf16.mxu0 0
  %426 = vmatmul.mubr.bf16.gmra.mxu0 %v388
  %v427 = vpop.f32.mrf.mxu0
  %v428 = vadd.f32 0.0, %v427
  %v429 = vpop.f32.mrf.mxu0
  %v430 = vpop.f32.mrf.mxu0
  %v431 = vadd.f32 0.0, %v430
  %v432 = vpop.f32.mrf.mxu0
  %433 = vmatprep.mubr.bf16.mxu0 0
  %434 = vmatmul.mubr.bf16.gmra.mxu0 %v391
  %v435 = vpop.f32.mrf.mxu0
  %v436 = vadd.f32 0.0, %v435
  %v437 = vpop.f32.mrf.mxu0
  %v438 = vpop.f32.mrf.mxu0
  %v439 = vadd.f32 0.0, %v438
  %v440 = vpop.f32.mrf.mxu0
  %441 = vdwg.mxu0
  %v442 = vadd.f32 %v360, %v428
  %v443 = vadd.f32 %v361, %v431
  %v444 = vadd.f32 %v362, %v436
  %v445 = vadd.f32 %v363, %v439
  %v446 = vld [vmem:[%s3] sm:$0xf]
  %v447 = vld [vmem:[%s3 + $0x8] sm:$0xf]
  %s448 = scalar_lea.vmem %s4, 80
  %v449 = vld [vmem:[%s448] sm:$0xf]
  %v450 = vld [vmem:[%s448 + $0x4] sm:$0xf]
  %v451 = vld [vmem:[%s448 + $0x8] sm:$0xf]
  %v452 = vld [vmem:[%s448 + $0xc] sm:$0xf]
  %v457 = vunpack.c.l.b16 %v449
  %v458 = vunpack.c.l.b16 %v450
  %v459 = vunpack.c.l.b16 %v451
  %v460 = vunpack.c.l.b16 %v452
  %v461 = vpack.c.b16 %v458, %v457
  %v462 = vpack.c.b16 %v460, %v459
  %v465 = vunpack.c.l.b16 %v446
  %v466 = vunpack.c.l.b16 %v447
  %v467 = vpack.c.b16 %v466, %v465
  %v470 = vsel %vm56, %v461, 0
  %v473 = vsel %vm56, %v462, 0
  %475 = vmatprep.subr.bf16.mxu0 0
  %476 = vmatpush1.bf16.msra.mxu0 0
  %477 = vmatprep.subr.bf16.mxu0 0
  %478 = vmatpush1.bf16.msra.mxu0 0
  %479 = vmatprep.subr.bf16.mxu0 0
  %480 = vmatpush1.bf16.msra.mxu0 0
  %481 = vmatprep.subr.bf16.mxu0 0
  %482 = vmatpush1.bf16.msra.mxu0 0
  %483 = vmatprep.subr.bf16.mxu0 0
  %484 = vmatpush1.bf16.msra.mxu0 0
  %485 = vmatprep.subr.bf16.mxu0 0
  %486 = vmatpush1.bf16.msra.mxu0 0
  %487 = vmatprep.subr.bf16.mxu0 0
  %488 = vmatpush1.bf16.msra.mxu0 0
  %489 = vmatprep.subr.bf16.mxu0 0
  %490 = vmatpush1.bf16.msra.mxu0 %v467
  %491 = vmatprep.subr.bf16.mxu0 0
  %492 = vmatpush2.bf16.msra.mxu0 0
  %493 = vmatprep.subr.bf16.mxu0 0
  %494 = vmatpush2.bf16.msra.mxu0 0
  %495 = vmatprep.subr.bf16.mxu0 0
  %496 = vmatpush2.bf16.msra.mxu0 0
  %497 = vmatprep.subr.bf16.mxu0 0
  %498 = vmatpush2.bf16.msra.mxu0 0
  %499 = vmatprep.subr.bf16.mxu0 0
  %500 = vmatpush2.bf16.msra.mxu0 0
  %501 = vmatprep.subr.bf16.mxu0 0
  %502 = vmatpush2.bf16.msra.mxu0 0
  %503 = vmatprep.subr.bf16.mxu0 0
  %504 = vmatpush2.bf16.msra.mxu0 0
  %505 = vmatprep.subr.bf16.mxu0 0
  %506 = vmatpush2.bf16.msra.mxu0 0
  %507 = vmatprep.mubr.bf16.mxu0 0
  %508 = vmatmul.mubr.bf16.gmra.mxu0 %v470
  %v509 = vpop.f32.mrf.mxu0
  %v510 = vadd.f32 0.0, %v509
  %v511 = vpop.f32.mrf.mxu0
  %v512 = vpop.f32.mrf.mxu0
  %v513 = vadd.f32 0.0, %v512
  %v514 = vpop.f32.mrf.mxu0
  %515 = vmatprep.mubr.bf16.mxu0 0
  %516 = vmatmul.mubr.bf16.gmra.mxu0 %v473
  %v517 = vpop.f32.mrf.mxu0
  %v518 = vadd.f32 0.0, %v517
  %v519 = vpop.f32.mrf.mxu0
  %v520 = vpop.f32.mrf.mxu0
  %v521 = vadd.f32 0.0, %v520
  %v522 = vpop.f32.mrf.mxu0
  %523 = vdwg.mxu0
  %v524 = vadd.f32 %v442, %v510
  %v525 = vadd.f32 %v443, %v513
  %v526 = vadd.f32 %v444, %v518
  %v527 = vadd.f32 %v445, %v521
  %v528 = vld [vmem:[%s2] sm:$0xff]
  %v529 = vld [vmem:[%s2 + $0x8] sm:$0xff]
  %s530 = scalar_lea.vmem %s4, 96
  %v531 = vld [vmem:[%s530] sm:$0xf]
  %v532 = vld [vmem:[%s530 + $0x4] sm:$0xf]
  %v533 = vld [vmem:[%s530 + $0x8] sm:$0xf]
  %v534 = vld [vmem:[%s530 + $0xc] sm:$0xf]
  %v539 = vunpack.c.l.b16 %v531
  %v540 = vunpack.c.l.b16 %v532
  %v541 = vunpack.c.l.b16 %v533
  %v542 = vunpack.c.l.b16 %v534
  %v543 = vpack.c.b16 %v540, %v539
  %v544 = vpack.c.b16 %v542, %v541
  %v547 = vunpack.c.l.b16 %v528
  %v548 = vunpack.c.h.b16 %v528
  %v549 = vunpack.c.l.b16 %v529
  %v550 = vunpack.c.h.b16 %v529
  %v551 = vpack.c.b16 %v549, %v547
  %v552 = vpack.c.b16 %v550, %v548
  %553 = vrot.lane.b32.xlu0 %v551, 127
  %v554 = vpop.permute.xlu0 %553
  %555 = vrot.lane.b32.xlu0 %v552, 127
  %v556 = vpop.permute.xlu0 %555
  %v557 = vsel %vm212, %v554, %v556
  %v560 = vsel %vm56, %v543, 0
  %v563 = vsel %vm56, %v544, 0
  %565 = vmatprep.subr.bf16.mxu0 0
  %566 = vmatpush1.bf16.msra.mxu0 0
  %567 = vmatprep.subr.bf16.mxu0 0
  %568 = vmatpush1.bf16.msra.mxu0 0
  %569 = vmatprep.subr.bf16.mxu0 0
  %570 = vmatpush1.bf16.msra.mxu0 0
  %571 = vmatprep.subr.bf16.mxu0 0
  %572 = vmatpush1.bf16.msra.mxu0 0
  %573 = vmatprep.subr.bf16.mxu0 0
  %574 = vmatpush1.bf16.msra.mxu0 0
  %575 = vmatprep.subr.bf16.mxu0 0
  %576 = vmatpush1.bf16.msra.mxu0 0
  %577 = vmatprep.subr.bf16.mxu0 0
  %578 = vmatpush1.bf16.msra.mxu0 0
  %579 = vmatprep.subr.bf16.mxu0 0
  %580 = vmatpush1.bf16.msra.mxu0 %v557
  %581 = vmatprep.subr.bf16.mxu0 0
  %582 = vmatpush2.bf16.msra.mxu0 0
  %583 = vmatprep.subr.bf16.mxu0 0
  %584 = vmatpush2.bf16.msra.mxu0 0
  %585 = vmatprep.subr.bf16.mxu0 0
  %586 = vmatpush2.bf16.msra.mxu0 0
  %587 = vmatprep.subr.bf16.mxu0 0
  %588 = vmatpush2.bf16.msra.mxu0 0
  %589 = vmatprep.subr.bf16.mxu0 0
  %590 = vmatpush2.bf16.msra.mxu0 0
  %591 = vmatprep.subr.bf16.mxu0 0
  %592 = vmatpush2.bf16.msra.mxu0 0
  %593 = vmatprep.subr.bf16.mxu0 0
  %594 = vmatpush2.bf16.msra.mxu0 0
  %595 = vmatprep.subr.bf16.mxu0 0
  %596 = vmatpush2.bf16.msra.mxu0 0
  %597 = vmatprep.mubr.bf16.mxu0 0
  %598 = vmatmul.mubr.bf16.gmra.mxu0 %v560
  %v599 = vpop.f32.mrf.mxu0
  %v600 = vadd.f32 0.0, %v599
  %v601 = vpop.f32.mrf.mxu0
  %v602 = vpop.f32.mrf.mxu0
  %v603 = vadd.f32 0.0, %v602
  %v604 = vpop.f32.mrf.mxu0
  %605 = vmatprep.mubr.bf16.mxu0 0
  %606 = vmatmul.mubr.bf16.gmra.mxu0 %v563
  %v607 = vpop.f32.mrf.mxu0
  %v608 = vadd.f32 0.0, %v607
  %v609 = vpop.f32.mrf.mxu0
  %v610 = vpop.f32.mrf.mxu0
  %v611 = vadd.f32 0.0, %v610
  %v612 = vpop.f32.mrf.mxu0
  %613 = vdwg.mxu0
  %v614 = vadd.f32 %v524, %v600
  %v615 = vadd.f32 %v525, %v603
  %v616 = vadd.f32 %v526, %v608
  %v617 = vadd.f32 %v527, %v611
  %v618 = vld [vmem:[%s3] sm:$0xff]
  %v619 = vld [vmem:[%s3 + $0x8] sm:$0xff]
  %s620 = scalar_lea.vmem %s4, 112
  %v621 = vld [vmem:[%s620] sm:$0xf]
  %v622 = vld [vmem:[%s620 + $0x4] sm:$0xf]
  %v623 = vld [vmem:[%s620 + $0x8] sm:$0xf]
  %v624 = vld [vmem:[%s620 + $0xc] sm:$0xf]
  %v629 = vunpack.c.l.b16 %v621
  %v630 = vunpack.c.l.b16 %v622
  %v631 = vunpack.c.l.b16 %v623
  %v632 = vunpack.c.l.b16 %v624
  %v633 = vpack.c.b16 %v630, %v629
  %v634 = vpack.c.b16 %v632, %v631
  %v637 = vunpack.c.l.b16 %v618
  %v638 = vunpack.c.h.b16 %v618
  %v639 = vunpack.c.l.b16 %v619
  %v640 = vunpack.c.h.b16 %v619
  %v641 = vpack.c.b16 %v639, %v637
  %v642 = vpack.c.b16 %v640, %v638
  %643 = vrot.lane.b32.xlu0 %v641, 127
  %v644 = vpop.permute.xlu0 %643
  %645 = vrot.lane.b32.xlu0 %v642, 127
  %v646 = vpop.permute.xlu0 %645
  %v647 = vsel %vm212, %v644, %v646
  %v650 = vsel %vm56, %v633, 0
  %v653 = vsel %vm56, %v634, 0
  %655 = vmatprep.subr.bf16.mxu0 0
  %656 = vmatpush1.bf16.msra.mxu0 0
  %657 = vmatprep.subr.bf16.mxu0 0
  %658 = vmatpush1.bf16.msra.mxu0 0
  %659 = vmatprep.subr.bf16.mxu0 0
  %660 = vmatpush1.bf16.msra.mxu0 0
  %661 = vmatprep.subr.bf16.mxu0 0
  %662 = vmatpush1.bf16.msra.mxu0 0
  %663 = vmatprep.subr.bf16.mxu0 0
  %664 = vmatpush1.bf16.msra.mxu0 0
  %665 = vmatprep.subr.bf16.mxu0 0
  %666 = vmatpush1.bf16.msra.mxu0 0
  %667 = vmatprep.subr.bf16.mxu0 0
  %668 = vmatpush1.bf16.msra.mxu0 0
  %669 = vmatprep.subr.bf16.mxu0 0
  %670 = vmatpush1.bf16.msra.mxu0 %v647
  %671 = vmatprep.subr.bf16.mxu0 0
  %672 = vmatpush2.bf16.msra.mxu0 0
  %673 = vmatprep.subr.bf16.mxu0 0
  %674 = vmatpush2.bf16.msra.mxu0 0
  %675 = vmatprep.subr.bf16.mxu0 0
  %676 = vmatpush2.bf16.msra.mxu0 0
  %677 = vmatprep.subr.bf16.mxu0 0
  %678 = vmatpush2.bf16.msra.mxu0 0
  %679 = vmatprep.subr.bf16.mxu0 0
  %680 = vmatpush2.bf16.msra.mxu0 0
  %681 = vmatprep.subr.bf16.mxu0 0
  %682 = vmatpush2.bf16.msra.mxu0 0
  %683 = vmatprep.subr.bf16.mxu0 0
  %684 = vmatpush2.bf16.msra.mxu0 0
  %685 = vmatprep.subr.bf16.mxu0 0
  %686 = vmatpush2.bf16.msra.mxu0 0
  %687 = vmatprep.mubr.bf16.mxu0 0
  %688 = vmatmul.mubr.bf16.gmra.mxu0 %v650
  %v689 = vpop.f32.mrf.mxu0
  %v690 = vadd.f32 0.0, %v689
  %v691 = vpop.f32.mrf.mxu0
  %v692 = vpop.f32.mrf.mxu0
  %v693 = vadd.f32 0.0, %v692
  %v694 = vpop.f32.mrf.mxu0
  %695 = vmatprep.mubr.bf16.mxu0 0
  %696 = vmatmul.mubr.bf16.gmra.mxu0 %v653
  %v697 = vpop.f32.mrf.mxu0
  %v698 = vadd.f32 0.0, %v697
  %v699 = vpop.f32.mrf.mxu0
  %v700 = vpop.f32.mrf.mxu0
  %v701 = vadd.f32 0.0, %v700
  %v702 = vpop.f32.mrf.mxu0
  %703 = vdwg.mxu0
  %v704 = vadd.f32 %v614, %v690
  %v705 = vadd.f32 %v615, %v693
  %v706 = vadd.f32 %v616, %v698
  %v707 = vadd.f32 %v617, %v701
  %s708 = scalar_lea.vmem %s4, 128
  %v709 = vld [vmem:[%s708] sm:$0xf]
  %v710 = vld [vmem:[%s708 + $0x4] sm:$0xf]
  %v711 = vld [vmem:[%s708 + $0x8] sm:$0xf]
  %v712 = vld [vmem:[%s708 + $0xc] sm:$0xf]
  %v717 = vunpack.c.l.b16 %v709
  %v718 = vunpack.c.l.b16 %v710
  %v719 = vunpack.c.l.b16 %v711
  %v720 = vunpack.c.l.b16 %v712
  %v721 = vpack.c.b16 %v718, %v717
  %v722 = vpack.c.b16 %v720, %v719
  %723 = vrot.lane.b32.xlu0 %v206, 125
  %v724 = vpop.permute.xlu0 %723
  %725 = vrot.lane.b32.xlu0 %v207, 125
  %v726 = vpop.permute.xlu0 %725
  %vm727 = vcmask 1022976
  %v728 = vsel %vm727, %v724, %v726
  %v731 = vsel %vm56, %v721, 0
  %v734 = vsel %vm56, %v722, 0
  %736 = vmatprep.subr.bf16.mxu0 0
  %737 = vmatpush1.bf16.msra.mxu0 0
  %738 = vmatprep.subr.bf16.mxu0 0
  %739 = vmatpush1.bf16.msra.mxu0 0
  %740 = vmatprep.subr.bf16.mxu0 0
  %741 = vmatpush1.bf16.msra.mxu0 0
  %742 = vmatprep.subr.bf16.mxu0 0
  %743 = vmatpush1.bf16.msra.mxu0 0
  %744 = vmatprep.subr.bf16.mxu0 0
  %745 = vmatpush1.bf16.msra.mxu0 0
  %746 = vmatprep.subr.bf16.mxu0 0
  %747 = vmatpush1.bf16.msra.mxu0 0
  %748 = vmatprep.subr.bf16.mxu0 0
  %749 = vmatpush1.bf16.msra.mxu0 0
  %750 = vmatprep.subr.bf16.mxu0 0
  %751 = vmatpush1.bf16.msra.mxu0 %v728
  %752 = vmatprep.subr.bf16.mxu0 0
  %753 = vmatpush2.bf16.msra.mxu0 0
  %754 = vmatprep.subr.bf16.mxu0 0
  %755 = vmatpush2.bf16.msra.mxu0 0
  %756 = vmatprep.subr.bf16.mxu0 0
  %757 = vmatpush2.bf16.msra.mxu0 0
  %758 = vmatprep.subr.bf16.mxu0 0
  %759 = vmatpush2.bf16.msra.mxu0 0
  %760 = vmatprep.subr.bf16.mxu0 0
  %761 = vmatpush2.bf16.msra.mxu0 0
  %762 = vmatprep.subr.bf16.mxu0 0
  %763 = vmatpush2.bf16.msra.mxu0 0
  %764 = vmatprep.subr.bf16.mxu0 0
  %765 = vmatpush2.bf16.msra.mxu0 0
  %766 = vmatprep.subr.bf16.mxu0 0
  %767 = vmatpush2.bf16.msra.mxu0 0
  %768 = vmatprep.mubr.bf16.mxu0 0
  %769 = vmatmul.mubr.bf16.gmra.mxu0 %v731
  %v770 = vpop.f32.mrf.mxu0
  %v771 = vadd.f32 0.0, %v770
  %v772 = vpop.f32.mrf.mxu0
  %v773 = vpop.f32.mrf.mxu0
  %v774 = vadd.f32 0.0, %v773
  %v775 = vpop.f32.mrf.mxu0
  %776 = vmatprep.mubr.bf16.mxu0 0
  %777 = vmatmul.mubr.bf16.gmra.mxu0 %v734
  %v778 = vpop.f32.mrf.mxu0
  %v779 = vadd.f32 0.0, %v778
  %v780 = vpop.f32.mrf.mxu0
  %v781 = vpop.f32.mrf.mxu0
  %v782 = vadd.f32 0.0, %v781
  %v783 = vpop.f32.mrf.mxu0
  %784 = vdwg.mxu0
  %v785 = vadd.f32 %v704, %v771
  %v786 = vadd.f32 %v705, %v774
  %v787 = vadd.f32 %v706, %v779
  %v788 = vadd.f32 %v707, %v782
  %s789 = scalar_lea.vmem %s4, 144
  %v790 = vld [vmem:[%s789] sm:$0xf]
  %v791 = vld [vmem:[%s789 + $0x4] sm:$0xf]
  %v792 = vld [vmem:[%s789 + $0x8] sm:$0xf]
  %v793 = vld [vmem:[%s789 + $0xc] sm:$0xf]
  %v798 = vunpack.c.l.b16 %v790
  %v799 = vunpack.c.l.b16 %v791
  %v800 = vunpack.c.l.b16 %v792
  %v801 = vunpack.c.l.b16 %v793
  %v802 = vpack.c.b16 %v799, %v798
  %v803 = vpack.c.b16 %v801, %v800
  %804 = vrot.lane.b32.xlu0 %v297, 125
  %v805 = vpop.permute.xlu0 %804
  %806 = vrot.lane.b32.xlu0 %v298, 125
  %v807 = vpop.permute.xlu0 %806
  %v808 = vsel %vm727, %v805, %v807
  %v811 = vsel %vm56, %v802, 0
  %v814 = vsel %vm56, %v803, 0
  %816 = vmatprep.subr.bf16.mxu0 0
  %817 = vmatpush1.bf16.msra.mxu0 0
  %818 = vmatprep.subr.bf16.mxu0 0
  %819 = vmatpush1.bf16.msra.mxu0 0
  %820 = vmatprep.subr.bf16.mxu0 0
  %821 = vmatpush1.bf16.msra.mxu0 0
  %822 = vmatprep.subr.bf16.mxu0 0
  %823 = vmatpush1.bf16.msra.mxu0 0
  %824 = vmatprep.subr.bf16.mxu0 0
  %825 = vmatpush1.bf16.msra.mxu0 0
  %826 = vmatprep.subr.bf16.mxu0 0
  %827 = vmatpush1.bf16.msra.mxu0 0
  %828 = vmatprep.subr.bf16.mxu0 0
  %829 = vmatpush1.bf16.msra.mxu0 0
  %830 = vmatprep.subr.bf16.mxu0 0
  %831 = vmatpush1.bf16.msra.mxu0 %v808
  %832 = vmatprep.subr.bf16.mxu0 0
  %833 = vmatpush2.bf16.msra.mxu0 0
  %834 = vmatprep.subr.bf16.mxu0 0
  %835 = vmatpush2.bf16.msra.mxu0 0
  %836 = vmatprep.subr.bf16.mxu0 0
  %837 = vmatpush2.bf16.msra.mxu0 0
  %838 = vmatprep.subr.bf16.mxu0 0
  %839 = vmatpush2.bf16.msra.mxu0 0
  %840 = vmatprep.subr.bf16.mxu0 0
  %841 = vmatpush2.bf16.msra.mxu0 0
  %842 = vmatprep.subr.bf16.mxu0 0
  %843 = vmatpush2.bf16.msra.mxu0 0
  %844 = vmatprep.subr.bf16.mxu0 0
  %845 = vmatpush2.bf16.msra.mxu0 0
  %846 = vmatprep.subr.bf16.mxu0 0
  %847 = vmatpush2.bf16.msra.mxu0 0
  %848 = vmatprep.mubr.bf16.mxu0 0
  %849 = vmatmul.mubr.bf16.gmra.mxu0 %v811
  %v850 = vpop.f32.mrf.mxu0
  %v851 = vadd.f32 0.0, %v850
  %v852 = vpop.f32.mrf.mxu0
  %v853 = vpop.f32.mrf.mxu0
  %v854 = vadd.f32 0.0, %v853
  %v855 = vpop.f32.mrf.mxu0
  %856 = vmatprep.mubr.bf16.mxu0 0
  %857 = vmatmul.mubr.bf16.gmra.mxu0 %v814
  %v858 = vpop.f32.mrf.mxu0
  %v859 = vadd.f32 0.0, %v858
  %v860 = vpop.f32.mrf.mxu0
  %v861 = vpop.f32.mrf.mxu0
  %v862 = vadd.f32 0.0, %v861
  %v863 = vpop.f32.mrf.mxu0
  %864 = vdwg.mxu0
  %v865 = vadd.f32 %v785, %v851
  %v866 = vadd.f32 %v786, %v854
  %v867 = vadd.f32 %v787, %v859
  %v868 = vadd.f32 %v788, %v862
  %s869 = scalar_lea.vmem %s4, 160
  %v870 = vld [vmem:[%s869] sm:$0xf]
  %v871 = vld [vmem:[%s869 + $0x4] sm:$0xf]
  %v872 = vld [vmem:[%s869 + $0x8] sm:$0xf]
  %v873 = vld [vmem:[%s869 + $0xc] sm:$0xf]
  %v878 = vunpack.c.l.b16 %v870
  %v879 = vunpack.c.l.b16 %v871
  %v880 = vunpack.c.l.b16 %v872
  %v881 = vunpack.c.l.b16 %v873
  %v882 = vpack.c.b16 %v879, %v878
  %v883 = vpack.c.b16 %v881, %v880
  %884 = vrot.lane.b32.xlu0 %v206, 124
  %v885 = vpop.permute.xlu0 %884
  %886 = vrot.lane.b32.xlu0 %v207, 124
  %v887 = vpop.permute.xlu0 %886
  %vm888 = vcmask 1014784
  %v889 = vsel %vm888, %v885, %v887
  %v892 = vsel %vm56, %v882, 0
  %v895 = vsel %vm56, %v883, 0
  %897 = vmatprep.subr.bf16.mxu0 0
  %898 = vmatpush1.bf16.msra.mxu0 0
  %899 = vmatprep.subr.bf16.mxu0 0
  %900 = vmatpush1.bf16.msra.mxu0 0
  %901 = vmatprep.subr.bf16.mxu0 0
  %902 = vmatpush1.bf16.msra.mxu0 0
  %903 = vmatprep.subr.bf16.mxu0 0
  %904 = vmatpush1.bf16.msra.mxu0 0
  %905 = vmatprep.subr.bf16.mxu0 0
  %906 = vmatpush1.bf16.msra.mxu0 0
  %907 = vmatprep.subr.bf16.mxu0 0
  %908 = vmatpush1.bf16.msra.mxu0 0
  %909 = vmatprep.subr.bf16.mxu0 0
  %910 = vmatpush1.bf16.msra.mxu0 0
  %911 = vmatprep.subr.bf16.mxu0 0
  %912 = vmatpush1.bf16.msra.mxu0 %v889
  %913 = vmatprep.subr.bf16.mxu0 0
  %914 = vmatpush2.bf16.msra.mxu0 0
  %915 = vmatprep.subr.bf16.mxu0 0
  %916 = vmatpush2.bf16.msra.mxu0 0
  %917 = vmatprep.subr.bf16.mxu0 0
  %918 = vmatpush2.bf16.msra.mxu0 0
  %919 = vmatprep.subr.bf16.mxu0 0
  %920 = vmatpush2.bf16.msra.mxu0 0
  %921 = vmatprep.subr.bf16.mxu0 0
  %922 = vmatpush2.bf16.msra.mxu0 0
  %923 = vmatprep.subr.bf16.mxu0 0
  %924 = vmatpush2.bf16.msra.mxu0 0
  %925 = vmatprep.subr.bf16.mxu0 0
  %926 = vmatpush2.bf16.msra.mxu0 0
  %927 = vmatprep.subr.bf16.mxu0 0
  %928 = vmatpush2.bf16.msra.mxu0 0
  %929 = vmatprep.mubr.bf16.mxu0 0
  %930 = vmatmul.mubr.bf16.gmra.mxu0 %v892
  %v931 = vpop.f32.mrf.mxu0
  %v932 = vadd.f32 0.0, %v931
  %v933 = vpop.f32.mrf.mxu0
  %v934 = vpop.f32.mrf.mxu0
  %v935 = vadd.f32 0.0, %v934
  %v936 = vpop.f32.mrf.mxu0
  %937 = vmatprep.mubr.bf16.mxu0 0
  %938 = vmatmul.mubr.bf16.gmra.mxu0 %v895
  %v939 = vpop.f32.mrf.mxu0
  %v940 = vadd.f32 0.0, %v939
  %v941 = vpop.f32.mrf.mxu0
  %v942 = vpop.f32.mrf.mxu0
  %v943 = vadd.f32 0.0, %v942
  %v944 = vpop.f32.mrf.mxu0
  %945 = vdwg.mxu0
  %v946 = vadd.f32 %v865, %v932
  %v947 = vadd.f32 %v866, %v935
  %v948 = vadd.f32 %v867, %v940
  %v949 = vadd.f32 %v868, %v943
  %s950 = scalar_lea.vmem %s4, 176
  %v951 = vld [vmem:[%s950] sm:$0xf]
  %v952 = vld [vmem:[%s950 + $0x4] sm:$0xf]
  %v953 = vld [vmem:[%s950 + $0x8] sm:$0xf]
  %v954 = vld [vmem:[%s950 + $0xc] sm:$0xf]
  %v959 = vunpack.c.l.b16 %v951
  %v960 = vunpack.c.l.b16 %v952
  %v961 = vunpack.c.l.b16 %v953
  %v962 = vunpack.c.l.b16 %v954
  %v963 = vpack.c.b16 %v960, %v959
  %v964 = vpack.c.b16 %v962, %v961
  %965 = vrot.lane.b32.xlu0 %v297, 124
  %v966 = vpop.permute.xlu0 %965
  %967 = vrot.lane.b32.xlu0 %v298, 124
  %v968 = vpop.permute.xlu0 %967
  %v969 = vsel %vm888, %v966, %v968
  %v972 = vsel %vm56, %v963, 0
  %v975 = vsel %vm56, %v964, 0
  %977 = vmatprep.subr.bf16.mxu0 0
  %978 = vmatpush1.bf16.msra.mxu0 0
  %979 = vmatprep.subr.bf16.mxu0 0
  %980 = vmatpush1.bf16.msra.mxu0 0
  %981 = vmatprep.subr.bf16.mxu0 0
  %982 = vmatpush1.bf16.msra.mxu0 0
  %983 = vmatprep.subr.bf16.mxu0 0
  %984 = vmatpush1.bf16.msra.mxu0 0
  %985 = vmatprep.subr.bf16.mxu0 0
  %986 = vmatpush1.bf16.msra.mxu0 0
  %987 = vmatprep.subr.bf16.mxu0 0
  %988 = vmatpush1.bf16.msra.mxu0 0
  %989 = vmatprep.subr.bf16.mxu0 0
  %990 = vmatpush1.bf16.msra.mxu0 0
  %991 = vmatprep.subr.bf16.mxu0 0
  %992 = vmatpush1.bf16.msra.mxu0 %v969
  %993 = vmatprep.subr.bf16.mxu0 0
  %994 = vmatpush2.bf16.msra.mxu0 0
  %995 = vmatprep.subr.bf16.mxu0 0
  %996 = vmatpush2.bf16.msra.mxu0 0
  %997 = vmatprep.subr.bf16.mxu0 0
  %998 = vmatpush2.bf16.msra.mxu0 0
  %999 = vmatprep.subr.bf16.mxu0 0
  %1000 = vmatpush2.bf16.msra.mxu0 0
  %1001 = vmatprep.subr.bf16.mxu0 0
  %1002 = vmatpush2.bf16.msra.mxu0 0
  %1003 = vmatprep.subr.bf16.mxu0 0
  %1004 = vmatpush2.bf16.msra.mxu0 0
  %1005 = vmatprep.subr.bf16.mxu0 0
  %1006 = vmatpush2.bf16.msra.mxu0 0
  %1007 = vmatprep.subr.bf16.mxu0 0
  %1008 = vmatpush2.bf16.msra.mxu0 0
  %1009 = vmatprep.mubr.bf16.mxu0 0
  %1010 = vmatmul.mubr.bf16.gmra.mxu0 %v972
  %v1011 = vpop.f32.mrf.mxu0
  %v1012 = vadd.f32 0.0, %v1011
  %v1013 = vpop.f32.mrf.mxu0
  %v1014 = vpop.f32.mrf.mxu0
  %v1015 = vadd.f32 0.0, %v1014
  %v1016 = vpop.f32.mrf.mxu0
  %1017 = vmatprep.mubr.bf16.mxu0 0
  %1018 = vmatmul.mubr.bf16.gmra.mxu0 %v975
  %v1019 = vpop.f32.mrf.mxu0
  %v1020 = vadd.f32 0.0, %v1019
  %v1021 = vpop.f32.mrf.mxu0
  %v1022 = vpop.f32.mrf.mxu0
  %v1023 = vadd.f32 0.0, %v1022
  %v1024 = vpop.f32.mrf.mxu0
  %1025 = vdwg.mxu0
  %v1026 = vadd.f32 %v946, %v1012
  %v1027 = vadd.f32 %v947, %v1015
  %v1028 = vadd.f32 %v948, %v1020
  %v1029 = vadd.f32 %v949, %v1023
  %s1030 = scalar_lea.vmem %s4, 192
  %v1031 = vld [vmem:[%s1030] sm:$0xf]
  %v1032 = vld [vmem:[%s1030 + $0x4] sm:$0xf]
  %v1033 = vld [vmem:[%s1030 + $0x8] sm:$0xf]
  %v1034 = vld [vmem:[%s1030 + $0xc] sm:$0xf]
  %v1039 = vunpack.c.l.b16 %v1031
  %v1040 = vunpack.c.l.b16 %v1032
  %v1041 = vunpack.c.l.b16 %v1033
  %v1042 = vunpack.c.l.b16 %v1034
  %v1043 = vpack.c.b16 %v1040, %v1039
  %v1044 = vpack.c.b16 %v1042, %v1041
  %1045 = vrot.lane.b32.xlu0 %v551, 125
  %v1046 = vpop.permute.xlu0 %1045
  %1047 = vrot.lane.b32.xlu0 %v552, 125
  %v1048 = vpop.permute.xlu0 %1047
  %v1049 = vsel %vm727, %v1046, %v1048
  %v1052 = vsel %vm56, %v1043, 0
  %v1055 = vsel %vm56, %v1044, 0
  %1057 = vmatprep.subr.bf16.mxu0 0
  %1058 = vmatpush1.bf16.msra.mxu0 0
  %1059 = vmatprep.subr.bf16.mxu0 0
  %1060 = vmatpush1.bf16.msra.mxu0 0
  %1061 = vmatprep.subr.bf16.mxu0 0
  %1062 = vmatpush1.bf16.msra.mxu0 0
  %1063 = vmatprep.subr.bf16.mxu0 0
  %1064 = vmatpush1.bf16.msra.mxu0 0
  %1065 = vmatprep.subr.bf16.mxu0 0
  %1066 = vmatpush1.bf16.msra.mxu0 0
  %1067 = vmatprep.subr.bf16.mxu0 0
  %1068 = vmatpush1.bf16.msra.mxu0 0
  %1069 = vmatprep.subr.bf16.mxu0 0
  %1070 = vmatpush1.bf16.msra.mxu0 0
  %1071 = vmatprep.subr.bf16.mxu0 0
  %1072 = vmatpush1.bf16.msra.mxu0 %v1049
  %1073 = vmatprep.subr.bf16.mxu0 0
  %1074 = vmatpush2.bf16.msra.mxu0 0
  %1075 = vmatprep.subr.bf16.mxu0 0
  %1076 = vmatpush2.bf16.msra.mxu0 0
  %1077 = vmatprep.subr.bf16.mxu0 0
  %1078 = vmatpush2.bf16.msra.mxu0 0
  %1079 = vmatprep.subr.bf16.mxu0 0
  %1080 = vmatpush2.bf16.msra.mxu0 0
  %1081 = vmatprep.subr.bf16.mxu0 0
  %1082 = vmatpush2.bf16.msra.mxu0 0
  %1083 = vmatprep.subr.bf16.mxu0 0
  %1084 = vmatpush2.bf16.msra.mxu0 0
  %1085 = vmatprep.subr.bf16.mxu0 0
  %1086 = vmatpush2.bf16.msra.mxu0 0
  %1087 = vmatprep.subr.bf16.mxu0 0
  %1088 = vmatpush2.bf16.msra.mxu0 0
  %1089 = vmatprep.mubr.bf16.mxu0 0
  %1090 = vmatmul.mubr.bf16.gmra.mxu0 %v1052
  %v1091 = vpop.f32.mrf.mxu0
  %v1092 = vadd.f32 0.0, %v1091
  %v1093 = vpop.f32.mrf.mxu0
  %v1094 = vpop.f32.mrf.mxu0
  %v1095 = vadd.f32 0.0, %v1094
  %v1096 = vpop.f32.mrf.mxu0
  %1097 = vmatprep.mubr.bf16.mxu0 0
  %1098 = vmatmul.mubr.bf16.gmra.mxu0 %v1055
  %v1099 = vpop.f32.mrf.mxu0
  %v1100 = vadd.f32 0.0, %v1099
  %v1101 = vpop.f32.mrf.mxu0
  %v1102 = vpop.f32.mrf.mxu0
  %v1103 = vadd.f32 0.0, %v1102
  %v1104 = vpop.f32.mrf.mxu0
  %1105 = vdwg.mxu0
  %v1106 = vadd.f32 %v1026, %v1092
  %v1107 = vadd.f32 %v1027, %v1095
  %v1108 = vadd.f32 %v1028, %v1100
  %v1109 = vadd.f32 %v1029, %v1103
  %s1110 = scalar_lea.vmem %s4, 208
  %v1111 = vld [vmem:[%s1110] sm:$0xf]
  %v1112 = vld [vmem:[%s1110 + $0x4] sm:$0xf]
  %v1113 = vld [vmem:[%s1110 + $0x8] sm:$0xf]
  %v1114 = vld [vmem:[%s1110 + $0xc] sm:$0xf]
  %v1119 = vunpack.c.l.b16 %v1111
  %v1120 = vunpack.c.l.b16 %v1112
  %v1121 = vunpack.c.l.b16 %v1113
  %v1122 = vunpack.c.l.b16 %v1114
  %v1123 = vpack.c.b16 %v1120, %v1119
  %v1124 = vpack.c.b16 %v1122, %v1121
  %1125 = vrot.lane.b32.xlu0 %v641, 125
  %v1126 = vpop.permute.xlu0 %1125
  %1127 = vrot.lane.b32.xlu0 %v642, 125
  %v1128 = vpop.permute.xlu0 %1127
  %v1129 = vsel %vm727, %v1126, %v1128
  %v1132 = vsel %vm56, %v1123, 0
  %v1135 = vsel %vm56, %v1124, 0
  %1137 = vmatprep.subr.bf16.mxu0 0
  %1138 = vmatpush1.bf16.msra.mxu0 0
  %1139 = vmatprep.subr.bf16.mxu0 0
  %1140 = vmatpush1.bf16.msra.mxu0 0
  %1141 = vmatprep.subr.bf16.mxu0 0
  %1142 = vmatpush1.bf16.msra.mxu0 0
  %1143 = vmatprep.subr.bf16.mxu0 0
  %1144 = vmatpush1.bf16.msra.mxu0 0
  %1145 = vmatprep.subr.bf16.mxu0 0
  %1146 = vmatpush1.bf16.msra.mxu0 0
  %1147 = vmatprep.subr.bf16.mxu0 0
  %1148 = vmatpush1.bf16.msra.mxu0 0
  %1149 = vmatprep.subr.bf16.mxu0 0
  %1150 = vmatpush1.bf16.msra.mxu0 0
  %1151 = vmatprep.subr.bf16.mxu0 0
  %1152 = vmatpush1.bf16.msra.mxu0 %v1129
  %1153 = vmatprep.subr.bf16.mxu0 0
  %1154 = vmatpush2.bf16.msra.mxu0 0
  %1155 = vmatprep.subr.bf16.mxu0 0
  %1156 = vmatpush2.bf16.msra.mxu0 0
  %1157 = vmatprep.subr.bf16.mxu0 0
  %1158 = vmatpush2.bf16.msra.mxu0 0
  %1159 = vmatprep.subr.bf16.mxu0 0
  %1160 = vmatpush2.bf16.msra.mxu0 0
  %1161 = vmatprep.subr.bf16.mxu0 0
  %1162 = vmatpush2.bf16.msra.mxu0 0
  %1163 = vmatprep.subr.bf16.mxu0 0
  %1164 = vmatpush2.bf16.msra.mxu0 0
  %1165 = vmatprep.subr.bf16.mxu0 0
  %1166 = vmatpush2.bf16.msra.mxu0 0
  %1167 = vmatprep.subr.bf16.mxu0 0
  %1168 = vmatpush2.bf16.msra.mxu0 0
  %1169 = vmatprep.mubr.bf16.mxu0 0
  %1170 = vmatmul.mubr.bf16.gmra.mxu0 %v1132
  %v1171 = vpop.f32.mrf.mxu0
  %v1172 = vadd.f32 0.0, %v1171
  %v1173 = vpop.f32.mrf.mxu0
  %v1174 = vpop.f32.mrf.mxu0
  %v1175 = vadd.f32 0.0, %v1174
  %v1176 = vpop.f32.mrf.mxu0
  %1177 = vmatprep.mubr.bf16.mxu0 0
  %1178 = vmatmul.mubr.bf16.gmra.mxu0 %v1135
  %v1179 = vpop.f32.mrf.mxu0
  %v1180 = vadd.f32 0.0, %v1179
  %v1181 = vpop.f32.mrf.mxu0
  %v1182 = vpop.f32.mrf.mxu0
  %v1183 = vadd.f32 0.0, %v1182
  %v1184 = vpop.f32.mrf.mxu0
  %1185 = vdwg.mxu0
  %v1186 = vadd.f32 %v1106, %v1172
  %v1187 = vadd.f32 %v1107, %v1175
  %v1188 = vadd.f32 %v1108, %v1180
  %v1189 = vadd.f32 %v1109, %v1183
  %s1190 = scalar_lea.vmem %s4, 224
  %v1191 = vld [vmem:[%s1190] sm:$0xf]
  %v1192 = vld [vmem:[%s1190 + $0x4] sm:$0xf]
  %v1193 = vld [vmem:[%s1190 + $0x8] sm:$0xf]
  %v1194 = vld [vmem:[%s1190 + $0xc] sm:$0xf]
  %v1199 = vunpack.c.l.b16 %v1191
  %v1200 = vunpack.c.l.b16 %v1192
  %v1201 = vunpack.c.l.b16 %v1193
  %v1202 = vunpack.c.l.b16 %v1194
  %v1203 = vpack.c.b16 %v1200, %v1199
  %v1204 = vpack.c.b16 %v1202, %v1201
  %1205 = vrot.lane.b32.xlu0 %v551, 124
  %v1206 = vpop.permute.xlu0 %1205
  %1207 = vrot.lane.b32.xlu0 %v552, 124
  %v1208 = vpop.permute.xlu0 %1207
  %v1209 = vsel %vm888, %v1206, %v1208
  %v1212 = vsel %vm56, %v1203, 0
  %v1215 = vsel %vm56, %v1204, 0
  %1217 = vmatprep.subr.bf16.mxu0 0
  %1218 = vmatpush1.bf16.msra.mxu0 0
  %1219 = vmatprep.subr.bf16.mxu0 0
  %1220 = vmatpush1.bf16.msra.mxu0 0
  %1221 = vmatprep.subr.bf16.mxu0 0
  %1222 = vmatpush1.bf16.msra.mxu0 0
  %1223 = vmatprep.subr.bf16.mxu0 0
  %1224 = vmatpush1.bf16.msra.mxu0 0
  %1225 = vmatprep.subr.bf16.mxu0 0
  %1226 = vmatpush1.bf16.msra.mxu0 0
  %1227 = vmatprep.subr.bf16.mxu0 0
  %1228 = vmatpush1.bf16.msra.mxu0 0
  %1229 = vmatprep.subr.bf16.mxu0 0
  %1230 = vmatpush1.bf16.msra.mxu0 0
  %1231 = vmatprep.subr.bf16.mxu0 0
  %1232 = vmatpush1.bf16.msra.mxu0 %v1209
  %1233 = vmatprep.subr.bf16.mxu0 0
  %1234 = vmatpush2.bf16.msra.mxu0 0
  %1235 = vmatprep.subr.bf16.mxu0 0
  %1236 = vmatpush2.bf16.msra.mxu0 0
  %1237 = vmatprep.subr.bf16.mxu0 0
  %1238 = vmatpush2.bf16.msra.mxu0 0
  %1239 = vmatprep.subr.bf16.mxu0 0
  %1240 = vmatpush2.bf16.msra.mxu0 0
  %1241 = vmatprep.subr.bf16.mxu0 0
  %1242 = vmatpush2.bf16.msra.mxu0 0
  %1243 = vmatprep.subr.bf16.mxu0 0
  %1244 = vmatpush2.bf16.msra.mxu0 0
  %1245 = vmatprep.subr.bf16.mxu0 0
  %1246 = vmatpush2.bf16.msra.mxu0 0
  %1247 = vmatprep.subr.bf16.mxu0 0
  %1248 = vmatpush2.bf16.msra.mxu0 0
  %1249 = vmatprep.mubr.bf16.mxu0 0
  %1250 = vmatmul.mubr.bf16.gmra.mxu0 %v1212
  %v1251 = vpop.f32.mrf.mxu0
  %v1252 = vadd.f32 0.0, %v1251
  %v1253 = vpop.f32.mrf.mxu0
  %v1254 = vpop.f32.mrf.mxu0
  %v1255 = vadd.f32 0.0, %v1254
  %v1256 = vpop.f32.mrf.mxu0
  %1257 = vmatprep.mubr.bf16.mxu0 0
  %1258 = vmatmul.mubr.bf16.gmra.mxu0 %v1215
  %v1259 = vpop.f32.mrf.mxu0
  %v1260 = vadd.f32 0.0, %v1259
  %v1261 = vpop.f32.mrf.mxu0
  %v1262 = vpop.f32.mrf.mxu0
  %v1263 = vadd.f32 0.0, %v1262
  %v1264 = vpop.f32.mrf.mxu0
  %1265 = vdwg.mxu0
  %v1266 = vadd.f32 %v1186, %v1252
  %v1267 = vadd.f32 %v1187, %v1255
  %v1268 = vadd.f32 %v1188, %v1260
  %v1269 = vadd.f32 %v1189, %v1263
  %s1270 = scalar_lea.vmem %s4, 240
  %v1271 = vld [vmem:[%s1270] sm:$0xf]
  %v1272 = vld [vmem:[%s1270 + $0x4] sm:$0xf]
  %v1273 = vld [vmem:[%s1270 + $0x8] sm:$0xf]
  %v1274 = vld [vmem:[%s1270 + $0xc] sm:$0xf]
  %v1279 = vunpack.c.l.b16 %v1271
  %v1280 = vunpack.c.l.b16 %v1272
  %v1281 = vunpack.c.l.b16 %v1273
  %v1282 = vunpack.c.l.b16 %v1274
  %v1283 = vpack.c.b16 %v1280, %v1279
  %v1284 = vpack.c.b16 %v1282, %v1281
  %1285 = vrot.lane.b32.xlu0 %v641, 124
  %v1286 = vpop.permute.xlu0 %1285
  %1287 = vrot.lane.b32.xlu0 %v642, 124
  %v1288 = vpop.permute.xlu0 %1287
  %v1289 = vsel %vm888, %v1286, %v1288
  %v1292 = vsel %vm56, %v1283, 0
  %v1295 = vsel %vm56, %v1284, 0
  %1297 = vmatprep.subr.bf16.mxu0 0
  %1298 = vmatpush1.bf16.msra.mxu0 0
  %1299 = vmatprep.subr.bf16.mxu0 0
  %1300 = vmatpush1.bf16.msra.mxu0 0
  %1301 = vmatprep.subr.bf16.mxu0 0
  %1302 = vmatpush1.bf16.msra.mxu0 0
  %1303 = vmatprep.subr.bf16.mxu0 0
  %1304 = vmatpush1.bf16.msra.mxu0 0
  %1305 = vmatprep.subr.bf16.mxu0 0
  %1306 = vmatpush1.bf16.msra.mxu0 0
  %1307 = vmatprep.subr.bf16.mxu0 0
  %1308 = vmatpush1.bf16.msra.mxu0 0
  %1309 = vmatprep.subr.bf16.mxu0 0
  %1310 = vmatpush1.bf16.msra.mxu0 0
  %1311 = vmatprep.subr.bf16.mxu0 0
  %1312 = vmatpush1.bf16.msra.mxu0 %v1289
  %1313 = vmatprep.subr.bf16.mxu0 0
  %1314 = vmatpush2.bf16.msra.mxu0 0
  %1315 = vmatprep.subr.bf16.mxu0 0
  %1316 = vmatpush2.bf16.msra.mxu0 0
  %1317 = vmatprep.subr.bf16.mxu0 0
  %1318 = vmatpush2.bf16.msra.mxu0 0
  %1319 = vmatprep.subr.bf16.mxu0 0
  %1320 = vmatpush2.bf16.msra.mxu0 0
  %1321 = vmatprep.subr.bf16.mxu0 0
  %1322 = vmatpush2.bf16.msra.mxu0 0
  %1323 = vmatprep.subr.bf16.mxu0 0
  %1324 = vmatpush2.bf16.msra.mxu0 0
  %1325 = vmatprep.subr.bf16.mxu0 0
  %1326 = vmatpush2.bf16.msra.mxu0 0
  %1327 = vmatprep.subr.bf16.mxu0 0
  %1328 = vmatpush2.bf16.msra.mxu0 0
  %1329 = vmatprep.mubr.bf16.mxu0 0
  %1330 = vmatmul.mubr.bf16.gmra.mxu0 %v1292
  %v1331 = vpop.f32.mrf.mxu0
  %v1332 = vadd.f32 0.0, %v1331
  %v1333 = vpop.f32.mrf.mxu0
  %v1334 = vpop.f32.mrf.mxu0
  %v1335 = vadd.f32 0.0, %v1334
  %v1336 = vpop.f32.mrf.mxu0
  %1337 = vmatprep.mubr.bf16.mxu0 0
  %1338 = vmatmul.mubr.bf16.gmra.mxu0 %v1295
  %v1339 = vpop.f32.mrf.mxu0
  %v1340 = vadd.f32 0.0, %v1339
  %v1341 = vpop.f32.mrf.mxu0
  %v1342 = vpop.f32.mrf.mxu0
  %v1343 = vadd.f32 0.0, %v1342
  %v1344 = vpop.f32.mrf.mxu0
  %1345 = vdwg.mxu0
  %v1346 = vadd.f32 %v1266, %v1332
  %v1347 = vadd.f32 %v1267, %v1335
  %v1348 = vadd.f32 %v1268, %v1340
  %v1349 = vadd.f32 %v1269, %v1343
  %v1350 = vpack.c.bf16 %v1347, %v1346
  %v1351 = vpack.c.bf16 %v1349, %v1348
  %v1354 = vunpack.c.l.b16 %v1350
  %v1355 = vunpack.c.h.b16 %v1350
  %v1356 = vunpack.c.l.b16 %v1351
  %v1357 = vunpack.c.h.b16 %v1351
  %v1358 = vpack.c.b16 %v1354, %v1354
  %v1359 = vpack.c.b16 %v1355, %v1355
  %v1360 = vpack.c.b16 %v1356, %v1356
  %v1361 = vpack.c.b16 %v1357, %v1357
  %1366 = vst [vmem:[%s6] sm:$0xf] %v1358
  %1367 = vst [vmem:[%s6 + $0x4] sm:$0xf] %v1359
  %1368 = vst [vmem:[%s6 + $0x8] sm:$0xf] %v1360
  %1369 = vst [vmem:[%s6 + $0xc] sm:$0xf] %v1361
  %v1370 = vld [vmem:[%s5] sm:$0x1]
  %v1372 = vlaneseq
  %v1373 = vshrl.u32 %v1372, 7
  %v1374 = vsub.s32 0, %v1373
  %v1375 = vrot.slane %v1370, %v1374
  %v1377 = vmul.f32 %v1346, %v1375
  %v1378 = vmul.f32 %v1347, %v1375
  %v1379 = vmul.f32 %v1348, %v1375
  %v1380 = vmul.f32 %v1349, %v1375
  %1381 = vadd.xlane.f32.xlu0 %v1377
  %v1382 = vpop.xlane.xlu0 %1381
  %1383 = vadd.xlane.f32.xlu0 %v1378
  %v1384 = vpop.xlane.xlu0 %1383
  %1385 = vadd.xlane.f32.xlu0 %v1379
  %v1386 = vpop.xlane.xlu0 %1385
  %1387 = vadd.xlane.f32.xlu0 %v1380
  %v1388 = vpop.xlane.xlu0 %1387
  %vm1389 = vcmask 7168
  %1390 = vst.msk [vmem:[%s7] sm:$0xff] %vm1389, %v1382
  %1391 = vst.msk [vmem:[%s7 + $0x8] sm:$0xff] %vm1389, %v1384
  %1392 = vst.msk [vmem:[%s7 + $0x10] sm:$0xff] %vm1389, %v1386
  %1393 = vst.msk [vmem:[%s7 + $0x18] sm:$0xff] %vm1389, %v1388
  %v1394 = vmul.f32 %v1377, %v1346
  %v1395 = vmul.f32 %v1378, %v1347
  %v1396 = vmul.f32 %v1379, %v1348
  %v1397 = vmul.f32 %v1380, %v1349
  %1398 = vadd.xlane.f32.xlu0 %v1394
  %v1399 = vpop.xlane.xlu0 %1398
  %1400 = vadd.xlane.f32.xlu0 %v1395
  %v1401 = vpop.xlane.xlu0 %1400
  %1402 = vadd.xlane.f32.xlu0 %v1396
  %v1403 = vpop.xlane.xlu0 %1402
  %1404 = vadd.xlane.f32.xlu0 %v1397
  %v1405 = vpop.xlane.xlu0 %1404
  %1406 = vst.msk [vmem:[%s8] sm:$0xff] %vm1389, %v1399
  %1407 = vst.msk [vmem:[%s8 + $0x8] sm:$0xff] %vm1389, %v1401
  %1408 = vst.msk [vmem:[%s8 + $0x10] sm:$0xff] %vm1389, %v1403
  %1409 = vst.msk [vmem:[%s8 + $0x18] sm:$0xff] %vm1389, %v1405
  // Predicated region
  $region26: #{patchgan_forward.6} parent=0 // pred_check
    _
  $region27: #{patchgan_forward.6} parent=0 // pred_check_branch
    %1411 = sbr.rel (0) target = $region29
  $region28: #{patchgan_forward.6} parent=0 // pred_region
    _
  $region29: #{patchgan_forward.6} parent=0 // pred_fallthru
    _
  // Predicated region
  $region30: #{patchgan_forward.6} parent=0 // pred_check
    _
  $region31: #{patchgan_forward.6} parent=0 // pred_check_branch
    %1413 = sbr.rel (0) target = $region33
  $region32: #{patchgan_forward.6} parent=0 // pred_region
    _
  $region33: #{patchgan_forward.6} parent=0 // pred_fallthru
    _
  // Predicated region
  $region34: #{patchgan_forward.6} parent=0 // pred_check
    _
  $region35: #{patchgan_forward.6} parent=0 // pred_check_branch
    %1415 = sbr.rel (0) target = $region37
  $region36: #{patchgan_forward.6} parent=0 // pred_region
    _
  $region37: #{patchgan_forward.6} parent=0 // pred_fallthru
    _
  // Predicated region
  $region38: #{patchgan_forward.6} parent=0 // pred_check
    _
  $region39: #{patchgan_forward.6} parent=0 // pred_check_branch
    %1417 = sbr.rel (0) target = $region41
  $region40: #{patchgan_forward.6} parent=0 // pred_region
    _
  $region41: #{patchgan_forward.6} parent=0 // pred_fallthru
    _
  // Predicated region
  $region42: #{patchgan_forward.6} parent=0 // pred_check
    _
  $region43: #{patchgan_forward.6} parent=0 // pred_check_branch
    %1419 = sbr.rel (0) target = $region45
  $region44: #{patchgan_forward.6} parent=0 // pred_region
    _
  $region45: #{patchgan_forward.6} parent=0 // pred_fallthru
    _
  // Predicated region
  $region46: #{patchgan_forward.6} parent=0 // pred_check
    _
  $region47: #{patchgan_forward.6} parent=0 // pred_check_branch
    %1421 = sbr.rel (0) target = $region49
  $region48: #{patchgan_forward.6} parent=0 // pred_region
    _
  $region49: #{patchgan_forward.6} parent=0 // pred_fallthru
    _

// kernel: patchgan_forward.7
$region0: #{patchgan_forward.7}
  #allocation0 [shape = 'u32[]', space=smem, size = 0x4, offset = 0x4, fixed_abs, tag = 'smem constant byte address 0x4 - core index']
  #allocation1 [shape = 'u32[144,128]{1,0:T(1,128)}', space=vmem, size = 0x12000, scoped, tag = 'internal scratch']
  %s0 = inlined_call_operand.vmem [shape: bf16[32,256], index: 0, kind: input, shape index: {}]
  %s1 = inlined_call_operand.vmem [shape: bf16[16,16,32], index: 1, kind: input, shape index: {}]
  %s2 = inlined_call_operand.vmem [shape: f32[16,1], index: 2, kind: input, shape index: {}]
  %s3 = inlined_call_operand.vmem [shape: f32[16,128], index: 3, kind: output, shape index: {}]
  %s4 = sld [smem:[#allocation0]]
  $region22: #{patchgan_forward.7} parent=0
    _
  %s6 = ssub.s32 1, %s4
  %s7 = scalar_select 0, %s6, %s4
  // Predicated region
  $region2: #{patchgan_forward.7} parent=0 // pred_check
    _
  $region3: #{patchgan_forward.7} parent=0 // pred_check_branch
    %9 = sbr.rel (0) target = $region5
  $region4: #{patchgan_forward.7} parent=0 // pred_region
    _
  $region5: #{patchgan_forward.7} parent=0 // pred_fallthru
    _
  // Predicated region
  $region6: #{patchgan_forward.7} parent=0 // pred_check
    _
  $region7: #{patchgan_forward.7} parent=0 // pred_check_branch
    %11 = sbr.rel (0) target = $region9
  $region8: #{patchgan_forward.7} parent=0 // pred_region
    _
  $region9: #{patchgan_forward.7} parent=0 // pred_fallthru
    _
  // Predicated region
  $region10: #{patchgan_forward.7} parent=0 // pred_check
    _
  $region11: #{patchgan_forward.7} parent=0 // pred_check_branch
    %13 = sbr.rel (0) target = $region13
  $region12: #{patchgan_forward.7} parent=0 // pred_region
    _
  $region13: #{patchgan_forward.7} parent=0 // pred_fallthru
    _
  %v15 = vld [vmem:[%s0] sm:$0xf]
  %v16 = vld [vmem:[%s0 + $0x8] sm:$0xf]
  %v17 = vld [vmem:[%s0 + $0x10] sm:$0xf]
  %v18 = vld [vmem:[%s0 + $0x18] sm:$0xf]
  %v19 = vld [vmem:[%s1] sm:$0xf]
  %v20 = vld [vmem:[%s1 + $0x4] sm:$0xf]
  %v21 = vld [vmem:[%s0] sm:$0xff]
  %v22 = vld [vmem:[%s0 + $0x8] sm:$0xff]
  %v23 = vld [vmem:[%s0 + $0x10] sm:$0xff]
  %v24 = vld [vmem:[%s0 + $0x18] sm:$0xff]
  %s25 = scalar_lea.vmem %s1, 8
  %v26 = vld [vmem:[%s25] sm:$0xf]
  %v27 = vld [vmem:[%s25 + $0x4] sm:$0xf]
  %v30 = vunpack.c.l.b16 %v26
  %v31 = vunpack.c.l.b16 %v27
  %v32 = vpack.c.b16 %v31, %v30
  %v37 = vunpack.c.l.b16 %v21
  %v38 = vunpack.c.h.b16 %v21
  %v39 = vunpack.c.l.b16 %v22
  %v40 = vunpack.c.h.b16 %v22
  %v41 = vunpack.c.l.b16 %v23
  %v42 = vunpack.c.h.b16 %v23
  %v43 = vunpack.c.l.b16 %v24
  %v44 = vunpack.c.h.b16 %v24
  %v45 = vpack.c.b16 %v39, %v37
  %v46 = vpack.c.b16 %v40, %v38
  %v47 = vpack.c.b16 %v43, %v41
  %v48 = vpack.c.b16 %v44, %v42
  %49 = vrot.lane.b32.xlu0 %v45, 127
  %v50 = vpop.permute.xlu0 %49
  %51 = vrot.lane.b32.xlu0 %v46, 127
  %v52 = vpop.permute.xlu0 %51
  %53 = vrot.lane.b32.xlu0 %v47, 127
  %v54 = vpop.permute.xlu0 %53
  %55 = vrot.lane.b32.xlu0 %v48, 127
  %v56 = vpop.permute.xlu0 %55
  %vm57 = vcmask 1039360
  %v58 = vsel %vm57, %v50, %v52
  %v59 = vsel %vm57, %v54, %v56
  %vm62 = vcmask 261120
  %v64 = vsel %vm62, %v32, 0
  %66 = vmatprep.subr.bf16.mxu0 0
  %67 = vmatpush1.bf16.msra.mxu0 0
  %68 = vmatprep.subr.bf16.mxu0 0
  %69 = vmatpush1.bf16.msra.mxu0 0
  %70 = vmatprep.subr.bf16.mxu0 0
  %71 = vmatpush1.bf16.msra.mxu0 0
  %72 = vmatprep.subr.bf16.mxu0 0
  %73 = vmatpush1.bf16.msra.mxu0 0
  %74 = vmatprep.subr.bf16.mxu0 0
  %75 = vmatpush1.bf16.msra.mxu0 0
  %76 = vmatprep.subr.bf16.mxu0 0
  %77 = vmatpush1.bf16.msra.mxu0 0
  %78 = vmatprep.subr.bf16.mxu0 0
  %79 = vmatpush1.bf16.msra.mxu0 %v59
  %80 = vmatprep.subr.bf16.mxu0 0
  %81 = vmatpush1.bf16.msra.mxu0 %v58
  %82 = vmatprep.subr.bf16.mxu0 0
  %83 = vmatpush2.bf16.msra.mxu0 0
  %84 = vmatprep.subr.bf16.mxu0 0
  %85 = vmatpush2.bf16.msra.mxu0 0
  %86 = vmatprep.subr.bf16.mxu0 0
  %87 = vmatpush2.bf16.msra.mxu0 0
  %88 = vmatprep.subr.bf16.mxu0 0
  %89 = vmatpush2.bf16.msra.mxu0 0
  %90 = vmatprep.subr.bf16.mxu0 0
  %91 = vmatpush2.bf16.msra.mxu0 0
  %92 = vmatprep.subr.bf16.mxu0 0
  %93 = vmatpush2.bf16.msra.mxu0 0
  %94 = vmatprep.subr.bf16.mxu0 0
  %95 = vmatpush2.bf16.msra.mxu0 0
  %96 = vmatprep.subr.bf16.mxu0 0
  %97 = vmatpush2.bf16.msra.mxu0 0
  %98 = vmatprep.mubr.bf16.mxu0 0
  %99 = vmatmul.mubr.bf16.gmra.mxu0 %v64
  %v100 = vpop.f32.mrf.mxu0
  %v101 = vadd.f32 0.0, %v100
  %v102 = vpop.f32.mrf.mxu0
  %v103 = vpop.f32.mrf.mxu0
  %v104 = vadd.f32 0.0, %v103
  %v105 = vpop.f32.mrf.mxu0
  %106 = vdwg.mxu0
  %v109 = vunpack.c.l.b16 %v19
  %v110 = vunpack.c.l.b16 %v20
  %v111 = vpack.c.b16 %v110, %v109
  %v116 = vunpack.c.l.b16 %v15
  %v117 = vunpack.c.l.b16 %v16
  %v118 = vunpack.c.l.b16 %v17
  %v119 = vunpack.c.l.b16 %v18
  %v120 = vpack.c.b16 %v117, %v116
  %v121 = vpack.c.b16 %v119, %v118
  %v125 = vsel %vm62, %v111, 0
  %127 = vmatprep.subr.bf16.mxu0 0
  %128 = vmatpush1.bf16.msra.mxu0 0
  %129 = vmatprep.subr.bf16.mxu0 0
  %130 = vmatpush1.bf16.msra.mxu0 0
  %131 = vmatprep.subr.bf16.mxu0 0
  %132 = vmatpush1.bf16.msra.mxu0 0
  %133 = vmatprep.subr.bf16.mxu0 0
  %134 = vmatpush1.bf16.msra.mxu0 0
  %135 = vmatprep.subr.bf16.mxu0 0
  %136 = vmatpush1.bf16.msra.mxu0 0
  %137 = vmatprep.subr.bf16.mxu0 0
  %138 = vmatpush1.bf16.msra.mxu0 0
  %139 = vmatprep.subr.bf16.mxu0 0
  %140 = vmatpush1.bf16.msra.mxu0 %v121
  %141 = vmatprep.subr.bf16.mxu0 0
  %142 = vmatpush1.bf16.msra.mxu0 %v120
  %143 = vmatprep.subr.bf16.mxu0 0
  %144 = vmatpush2.bf16.msra.mxu0 0
  %145 = vmatprep.subr.bf16.mxu0 0
  %146 = vmatpush2.bf16.msra.mxu0 0
  %147 = vmatprep.subr.bf16.mxu0 0
  %148 = vmatpush2.bf16.msra.mxu0 0
  %149 = vmatprep.subr.bf16.mxu0 0
  %150 = vmatpush2.bf16.msra.mxu0 0
  %151 = vmatprep.subr.bf16.mxu0 0
  %152 = vmatpush2.bf16.msra.mxu0 0
  %153 = vmatprep.subr.bf16.mxu0 0
  %154 = vmatpush2.bf16.msra.mxu0 0
  %155 = vmatprep.subr.bf16.mxu0 0
  %156 = vmatpush2.bf16.msra.mxu0 0
  %157 = vmatprep.subr.bf16.mxu0 0
  %158 = vmatpush2.bf16.msra.mxu0 0
  %159 = vmatprep.mubr.bf16.mxu0 0
  %160 = vmatmul.mubr.bf16.gmra.mxu0 %v125
  %v161 = vpop.f32.mrf.mxu0
  %v162 = vadd.f32 %v101, %v161
  %v163 = vpop.f32.mrf.mxu0
  %v164 = vpop.f32.mrf.mxu0
  %v165 = vadd.f32 %v104, %v164
  %v166 = vpop.f32.mrf.mxu0
  %167 = vdwg.mxu0
  %s168 = scalar_lea.vmem %s1, 16
  %v169 = vld [vmem:[%s168] sm:$0xf]
  %v170 = vld [vmem:[%s168 + $0x4] sm:$0xf]
  %v173 = vunpack.c.l.b16 %v169
  %v174 = vunpack.c.l.b16 %v170
  %v175 = vpack.c.b16 %v174, %v173
  %176 = vrot.lane.b32.xlu0 %v45, 126
  %v177 = vpop.permute.xlu0 %176
  %178 = vrot.lane.b32.xlu0 %v46, 126
  %v179 = vpop.permute.xlu0 %178
  %180 = vrot.lane.b32.xlu0 %v47, 126
  %v181 = vpop.permute.xlu0 %180
  %182 = vrot.lane.b32.xlu0 %v48, 126
  %v183 = vpop.permute.xlu0 %182
  %vm184 = vcmask 1031168
  %v185 = vsel %vm184, %v177, %v179
  %v186 = vsel %vm184, %v181, %v183
  %v190 = vsel %vm62, %v175, 0
  %192 = vmatprep.subr.bf16.mxu0 0
  %193 = vmatpush1.bf16.msra.mxu0 0
  %194 = vmatprep.subr.bf16.mxu0 0
  %195 = vmatpush1.bf16.msra.mxu0 0
  %196 = vmatprep.subr.bf16.mxu0 0
  %197 = vmatpush1.bf16.msra.mxu0 0
  %198 = vmatprep.subr.bf16.mxu0 0
  %199 = vmatpush1.bf16.msra.mxu0 0
  %200 = vmatprep.subr.bf16.mxu0 0
  %201 = vmatpush1.bf16.msra.mxu0 0
  %202 = vmatprep.subr.bf16.mxu0 0
  %203 = vmatpush1.bf16.msra.mxu0 0
  %204 = vmatprep.subr.bf16.mxu0 0
  %205 = vmatpush1.bf16.msra.mxu0 %v186
  %206 = vmatprep.subr.bf16.mxu0 0
  %207 = vmatpush1.bf16.msra.mxu0 %v185
  %208 = vmatprep.subr.bf16.mxu0 0
  %209 = vmatpush2.bf16.msra.mxu0 0
  %210 = vmatprep.subr.bf16.mxu0 0
  %211 = vmatpush2.bf16.msra.mxu0 0
  %212 = vmatprep.subr.bf16.mxu0 0
  %213 = vmatpush2.bf16.msra.mxu0 0
  %214 = vmatprep.subr.bf16.mxu0 0
  %215 = vmatpush2.bf16.msra.mxu0 0
  %216 = vmatprep.subr.bf16.mxu0 0
  %217 = vmatpush2.bf16.msra.mxu0 0
  %218 = vmatprep.subr.bf16.mxu0 0
  %219 = vmatpush2.bf16.msra.mxu0 0
  %220 = vmatprep.subr.bf16.mxu0 0
  %221 = vmatpush2.bf16.msra.mxu0 0
  %222 = vmatprep.subr.bf16.mxu0 0
  %223 = vmatpush2.bf16.msra.mxu0 0
  %224 = vmatprep.mubr.bf16.mxu0 0
  %225 = vmatmul.mubr.bf16.gmra.mxu0 %v190
  %v226 = vpop.f32.mrf.mxu0
  %v227 = vadd.f32 0.0, %v226
  %v228 = vpop.f32.mrf.mxu0
  %v229 = vpop.f32.mrf.mxu0
  %v230 = vadd.f32 0.0, %v229
  %v231 = vpop.f32.mrf.mxu0
  %232 = vdwg.mxu0
  %v233 = vadd.f32 %v162, %v227
  %v234 = vadd.f32 %v165, %v230
  %s235 = scalar_lea.vmem %s1, 24
  %v236 = vld [vmem:[%s235] sm:$0xf]
  %v237 = vld [vmem:[%s235 + $0x4] sm:$0xf]
  %v240 = vunpack.c.l.b16 %v236
  %v241 = vunpack.c.l.b16 %v237
  %v242 = vpack.c.b16 %v241, %v240
  %243 = vrot.lane.b32.xlu0 %v45, 125
  %v244 = vpop.permute.xlu0 %243
  %245 = vrot.lane.b32.xlu0 %v46, 125
  %v246 = vpop.permute.xlu0 %245
  %247 = vrot.lane.b32.xlu0 %v47, 125
  %v248 = vpop.permute.xlu0 %247
  %249 = vrot.lane.b32.xlu0 %v48, 125
  %v250 = vpop.permute.xlu0 %249
  %vm251 = vcmask 1022976
  %v252 = vsel %vm251, %v244, %v246
  %v253 = vsel %vm251, %v248, %v250
  %v257 = vsel %vm62, %v242, 0
  %259 = vmatprep.subr.bf16.mxu0 0
  %260 = vmatpush1.bf16.msra.mxu0 0
  %261 = vmatprep.subr.bf16.mxu0 0
  %262 = vmatpush1.bf16.msra.mxu0 0
  %263 = vmatprep.subr.bf16.mxu0 0
  %264 = vmatpush1.bf16.msra.mxu0 0
  %265 = vmatprep.subr.bf16.mxu0 0
  %266 = vmatpush1.bf16.msra.mxu0 0
  %267 = vmatprep.subr.bf16.mxu0 0
  %268 = vmatpush1.bf16.msra.mxu0 0
  %269 = vmatprep.subr.bf16.mxu0 0
  %270 = vmatpush1.bf16.msra.mxu0 0
  %271 = vmatprep.subr.bf16.mxu0 0
  %272 = vmatpush1.bf16.msra.mxu0 %v253
  %273 = vmatprep.subr.bf16.mxu0 0
  %274 = vmatpush1.bf16.msra.mxu0 %v252
  %275 = vmatprep.subr.bf16.mxu0 0
  %276 = vmatpush2.bf16.msra.mxu0 0
  %277 = vmatprep.subr.bf16.mxu0 0
  %278 = vmatpush2.bf16.msra.mxu0 0
  %279 = vmatprep.subr.bf16.mxu0 0
  %280 = vmatpush2.bf16.msra.mxu0 0
  %281 = vmatprep.subr.bf16.mxu0 0
  %282 = vmatpush2.bf16.msra.mxu0 0
  %283 = vmatprep.subr.bf16.mxu0 0
  %284 = vmatpush2.bf16.msra.mxu0 0
  %285 = vmatprep.subr.bf16.mxu0 0
  %286 = vmatpush2.bf16.msra.mxu0 0
  %287 = vmatprep.subr.bf16.mxu0 0
  %288 = vmatpush2.bf16.msra.mxu0 0
  %289 = vmatprep.subr.bf16.mxu0 0
  %290 = vmatpush2.bf16.msra.mxu0 0
  %291 = vmatprep.mubr.bf16.mxu0 0
  %292 = vmatmul.mubr.bf16.gmra.mxu0 %v257
  %v293 = vpop.f32.mrf.mxu0
  %v294 = vadd.f32 0.0, %v293
  %v295 = vpop.f32.mrf.mxu0
  %v296 = vpop.f32.mrf.mxu0
  %v297 = vadd.f32 0.0, %v296
  %v298 = vpop.f32.mrf.mxu0
  %299 = vdwg.mxu0
  %v300 = vadd.f32 %v233, %v294
  %v301 = vadd.f32 %v234, %v297
  %s302 = scalar_lea.vmem %s1, 32
  %v303 = vld [vmem:[%s302] sm:$0xf]
  %v304 = vld [vmem:[%s302 + $0x4] sm:$0xf]
  %v307 = vunpack.c.l.b16 %v303
  %v308 = vunpack.c.l.b16 %v304
  %v309 = vpack.c.b16 %v308, %v307
  %310 = vrot.lane.b32.xlu0 %v45, 124
  %v311 = vpop.permute.xlu0 %310
  %312 = vrot.lane.b32.xlu0 %v46, 124
  %v313 = vpop.permute.xlu0 %312
  %314 = vrot.lane.b32.xlu0 %v47, 124
  %v315 = vpop.permute.xlu0 %314
  %316 = vrot.lane.b32.xlu0 %v48, 124
  %v317 = vpop.permute.xlu0 %316
  %vm318 = vcmask 1014784
  %v319 = vsel %vm318, %v311, %v313
  %v320 = vsel %vm318, %v315, %v317
  %v324 = vsel %vm62, %v309, 0
  %326 = vmatprep.subr.bf16.mxu0 0
  %327 = vmatpush1.bf16.msra.mxu0 0
  %328 = vmatprep.subr.bf16.mxu0 0
  %329 = vmatpush1.bf16.msra.mxu0 0
  %330 = vmatprep.subr.bf16.mxu0 0
  %331 = vmatpush1.bf16.msra.mxu0 0
  %332 = vmatprep.subr.bf16.mxu0 0
  %333 = vmatpush1.bf16.msra.mxu0 0
  %334 = vmatprep.subr.bf16.mxu0 0
  %335 = vmatpush1.bf16.msra.mxu0 0
  %336 = vmatprep.subr.bf16.mxu0 0
  %337 = vmatpush1.bf16.msra.mxu0 0
  %338 = vmatprep.subr.bf16.mxu0 0
  %339 = vmatpush1.bf16.msra.mxu0 %v320
  %340 = vmatprep.subr.bf16.mxu0 0
  %341 = vmatpush1.bf16.msra.mxu0 %v319
  %342 = vmatprep.subr.bf16.mxu0 0
  %343 = vmatpush2.bf16.msra.mxu0 0
  %344 = vmatprep.subr.bf16.mxu0 0
  %345 = vmatpush2.bf16.msra.mxu0 0
  %346 = vmatprep.subr.bf16.mxu0 0
  %347 = vmatpush2.bf16.msra.mxu0 0
  %348 = vmatprep.subr.bf16.mxu0 0
  %349 = vmatpush2.bf16.msra.mxu0 0
  %350 = vmatprep.subr.bf16.mxu0 0
  %351 = vmatpush2.bf16.msra.mxu0 0
  %352 = vmatprep.subr.bf16.mxu0 0
  %353 = vmatpush2.bf16.msra.mxu0 0
  %354 = vmatprep.subr.bf16.mxu0 0
  %355 = vmatpush2.bf16.msra.mxu0 0
  %356 = vmatprep.subr.bf16.mxu0 0
  %357 = vmatpush2.bf16.msra.mxu0 0
  %358 = vmatprep.mubr.bf16.mxu0 0
  %359 = vmatmul.mubr.bf16.gmra.mxu0 %v324
  %v360 = vpop.f32.mrf.mxu0
  %v361 = vadd.f32 0.0, %v360
  %v362 = vpop.f32.mrf.mxu0
  %v363 = vpop.f32.mrf.mxu0
  %v364 = vadd.f32 0.0, %v363
  %v365 = vpop.f32.mrf.mxu0
  %366 = vdwg.mxu0
  %v367 = vadd.f32 %v300, %v361
  %v368 = vadd.f32 %v301, %v364
  %s369 = scalar_lea.vmem %s1, 40
  %v370 = vld [vmem:[%s369] sm:$0xf]
  %v371 = vld [vmem:[%s369 + $0x4] sm:$0xf]
  %v374 = vunpack.c.l.b16 %v370
  %v375 = vunpack.c.l.b16 %v371
  %v376 = vpack.c.b16 %v375, %v374
  %377 = vrot.lane.b32.xlu0 %v45, 123
  %v378 = vpop.permute.xlu0 %377
  %379 = vrot.lane.b32.xlu0 %v46, 123
  %v380 = vpop.permute.xlu0 %379
  %381 = vrot.lane.b32.xlu0 %v47, 123
  %v382 = vpop.permute.xlu0 %381
  %383 = vrot.lane.b32.xlu0 %v48, 123
  %v384 = vpop.permute.xlu0 %383
  %vm385 = vcmask 1006592
  %v386 = vsel %vm385, %v378, %v380
  %v387 = vsel %vm385, %v382, %v384
  %v391 = vsel %vm62, %v376, 0
  %393 = vmatprep.subr.bf16.mxu0 0
  %394 = vmatpush1.bf16.msra.mxu0 0
  %395 = vmatprep.subr.bf16.mxu0 0
  %396 = vmatpush1.bf16.msra.mxu0 0
  %397 = vmatprep.subr.bf16.mxu0 0
  %398 = vmatpush1.bf16.msra.mxu0 0
  %399 = vmatprep.subr.bf16.mxu0 0
  %400 = vmatpush1.bf16.msra.mxu0 0
  %401 = vmatprep.subr.bf16.mxu0 0
  %402 = vmatpush1.bf16.msra.mxu0 0
  %403 = vmatprep.subr.bf16.mxu0 0
  %404 = vmatpush1.bf16.msra.mxu0 0
  %405 = vmatprep.subr.bf16.mxu0 0
  %406 = vmatpush1.bf16.msra.mxu0 %v387
  %407 = vmatprep.subr.bf16.mxu0 0
  %408 = vmatpush1.bf16.msra.mxu0 %v386
  %409 = vmatprep.subr.bf16.mxu0 0
  %410 = vmatpush2.bf16.msra.mxu0 0
  %411 = vmatprep.subr.bf16.mxu0 0
  %412 = vmatpush2.bf16.msra.mxu0 0
  %413 = vmatprep.subr.bf16.mxu0 0
  %414 = vmatpush2.bf16.msra.mxu0 0
  %415 = vmatprep.subr.bf16.mxu0 0
  %416 = vmatpush2.bf16.msra.mxu0 0
  %417 = vmatprep.subr.bf16.mxu0 0
  %418 = vmatpush2.bf16.msra.mxu0 0
  %419 = vmatprep.subr.bf16.mxu0 0
  %420 = vmatpush2.bf16.msra.mxu0 0
  %421 = vmatprep.subr.bf16.mxu0 0
  %422 = vmatpush2.bf16.msra.mxu0 0
  %423 = vmatprep.subr.bf16.mxu0 0
  %424 = vmatpush2.bf16.msra.mxu0 0
  %425 = vmatprep.mubr.bf16.mxu0 0
  %426 = vmatmul.mubr.bf16.gmra.mxu0 %v391
  %v427 = vpop.f32.mrf.mxu0
  %v428 = vadd.f32 0.0, %v427
  %v429 = vpop.f32.mrf.mxu0
  %v430 = vpop.f32.mrf.mxu0
  %v431 = vadd.f32 0.0, %v430
  %v432 = vpop.f32.mrf.mxu0
  %433 = vdwg.mxu0
  %v434 = vadd.f32 %v367, %v428
  %v435 = vadd.f32 %v368, %v431
  %s436 = scalar_lea.vmem %s1, 48
  %v437 = vld [vmem:[%s436] sm:$0xf]
  %v438 = vld [vmem:[%s436 + $0x4] sm:$0xf]
  %v441 = vunpack.c.l.b16 %v437
  %v442 = vunpack.c.l.b16 %v438
  %v443 = vpack.c.b16 %v442, %v441
  %444 = vrot.lane.b32.xlu0 %v45, 122
  %v445 = vpop.permute.xlu0 %444
  %446 = vrot.lane.b32.xlu0 %v46, 122
  %v447 = vpop.permute.xlu0 %446
  %448 = vrot.lane.b32.xlu0 %v47, 122
  %v449 = vpop.permute.xlu0 %448
  %450 = vrot.lane.b32.xlu0 %v48, 122
  %v451 = vpop.permute.xlu0 %450
  %vm452 = vcmask 998400
  %v453 = vsel %vm452, %v445, %v447
  %v454 = vsel %vm452, %v449, %v451
  %v458 = vsel %vm62, %v443, 0
  %460 = vmatprep.subr.bf16.mxu0 0
  %461 = vmatpush1.bf16.msra.mxu0 0
  %462 = vmatprep.subr.bf16.mxu0 0
  %463 = vmatpush1.bf16.msra.mxu0 0
  %464 = vmatprep.subr.bf16.mxu0 0
  %465 = vmatpush1.bf16.msra.mxu0 0
  %466 = vmatprep.subr.bf16.mxu0 0
  %467 = vmatpush1.bf16.msra.mxu0 0
  %468 = vmatprep.subr.bf16.mxu0 0
  %469 = vmatpush1.bf16.msra.mxu0 0
  %470 = vmatprep.subr.bf16.mxu0 0
  %471 = vmatpush1.bf16.msra.mxu0 0
  %472 = vmatprep.subr.bf16.mxu0 0
  %473 = vmatpush1.bf16.msra.mxu0 %v454
  %474 = vmatprep.subr.bf16.mxu0 0
  %475 = vmatpush1.bf16.msra.mxu0 %v453
  %476 = vmatprep.subr.bf16.mxu0 0
  %477 = vmatpush2.bf16.msra.mxu0 0
  %478 = vmatprep.subr.bf16.mxu0 0
  %479 = vmatpush2.bf16.msra.mxu0 0
  %480 = vmatprep.subr.bf16.mxu0 0
  %481 = vmatpush2.bf16.msra.mxu0 0
  %482 = vmatprep.subr.bf16.mxu0 0
  %483 = vmatpush2.bf16.msra.mxu0 0
  %484 = vmatprep.subr.bf16.mxu0 0
  %485 = vmatpush2.bf16.msra.mxu0 0
  %486 = vmatprep.subr.bf16.mxu0 0
  %487 = vmatpush2.bf16.msra.mxu0 0
  %488 = vmatprep.subr.bf16.mxu0 0
  %489 = vmatpush2.bf16.msra.mxu0 0
  %490 = vmatprep.subr.bf16.mxu0 0
  %491 = vmatpush2.bf16.msra.mxu0 0
  %492 = vmatprep.mubr.bf16.mxu0 0
  %493 = vmatmul.mubr.bf16.gmra.mxu0 %v458
  %v494 = vpop.f32.mrf.mxu0
  %v495 = vadd.f32 0.0, %v494
  %v496 = vpop.f32.mrf.mxu0
  %v497 = vpop.f32.mrf.mxu0
  %v498 = vadd.f32 0.0, %v497
  %v499 = vpop.f32.mrf.mxu0
  %500 = vdwg.mxu0
  %v501 = vadd.f32 %v434, %v495
  %v502 = vadd.f32 %v435, %v498
  %s503 = scalar_lea.vmem %s1, 56
  %v504 = vld [vmem:[%s503] sm:$0xf]
  %v505 = vld [vmem:[%s503 + $0x4] sm:$0xf]
  %v508 = vunpack.c.l.b16 %v504
  %v509 = vunpack.c.l.b16 %v505
  %v510 = vpack.c.b16 %v509, %v508
  %511 = vrot.lane.b32.xlu0 %v45, 121
  %v512 = vpop.permute.xlu0 %511
  %513 = vrot.lane.b32.xlu0 %v46, 121
  %v514 = vpop.permute.xlu0 %513
  %515 = vrot.lane.b32.xlu0 %v47, 121
  %v516 = vpop.permute.xlu0 %515
  %517 = vrot.lane.b32.xlu0 %v48, 121
  %v518 = vpop.permute.xlu0 %517
  %vm519 = vcmask 990208
  %v520 = vsel %vm519, %v512, %v514
  %v521 = vsel %vm519, %v516, %v518
  %v525 = vsel %vm62, %v510, 0
  %527 = vmatprep.subr.bf16.mxu0 0
  %528 = vmatpush1.bf16.msra.mxu0 0
  %529 = vmatprep.subr.bf16.mxu0 0
  %530 = vmatpush1.bf16.msra.mxu0 0
  %531 = vmatprep.subr.bf16.mxu0 0
  %532 = vmatpush1.bf16.msra.mxu0 0
  %533 = vmatprep.subr.bf16.mxu0 0
  %534 = vmatpush1.bf16.msra.mxu0 0
  %535 = vmatprep.subr.bf16.mxu0 0
  %536 = vmatpush1.bf16.msra.mxu0 0
  %537 = vmatprep.subr.bf16.mxu0 0
  %538 = vmatpush1.bf16.msra.mxu0 0
  %539 = vmatprep.subr.bf16.mxu0 0
  %540 = vmatpush1.bf16.msra.mxu0 %v521
  %541 = vmatprep.subr.bf16.mxu0 0
  %542 = vmatpush1.bf16.msra.mxu0 %v520
  %543 = vmatprep.subr.bf16.mxu0 0
  %544 = vmatpush2.bf16.msra.mxu0 0
  %545 = vmatprep.subr.bf16.mxu0 0
  %546 = vmatpush2.bf16.msra.mxu0 0
  %547 = vmatprep.subr.bf16.mxu0 0
  %548 = vmatpush2.bf16.msra.mxu0 0
  %549 = vmatprep.subr.bf16.mxu0 0
  %550 = vmatpush2.bf16.msra.mxu0 0
  %551 = vmatprep.subr.bf16.mxu0 0
  %552 = vmatpush2.bf16.msra.mxu0 0
  %553 = vmatprep.subr.bf16.mxu0 0
  %554 = vmatpush2.bf16.msra.mxu0 0
  %555 = vmatprep.subr.bf16.mxu0 0
  %556 = vmatpush2.bf16.msra.mxu0 0
  %557 = vmatprep.subr.bf16.mxu0 0
  %558 = vmatpush2.bf16.msra.mxu0 0
  %559 = vmatprep.mubr.bf16.mxu0 0
  %560 = vmatmul.mubr.bf16.gmra.mxu0 %v525
  %v561 = vpop.f32.mrf.mxu0
  %v562 = vadd.f32 0.0, %v561
  %v563 = vpop.f32.mrf.mxu0
  %v564 = vpop.f32.mrf.mxu0
  %v565 = vadd.f32 0.0, %v564
  %v566 = vpop.f32.mrf.mxu0
  %567 = vdwg.mxu0
  %v568 = vadd.f32 %v501, %v562
  %v569 = vadd.f32 %v502, %v565
  %s570 = scalar_lea.vmem %s1, 64
  %v571 = vld [vmem:[%s570] sm:$0xf]
  %v572 = vld [vmem:[%s570 + $0x4] sm:$0xf]
  %v575 = vunpack.c.l.b16 %v571
  %v576 = vunpack.c.l.b16 %v572
  %v577 = vpack.c.b16 %v576, %v575
  %578 = vrot.lane.b32.xlu0 %v45, 120
  %v579 = vpop.permute.xlu0 %578
  %580 = vrot.lane.b32.xlu0 %v46, 120
  %v581 = vpop.permute.xlu0 %580
  %582 = vrot.lane.b32.xlu0 %v47, 120
  %v583 = vpop.permute.xlu0 %582
  %584 = vrot.lane.b32.xlu0 %v48, 120
  %v585 = vpop.permute.xlu0 %584
  %vm586 = vcmask 982016
  %v587 = vsel %vm586, %v579, %v581
  %v588 = vsel %vm586, %v583, %v585
  %v592 = vsel %vm62, %v577, 0
  %594 = vmatprep.subr.bf16.mxu0 0
  %595 = vmatpush1.bf16.msra.mxu0 0
  %596 = vmatprep.subr.bf16.mxu0 0
  %597 = vmatpush1.bf16.msra.mxu0 0
  %598 = vmatprep.subr.bf16.mxu0 0
  %599 = vmatpush1.bf16.msra.mxu0 0
  %600 = vmatprep.subr.bf16.mxu0 0
  %601 = vmatpush1.bf16.msra.mxu0 0
  %602 = vmatprep.subr.bf16.mxu0 0
  %603 = vmatpush1.bf16.msra.mxu0 0
  %604 = vmatprep.subr.bf16.mxu0 0
  %605 = vmatpush1.bf16.msra.mxu0 0
  %606 = vmatprep.subr.bf16.mxu0 0
  %607 = vmatpush1.bf16.msra.mxu0 %v588
  %608 = vmatprep.subr.bf16.mxu0 0
  %609 = vmatpush1.bf16.msra.mxu0 %v587
  %610 = vmatprep.subr.bf16.mxu0 0
  %611 = vmatpush2.bf16.msra.mxu0 0
  %612 = vmatprep.subr.bf16.mxu0 0
  %613 = vmatpush2.bf16.msra.mxu0 0
  %614 = vmatprep.subr.bf16.mxu0 0
  %615 = vmatpush2.bf16.msra.mxu0 0
  %616 = vmatprep.subr.bf16.mxu0 0
  %617 = vmatpush2.bf16.msra.mxu0 0
  %618 = vmatprep.subr.bf16.mxu0 0
  %619 = vmatpush2.bf16.msra.mxu0 0
  %620 = vmatprep.subr.bf16.mxu0 0
  %621 = vmatpush2.bf16.msra.mxu0 0
  %622 = vmatprep.subr.bf16.mxu0 0
  %623 = vmatpush2.bf16.msra.mxu0 0
  %624 = vmatprep.subr.bf16.mxu0 0
  %625 = vmatpush2.bf16.msra.mxu0 0
  %626 = vmatprep.mubr.bf16.mxu0 0
  %627 = vmatmul.mubr.bf16.gmra.mxu0 %v592
  %v628 = vpop.f32.mrf.mxu0
  %v629 = vadd.f32 0.0, %v628
  %v630 = vpop.f32.mrf.mxu0
  %v631 = vpop.f32.mrf.mxu0
  %v632 = vadd.f32 0.0, %v631
  %v633 = vpop.f32.mrf.mxu0
  %634 = vdwg.mxu0
  %v635 = vadd.f32 %v568, %v629
  %v636 = vadd.f32 %v569, %v632
  %s637 = scalar_lea.vmem %s1, 72
  %v638 = vld [vmem:[%s637] sm:$0xf]
  %v639 = vld [vmem:[%s637 + $0x4] sm:$0xf]
  %v642 = vunpack.c.l.b16 %v638
  %v643 = vunpack.c.l.b16 %v639
  %v644 = vpack.c.b16 %v643, %v642
  %645 = vrot.lane.b32.xlu0 %v45, 119
  %v646 = vpop.permute.xlu0 %645
  %647 = vrot.lane.b32.xlu0 %v46, 119
  %v648 = vpop.permute.xlu0 %647
  %649 = vrot.lane.b32.xlu0 %v47, 119
  %v650 = vpop.permute.xlu0 %649
  %651 = vrot.lane.b32.xlu0 %v48, 119
  %v652 = vpop.permute.xlu0 %651
  %vm653 = vcmask 973824
  %v654 = vsel %vm653, %v646, %v648
  %v655 = vsel %vm653, %v650, %v652
  %v659 = vsel %vm62, %v644, 0
  %661 = vmatprep.subr.bf16.mxu0 0
  %662 = vmatpush1.bf16.msra.mxu0 0
  %663 = vmatprep.subr.bf16.mxu0 0
  %664 = vmatpush1.bf16.msra.mxu0 0
  %665 = vmatprep.subr.bf16.mxu0 0
  %666 = vmatpush1.bf16.msra.mxu0 0
  %667 = vmatprep.subr.bf16.mxu0 0
  %668 = vmatpush1.bf16.msra.mxu0 0
  %669 = vmatprep.subr.bf16.mxu0 0
  %670 = vmatpush1.bf16.msra.mxu0 0
  %671 = vmatprep.subr.bf16.mxu0 0
  %672 = vmatpush1.bf16.msra.mxu0 0
  %673 = vmatprep.subr.bf16.mxu0 0
  %674 = vmatpush1.bf16.msra.mxu0 %v655
  %675 = vmatprep.subr.bf16.mxu0 0
  %676 = vmatpush1.bf16.msra.mxu0 %v654
  %677 = vmatprep.subr.bf16.mxu0 0
  %678 = vmatpush2.bf16.msra.mxu0 0
  %679 = vmatprep.subr.bf16.mxu0 0
  %680 = vmatpush2.bf16.msra.mxu0 0
  %681 = vmatprep.subr.bf16.mxu0 0
  %682 = vmatpush2.bf16.msra.mxu0 0
  %683 = vmatprep.subr.bf16.mxu0 0
  %684 = vmatpush2.bf16.msra.mxu0 0
  %685 = vmatprep.subr.bf16.mxu0 0
  %686 = vmatpush2.bf16.msra.mxu0 0
  %687 = vmatprep.subr.bf16.mxu0 0
  %688 = vmatpush2.bf16.msra.mxu0 0
  %689 = vmatprep.subr.bf16.mxu0 0
  %690 = vmatpush2.bf16.msra.mxu0 0
  %691 = vmatprep.subr.bf16.mxu0 0
  %692 = vmatpush2.bf16.msra.mxu0 0
  %693 = vmatprep.mubr.bf16.mxu0 0
  %694 = vmatmul.mubr.bf16.gmra.mxu0 %v659
  %v695 = vpop.f32.mrf.mxu0
  %v696 = vadd.f32 0.0, %v695
  %v697 = vpop.f32.mrf.mxu0
  %v698 = vpop.f32.mrf.mxu0
  %v699 = vadd.f32 0.0, %v698
  %v700 = vpop.f32.mrf.mxu0
  %701 = vdwg.mxu0
  %v702 = vadd.f32 %v635, %v696
  %v703 = vadd.f32 %v636, %v699
  %s704 = scalar_lea.vmem %s1, 80
  %v705 = vld [vmem:[%s704] sm:$0xf]
  %v706 = vld [vmem:[%s704 + $0x4] sm:$0xf]
  %v709 = vunpack.c.l.b16 %v705
  %v710 = vunpack.c.l.b16 %v706
  %v711 = vpack.c.b16 %v710, %v709
  %712 = vrot.lane.b32.xlu0 %v45, 118
  %v713 = vpop.permute.xlu0 %712
  %714 = vrot.lane.b32.xlu0 %v46, 118
  %v715 = vpop.permute.xlu0 %714
  %716 = vrot.lane.b32.xlu0 %v47, 118
  %v717 = vpop.permute.xlu0 %716
  %718 = vrot.lane.b32.xlu0 %v48, 118
  %v719 = vpop.permute.xlu0 %718
  %vm720 = vcmask 965632
  %v721 = vsel %vm720, %v713, %v715
  %v722 = vsel %vm720, %v717, %v719
  %v726 = vsel %vm62, %v711, 0
  %728 = vmatprep.subr.bf16.mxu0 0
  %729 = vmatpush1.bf16.msra.mxu0 0
  %730 = vmatprep.subr.bf16.mxu0 0
  %731 = vmatpush1.bf16.msra.mxu0 0
  %732 = vmatprep.subr.bf16.mxu0 0
  %733 = vmatpush1.bf16.msra.mxu0 0
  %734 = vmatprep.subr.bf16.mxu0 0
  %735 = vmatpush1.bf16.msra.mxu0 0
  %736 = vmatprep.subr.bf16.mxu0 0
  %737 = vmatpush1.bf16.msra.mxu0 0
  %738 = vmatprep.subr.bf16.mxu0 0
  %739 = vmatpush1.bf16.msra.mxu0 0
  %740 = vmatprep.subr.bf16.mxu0 0
  %741 = vmatpush1.bf16.msra.mxu0 %v722
  %742 = vmatprep.subr.bf16.mxu0 0
  %743 = vmatpush1.bf16.msra.mxu0 %v721
  %744 = vmatprep.subr.bf16.mxu0 0
  %745 = vmatpush2.bf16.msra.mxu0 0
  %746 = vmatprep.subr.bf16.mxu0 0
  %747 = vmatpush2.bf16.msra.mxu0 0
  %748 = vmatprep.subr.bf16.mxu0 0
  %749 = vmatpush2.bf16.msra.mxu0 0
  %750 = vmatprep.subr.bf16.mxu0 0
  %751 = vmatpush2.bf16.msra.mxu0 0
  %752 = vmatprep.subr.bf16.mxu0 0
  %753 = vmatpush2.bf16.msra.mxu0 0
  %754 = vmatprep.subr.bf16.mxu0 0
  %755 = vmatpush2.bf16.msra.mxu0 0
  %756 = vmatprep.subr.bf16.mxu0 0
  %757 = vmatpush2.bf16.msra.mxu0 0
  %758 = vmatprep.subr.bf16.mxu0 0
  %759 = vmatpush2.bf16.msra.mxu0 0
  %760 = vmatprep.mubr.bf16.mxu0 0
  %761 = vmatmul.mubr.bf16.gmra.mxu0 %v726
  %v762 = vpop.f32.mrf.mxu0
  %v763 = vadd.f32 0.0, %v762
  %v764 = vpop.f32.mrf.mxu0
  %v765 = vpop.f32.mrf.mxu0
  %v766 = vadd.f32 0.0, %v765
  %v767 = vpop.f32.mrf.mxu0
  %768 = vdwg.mxu0
  %v769 = vadd.f32 %v702, %v763
  %v770 = vadd.f32 %v703, %v766
  %s771 = scalar_lea.vmem %s1, 88
  %v772 = vld [vmem:[%s771] sm:$0xf]
  %v773 = vld [vmem:[%s771 + $0x4] sm:$0xf]
  %v776 = vunpack.c.l.b16 %v772
  %v777 = vunpack.c.l.b16 %v773
  %v778 = vpack.c.b16 %v777, %v776
  %779 = vrot.lane.b32.xlu0 %v45, 117
  %v780 = vpop.permute.xlu0 %779
  %781 = vrot.lane.b32.xlu0 %v46, 117
  %v782 = vpop.permute.xlu0 %781
  %783 = vrot.lane.b32.xlu0 %v47, 117
  %v784 = vpop.permute.xlu0 %783
  %785 = vrot.lane.b32.xlu0 %v48, 117
  %v786 = vpop.permute.xlu0 %785
  %vm787 = vcmask 957440
  %v788 = vsel %vm787, %v780, %v782
  %v789 = vsel %vm787, %v784, %v786
  %v793 = vsel %vm62, %v778, 0
  %795 = vmatprep.subr.bf16.mxu0 0
  %796 = vmatpush1.bf16.msra.mxu0 0
  %797 = vmatprep.subr.bf16.mxu0 0
  %798 = vmatpush1.bf16.msra.mxu0 0
  %799 = vmatprep.subr.bf16.mxu0 0
  %800 = vmatpush1.bf16.msra.mxu0 0
  %801 = vmatprep.subr.bf16.mxu0 0
  %802 = vmatpush1.bf16.msra.mxu0 0
  %803 = vmatprep.subr.bf16.mxu0 0
  %804 = vmatpush1.bf16.msra.mxu0 0
  %805 = vmatprep.subr.bf16.mxu0 0
  %806 = vmatpush1.bf16.msra.mxu0 0
  %807 = vmatprep.subr.bf16.mxu0 0
  %808 = vmatpush1.bf16.msra.mxu0 %v789
  %809 = vmatprep.subr.bf16.mxu0 0
  %810 = vmatpush1.bf16.msra.mxu0 %v788
  %811 = vmatprep.subr.bf16.mxu0 0
  %812 = vmatpush2.bf16.msra.mxu0 0
  %813 = vmatprep.subr.bf16.mxu0 0
  %814 = vmatpush2.bf16.msra.mxu0 0
  %815 = vmatprep.subr.bf16.mxu0 0
  %816 = vmatpush2.bf16.msra.mxu0 0
  %817 = vmatprep.subr.bf16.mxu0 0
  %818 = vmatpush2.bf16.msra.mxu0 0
  %819 = vmatprep.subr.bf16.mxu0 0
  %820 = vmatpush2.bf16.msra.mxu0 0
  %821 = vmatprep.subr.bf16.mxu0 0
  %822 = vmatpush2.bf16.msra.mxu0 0
  %823 = vmatprep.subr.bf16.mxu0 0
  %824 = vmatpush2.bf16.msra.mxu0 0
  %825 = vmatprep.subr.bf16.mxu0 0
  %826 = vmatpush2.bf16.msra.mxu0 0
  %827 = vmatprep.mubr.bf16.mxu0 0
  %828 = vmatmul.mubr.bf16.gmra.mxu0 %v793
  %v829 = vpop.f32.mrf.mxu0
  %v830 = vadd.f32 0.0, %v829
  %v831 = vpop.f32.mrf.mxu0
  %v832 = vpop.f32.mrf.mxu0
  %v833 = vadd.f32 0.0, %v832
  %v834 = vpop.f32.mrf.mxu0
  %835 = vdwg.mxu0
  %v836 = vadd.f32 %v769, %v830
  %v837 = vadd.f32 %v770, %v833
  %s838 = scalar_lea.vmem %s1, 96
  %v839 = vld [vmem:[%s838] sm:$0xf]
  %v840 = vld [vmem:[%s838 + $0x4] sm:$0xf]
  %v843 = vunpack.c.l.b16 %v839
  %v844 = vunpack.c.l.b16 %v840
  %v845 = vpack.c.b16 %v844, %v843
  %846 = vrot.lane.b32.xlu0 %v45, 116
  %v847 = vpop.permute.xlu0 %846
  %848 = vrot.lane.b32.xlu0 %v46, 116
  %v849 = vpop.permute.xlu0 %848
  %850 = vrot.lane.b32.xlu0 %v47, 116
  %v851 = vpop.permute.xlu0 %850
  %852 = vrot.lane.b32.xlu0 %v48, 116
  %v853 = vpop.permute.xlu0 %852
  %vm854 = vcmask 949248
  %v855 = vsel %vm854, %v847, %v849
  %v856 = vsel %vm854, %v851, %v853
  %v860 = vsel %vm62, %v845, 0
  %862 = vmatprep.subr.bf16.mxu0 0
  %863 = vmatpush1.bf16.msra.mxu0 0
  %864 = vmatprep.subr.bf16.mxu0 0
  %865 = vmatpush1.bf16.msra.mxu0 0
  %866 = vmatprep.subr.bf16.mxu0 0
  %867 = vmatpush1.bf16.msra.mxu0 0
  %868 = vmatprep.subr.bf16.mxu0 0
  %869 = vmatpush1.bf16.msra.mxu0 0
  %870 = vmatprep.subr.bf16.mxu0 0
  %871 = vmatpush1.bf16.msra.mxu0 0
  %872 = vmatprep.subr.bf16.mxu0 0
  %873 = vmatpush1.bf16.msra.mxu0 0
  %874 = vmatprep.subr.bf16.mxu0 0
  %875 = vmatpush1.bf16.msra.mxu0 %v856
  %876 = vmatprep.subr.bf16.mxu0 0
  %877 = vmatpush1.bf16.msra.mxu0 %v855
  %878 = vmatprep.subr.bf16.mxu0 0
  %879 = vmatpush2.bf16.msra.mxu0 0
  %880 = vmatprep.subr.bf16.mxu0 0
  %881 = vmatpush2.bf16.msra.mxu0 0
  %882 = vmatprep.subr.bf16.mxu0 0
  %883 = vmatpush2.bf16.msra.mxu0 0
  %884 = vmatprep.subr.bf16.mxu0 0
  %885 = vmatpush2.bf16.msra.mxu0 0
  %886 = vmatprep.subr.bf16.mxu0 0
  %887 = vmatpush2.bf16.msra.mxu0 0
  %888 = vmatprep.subr.bf16.mxu0 0
  %889 = vmatpush2.bf16.msra.mxu0 0
  %890 = vmatprep.subr.bf16.mxu0 0
  %891 = vmatpush2.bf16.msra.mxu0 0
  %892 = vmatprep.subr.bf16.mxu0 0
  %893 = vmatpush2.bf16.msra.mxu0 0
  %894 = vmatprep.mubr.bf16.mxu0 0
  %895 = vmatmul.mubr.bf16.gmra.mxu0 %v860
  %v896 = vpop.f32.mrf.mxu0
  %v897 = vadd.f32 0.0, %v896
  %v898 = vpop.f32.mrf.mxu0
  %v899 = vpop.f32.mrf.mxu0
  %v900 = vadd.f32 0.0, %v899
  %v901 = vpop.f32.mrf.mxu0
  %902 = vdwg.mxu0
  %v903 = vadd.f32 %v836, %v897
  %v904 = vadd.f32 %v837, %v900
  %s905 = scalar_lea.vmem %s1, 104
  %v906 = vld [vmem:[%s905] sm:$0xf]
  %v907 = vld [vmem:[%s905 + $0x4] sm:$0xf]
  %v910 = vunpack.c.l.b16 %v906
  %v911 = vunpack.c.l.b16 %v907
  %v912 = vpack.c.b16 %v911, %v910
  %913 = vrot.lane.b32.xlu0 %v45, 115
  %v914 = vpop.permute.xlu0 %913
  %915 = vrot.lane.b32.xlu0 %v46, 115
  %v916 = vpop.permute.xlu0 %915
  %917 = vrot.lane.b32.xlu0 %v47, 115
  %v918 = vpop.permute.xlu0 %917
  %919 = vrot.lane.b32.xlu0 %v48, 115
  %v920 = vpop.permute.xlu0 %919
  %vm921 = vcmask 941056
  %v922 = vsel %vm921, %v914, %v916
  %v923 = vsel %vm921, %v918, %v920
  %v927 = vsel %vm62, %v912, 0
  %929 = vmatprep.subr.bf16.mxu0 0
  %930 = vmatpush1.bf16.msra.mxu0 0
  %931 = vmatprep.subr.bf16.mxu0 0
  %932 = vmatpush1.bf16.msra.mxu0 0
  %933 = vmatprep.subr.bf16.mxu0 0
  %934 = vmatpush1.bf16.msra.mxu0 0
  %935 = vmatprep.subr.bf16.mxu0 0
  %936 = vmatpush1.bf16.msra.mxu0 0
  %937 = vmatprep.subr.bf16.mxu0 0
  %938 = vmatpush1.bf16.msra.mxu0 0
  %939 = vmatprep.subr.bf16.mxu0 0
  %940 = vmatpush1.bf16.msra.mxu0 0
  %941 = vmatprep.subr.bf16.mxu0 0
  %942 = vmatpush1.bf16.msra.mxu0 %v923
  %943 = vmatprep.subr.bf16.mxu0 0
  %944 = vmatpush1.bf16.msra.mxu0 %v922
  %945 = vmatprep.subr.bf16.mxu0 0
  %946 = vmatpush2.bf16.msra.mxu0 0
  %947 = vmatprep.subr.bf16.mxu0 0
  %948 = vmatpush2.bf16.msra.mxu0 0
  %949 = vmatprep.subr.bf16.mxu0 0
  %950 = vmatpush2.bf16.msra.mxu0 0
  %951 = vmatprep.subr.bf16.mxu0 0
  %952 = vmatpush2.bf16.msra.mxu0 0
  %953 = vmatprep.subr.bf16.mxu0 0
  %954 = vmatpush2.bf16.msra.mxu0 0
  %955 = vmatprep.subr.bf16.mxu0 0
  %956 = vmatpush2.bf16.msra.mxu0 0
  %957 = vmatprep.subr.bf16.mxu0 0
  %958 = vmatpush2.bf16.msra.mxu0 0
  %959 = vmatprep.subr.bf16.mxu0 0
  %960 = vmatpush2.bf16.msra.mxu0 0
  %961 = vmatprep.mubr.bf16.mxu0 0
  %962 = vmatmul.mubr.bf16.gmra.mxu0 %v927
  %v963 = vpop.f32.mrf.mxu0
  %v964 = vadd.f32 0.0, %v963
  %v965 = vpop.f32.mrf.mxu0
  %v966 = vpop.f32.mrf.mxu0
  %v967 = vadd.f32 0.0, %v966
  %v968 = vpop.f32.mrf.mxu0
  %969 = vdwg.mxu0
  %v970 = vadd.f32 %v903, %v964
  %v971 = vadd.f32 %v904, %v967
  %s972 = scalar_lea.vmem %s1, 112
  %v973 = vld [vmem:[%s972] sm:$0xf]
  %v974 = vld [vmem:[%s972 + $0x4] sm:$0xf]
  %v977 = vunpack.c.l.b16 %v973
  %v978 = vunpack.c.l.b16 %v974
  %v979 = vpack.c.b16 %v978, %v977
  %980 = vrot.lane.b32.xlu0 %v45, 114
  %v981 = vpop.permute.xlu0 %980
  %982 = vrot.lane.b32.xlu0 %v46, 114
  %v983 = vpop.permute.xlu0 %982
  %984 = vrot.lane.b32.xlu0 %v47, 114
  %v985 = vpop.permute.xlu0 %984
  %986 = vrot.lane.b32.xlu0 %v48, 114
  %v987 = vpop.permute.xlu0 %986
  %vm988 = vcmask 932864
  %v989 = vsel %vm988, %v981, %v983
  %v990 = vsel %vm988, %v985, %v987
  %v994 = vsel %vm62, %v979, 0
  %996 = vmatprep.subr.bf16.mxu0 0
  %997 = vmatpush1.bf16.msra.mxu0 0
  %998 = vmatprep.subr.bf16.mxu0 0
  %999 = vmatpush1.bf16.msra.mxu0 0
  %1000 = vmatprep.subr.bf16.mxu0 0
  %1001 = vmatpush1.bf16.msra.mxu0 0
  %1002 = vmatprep.subr.bf16.mxu0 0
  %1003 = vmatpush1.bf16.msra.mxu0 0
  %1004 = vmatprep.subr.bf16.mxu0 0
  %1005 = vmatpush1.bf16.msra.mxu0 0
  %1006 = vmatprep.subr.bf16.mxu0 0
  %1007 = vmatpush1.bf16.msra.mxu0 0
  %1008 = vmatprep.subr.bf16.mxu0 0
  %1009 = vmatpush1.bf16.msra.mxu0 %v990
  %1010 = vmatprep.subr.bf16.mxu0 0
  %1011 = vmatpush1.bf16.msra.mxu0 %v989
  %1012 = vmatprep.subr.bf16.mxu0 0
  %1013 = vmatpush2.bf16.msra.mxu0 0
  %1014 = vmatprep.subr.bf16.mxu0 0
  %1015 = vmatpush2.bf16.msra.mxu0 0
  %1016 = vmatprep.subr.bf16.mxu0 0
  %1017 = vmatpush2.bf16.msra.mxu0 0
  %1018 = vmatprep.subr.bf16.mxu0 0
  %1019 = vmatpush2.bf16.msra.mxu0 0
  %1020 = vmatprep.subr.bf16.mxu0 0
  %1021 = vmatpush2.bf16.msra.mxu0 0
  %1022 = vmatprep.subr.bf16.mxu0 0
  %1023 = vmatpush2.bf16.msra.mxu0 0
  %1024 = vmatprep.subr.bf16.mxu0 0
  %1025 = vmatpush2.bf16.msra.mxu0 0
  %1026 = vmatprep.subr.bf16.mxu0 0
  %1027 = vmatpush2.bf16.msra.mxu0 0
  %1028 = vmatprep.mubr.bf16.mxu0 0
  %1029 = vmatmul.mubr.bf16.gmra.mxu0 %v994
  %v1030 = vpop.f32.mrf.mxu0
  %v1031 = vadd.f32 0.0, %v1030
  %v1032 = vpop.f32.mrf.mxu0
  %v1033 = vpop.f32.mrf.mxu0
  %v1034 = vadd.f32 0.0, %v1033
  %v1035 = vpop.f32.mrf.mxu0
  %1036 = vdwg.mxu0
  %v1037 = vadd.f32 %v970, %v1031
  %v1038 = vadd.f32 %v971, %v1034
  %s1039 = scalar_lea.vmem %s1, 120
  %v1040 = vld [vmem:[%s1039] sm:$0xf]
  %v1041 = vld [vmem:[%s1039 + $0x4] sm:$0xf]
  %v1044 = vunpack.c.l.b16 %v1040
  %v1045 = vunpack.c.l.b16 %v1041
  %v1046 = vpack.c.b16 %v1045, %v1044
  %1047 = vrot.lane.b32.xlu0 %v45, 113
  %v1048 = vpop.permute.xlu0 %1047
  %1049 = vrot.lane.b32.xlu0 %v46, 113
  %v1050 = vpop.permute.xlu0 %1049
  %1051 = vrot.lane.b32.xlu0 %v47, 113
  %v1052 = vpop.permute.xlu0 %1051
  %1053 = vrot.lane.b32.xlu0 %v48, 113
  %v1054 = vpop.permute.xlu0 %1053
  %vm1055 = vcmask 924672
  %v1056 = vsel %vm1055, %v1048, %v1050
  %v1057 = vsel %vm1055, %v1052, %v1054
  %v1061 = vsel %vm62, %v1046, 0
  %1063 = vmatprep.subr.bf16.mxu0 0
  %1064 = vmatpush1.bf16.msra.mxu0 0
  %1065 = vmatprep.subr.bf16.mxu0 0
  %1066 = vmatpush1.bf16.msra.mxu0 0
  %1067 = vmatprep.subr.bf16.mxu0 0
  %1068 = vmatpush1.bf16.msra.mxu0 0
  %1069 = vmatprep.subr.bf16.mxu0 0
  %1070 = vmatpush1.bf16.msra.mxu0 0
  %1071 = vmatprep.subr.bf16.mxu0 0
  %1072 = vmatpush1.bf16.msra.mxu0 0
  %1073 = vmatprep.subr.bf16.mxu0 0
  %1074 = vmatpush1.bf16.msra.mxu0 0
  %1075 = vmatprep.subr.bf16.mxu0 0
  %1076 = vmatpush1.bf16.msra.mxu0 %v1057
  %1077 = vmatprep.subr.bf16.mxu0 0
  %1078 = vmatpush1.bf16.msra.mxu0 %v1056
  %1079 = vmatprep.subr.bf16.mxu0 0
  %1080 = vmatpush2.bf16.msra.mxu0 0
  %1081 = vmatprep.subr.bf16.mxu0 0
  %1082 = vmatpush2.bf16.msra.mxu0 0
  %1083 = vmatprep.subr.bf16.mxu0 0
  %1084 = vmatpush2.bf16.msra.mxu0 0
  %1085 = vmatprep.subr.bf16.mxu0 0
  %1086 = vmatpush2.bf16.msra.mxu0 0
  %1087 = vmatprep.subr.bf16.mxu0 0
  %1088 = vmatpush2.bf16.msra.mxu0 0
  %1089 = vmatprep.subr.bf16.mxu0 0
  %1090 = vmatpush2.bf16.msra.mxu0 0
  %1091 = vmatprep.subr.bf16.mxu0 0
  %1092 = vmatpush2.bf16.msra.mxu0 0
  %1093 = vmatprep.subr.bf16.mxu0 0
  %1094 = vmatpush2.bf16.msra.mxu0 0
  %1095 = vmatprep.mubr.bf16.mxu0 0
  %1096 = vmatmul.mubr.bf16.gmra.mxu0 %v1061
  %v1097 = vpop.f32.mrf.mxu0
  %v1098 = vadd.f32 0.0, %v1097
  %v1099 = vpop.f32.mrf.mxu0
  %v1100 = vpop.f32.mrf.mxu0
  %v1101 = vadd.f32 0.0, %v1100
  %v1102 = vpop.f32.mrf.mxu0
  %1103 = vdwg.mxu0
  %v1104 = vadd.f32 %v1037, %v1098
  %v1105 = vadd.f32 %v1038, %v1101
  %v1106 = vld [vmem:[%s2] sm:$0xff]
  %v1107 = vld [vmem:[%s2 + $0x8] sm:$0xff]
  %1109 = vset.pattern.permute.xlu0 0
  %1110 = vperm.xlu0 %1109, %v1106
  %v1111 = vpop.permute.xlu0 %1110
  %1114 = vset.pattern.permute.xlu0 0
  %1115 = vperm.xlu0 %1114, %v1107
  %v1116 = vpop.permute.xlu0 %1115
  %v1118 = vadd.f32 %v1104, %v1111
  %v1119 = vadd.f32 %v1105, %v1116
  %1120 = vst [vmem:[%s3] sm:$0xff] %v1118
  %1121 = vst [vmem:[%s3 + $0x8] sm:$0xff] %v1119
  // Predicated region
  $region14: #{patchgan_forward.7} parent=0 // pred_check
    _
  $region15: #{patchgan_forward.7} parent=0 // pred_check_branch
    %1123 = sbr.rel (0) target = $region17
  $region16: #{patchgan_forward.7} parent=0 // pred_region
    _
  $region17: #{patchgan_forward.7} parent=0 // pred_fallthru
    _
  // Predicated region
  $region18: #{patchgan_forward.7} parent=0 // pred_check
    _
  $region19: #{patchgan_forward.7} parent=0 // pred_check_branch
    %1125 = sbr.rel (0) target = $region21
  $region20: #{patchgan_forward.7} parent=0 // pred_region
    _
  $region21: #{patchgan_forward.7} parent=0 // pred_fallthru
    _

</llo_original>
